<compile_context>
chip_gen: v7x
topology: tpu7x:2x2x1
jax: 0.10.0
libtpu: 0.0.40
codegen_flags: <defaults>
</compile_context>

<pallas_src>
import functools
import math

import jax
import jax.numpy as jnp
from jax.experimental import pallas as pl
from jax.experimental.pallas import tpu as pltpu


def _round_up(x, m):
    return ((x + m - 1) // m) * m


def _make_encoder_kernel(seq_len, batch_tile, num_layers, hidden_pad):
    T, Bt, L, Hp = seq_len, batch_tile, num_layers, hidden_pad
    n_w = 3 + 2 * (L - 1)   # wih0, whh0, b0, then (wcat_l, b_l) for l >= 1

    def kernel(x_ref, *refs):
        w_refs = refs[:n_w]
        out_ref = refs[n_w]

        wih0 = w_refs[0][...]                                   # bf16 (Din, 4Hp)
        whh0 = w_refs[1][...]                                   # bf16 (Hp, 4Hp)
        b0 = w_refs[2][...]                                     # f32  (1, 4Hp)
        wcat = [w_refs[3 + 2 * i][...] for i in range(L - 1)]   # bf16 (2Hp, 4Hp)
        bias = [w_refs[4 + 2 * i][...] for i in range(L - 1)]   # f32  (1, 4Hp)

        # Hoist bias broadcasts out of the unroll (JAX does not CSE them).
        b0b = jnp.broadcast_to(b0, (Bt, 4 * Hp))
        bias_b = [jnp.broadcast_to(b, (Bt, 4 * Hp)) for b in bias]

        # Hoisted layer-0 input projection for all time steps (independent of
        # the recurrence -> off the serial MXU chain), bias folded in here.
        x = x_ref[...].astype(jnp.bfloat16)                     # (T, Bt, Din)
        xp0 = [jnp.dot(x[t], wih0, preferred_element_type=jnp.float32) + b0b
               for t in range(T)]

        h = [jnp.zeros((Bt, Hp), jnp.float32) for _ in range(L)]
        c = [jnp.zeros((Bt, Hp), jnp.float32) for _ in range(L)]

        def lstm_cell(gates, c_prev):
            # PyTorch gate order i, f, g, o; each slice is a 128-lane-aligned
            # block -> free vreg view, no cross-lane shuffles.
            i_g = jax.nn.sigmoid(gates[:, 0 * Hp:1 * Hp])
            f_g = jax.nn.sigmoid(gates[:, 1 * Hp:2 * Hp])
            g_g = jnp.tanh(gates[:, 2 * Hp:3 * Hp])
            o_g = jax.nn.sigmoid(gates[:, 3 * Hp:4 * Hp])
            c_new = f_g * c_prev + i_g * g_g
            h_new = o_g * jnp.tanh(c_new)
            return h_new, c_new

        # Wavefront schedule: cells (t, l) with t + l == d are independent.
        # Snapshot-then-commit keeps the dependence structure correct.
        # TODO(synk): for large T, switch to lax.fori_loop over t with h/c in
        # VMEM scratch refs to bound code size and vreg live ranges.
        for d in range(T + L - 1):
            new_h, new_c = {}, {}
            for l in range(max(0, d - T + 1), min(L, d + 1)):
                t = d - l
                if l == 0:
                    gates = xp0[t] + jnp.dot(
                        h[0].astype(jnp.bfloat16), whh0,
                        preferred_element_type=jnp.float32)
                else:
                    # Fused input+recurrent matmul: one dot per cell.
                    xh = jnp.concatenate(
                        [h[l - 1].astype(jnp.bfloat16),
                         h[l].astype(jnp.bfloat16)], axis=1)     # (Bt, 2Hp)
                    gates = jnp.dot(xh, wcat[l - 1],
                                    preferred_element_type=jnp.float32)
                    gates = gates + bias_b[l - 1]
                new_h[l], new_c[l] = lstm_cell(gates, c[l])
            for l in new_h:
                h[l] = new_h[l]
                c[l] = new_c[l]

        out_ref[...] = h[-1].astype(out_ref.dtype)   # single lane-dense store

    return kernel


class EncoderPallas:
    """Pallas equivalent of the PyTorch Encoder: multi-layer LSTM, batch_first,
    zero initial states; forward returns hidden[-1] of shape (batch, hidden)."""

    def __init__(self, seq_len, input_size, hidden_size, num_layers, key):
        self.seq_len = seq_len
        self.input_size = input_size
        self.hidden_size = hidden_size
        self.num_layers = num_layers
        # Each gate gets its own 128-multiple block of lanes.
        self.hidden_pad = max(128, _round_up(hidden_size, 128))

        H, Hp = hidden_size, self.hidden_pad
        bound = 1.0 / math.sqrt(hidden_size)  # PyTorch default U(-1/sqrt(H), 1/sqrt(H))
        self.flat_weights = []   # padded / fused kernel weights
        self.raw_weights = []    # raw PyTorch-layout weights for the reference
        for layer in range(num_layers):
            d_in = input_size if layer == 0 else hidden_size
            d_in_pad = input_size if layer == 0 else Hp
            key, k1, k2, k3, k4 = jax.random.split(key, 5)
            w_ih = jax.random.uniform(k1, (4 * H, d_in), jnp.float32, -bound, bound)
            w_hh = jax.random.uniform(k2, (4 * H, H), jnp.float32, -bound, bound)
            b_ih = jax.random.uniform(k3, (4 * H,), jnp.float32, -bound, bound)
            b_hh = jax.random.uniform(k4, (4 * H,), jnp.float32, -bound, bound)
            self.raw_weights.append((w_ih, w_hh, b_ih, b_hh))

            wih_t = w_ih.T            # (d_in, 4H)  -> x @ W_ih^T layout
            whh_t = w_hh.T            # (H, 4H)
            bsum = b_ih + b_hh        # (4H,)

            # Pad each gate into its own lane-aligned 128-wide column block.
            # Padded columns/rows are zero (and bias zero), so padded hidden /
            # cell lanes stay exactly zero through the recurrence.
            wih_p = jnp.zeros((d_in_pad, 4 * Hp), jnp.float32)
            whh_p = jnp.zeros((Hp, 4 * Hp), jnp.float32)
            b_p = jnp.zeros((1, 4 * Hp), jnp.float32)
            for g in range(4):
                wih_p = wih_p.at[:d_in, g * Hp:g * Hp + H].set(
                    wih_t[:, g * H:(g + 1) * H])
                whh_p = whh_p.at[:H, g * Hp:g * Hp + H].set(
                    whh_t[:, g * H:(g + 1) * H])
                b_p = b_p.at[0, g * Hp:g * Hp + H].set(bsum[g * H:(g + 1) * H])

            if layer == 0:
                # Layer 0 keeps separate W_ih / W_hh (input dot is hoisted).
                self.flat_weights += [wih_p.astype(jnp.bfloat16),
                                      whh_p.astype(jnp.bfloat16),
                                      b_p]
            else:
                # Fused [W_ih; W_hh] for a single per-cell matmul.
                wcat = jnp.concatenate([wih_p, whh_p], axis=0)   # (2Hp, 4Hp)
                self.flat_weights += [wcat.astype(jnp.bfloat16), b_p]

    @functools.partial(jax.jit, static_argnums=0)
    def __call__(self, x):
        # x: (batch, seq, input_size)  [batch_first=True]
        B, T, Din = x.shape
        Hp = self.hidden_pad

        Bp0 = _round_up(max(B, 8), 8)
        # At most 2 batch blocks: uses v7x's 2nd TensorCore for larger batches,
        # grid=(1,) (no extra serialization) at small batch / single-TC chips.
        n_blk = 1 if Bp0 <= 8 else 2
        Btile = _round_up(-(-Bp0 // n_blk), 8)
        Bp = Btile * n_blk

        xt = jnp.transpose(x, (1, 0, 2)).astype(jnp.float32)    # (T, B, Din)
        xt = jnp.pad(xt, ((0, 0), (0, Bp - B), (0, 0)))         # (T, Bp, Din)

        kernel = _make_encoder_kernel(T, Btile, self.num_layers, Hp)

        in_specs = [pl.BlockSpec((T, Btile, Din), lambda b: (0, b, 0))]
        # Weights: full-array blocks, replicated across the batch grid (stay
        # VMEM-resident, no re-DMA between grid steps).
        in_specs += [pl.BlockSpec(tuple(w.shape), lambda b: (0, 0))
                     for w in self.flat_weights]
        out_spec = pl.BlockSpec((Btile, Hp), lambda b: (b, 0))

        est_bytes = (int(xt.size) * xt.dtype.itemsize
                     + sum(int(w.size) * w.dtype.itemsize for w in self.flat_weights)
                     + Bp * Hp * 4)
        cp_kwargs = {"dimension_semantics": ("parallel",)}
        if est_bytes > 24 * 1024 * 1024:
            # Larger hidden sizes: raise the default 32 MiB scoped-VMEM limit.
            # TODO(synk): stream weights per layer for configs exceeding v7x's
            # 64 MiB physical VMEM instead of only raising the limit.
            cp_kwargs["vmem_limit_bytes"] = int(min(60 * 1024 * 1024, 3 * est_bytes))

        out = pl.pallas_call(
            kernel,
            out_shape=jax.ShapeDtypeStruct((Bp, Hp), jnp.float32),
            grid_spec=pltpu.PrefetchScalarGridSpec(
                num_scalar_prefetch=0,
                grid=(n_blk,),
                in_specs=in_specs,
                out_specs=out_spec,
            ),
            compiler_params=pltpu.CompilerParams(**cp_kwargs),
        )(xt, *self.flat_weights)
        # hidden[-1]: final hidden state of the LAST layer at the final step.
        return out[:B, :self.hidden_size]


def lstm_reference(x, raw_weights, hidden_size, num_layers):
    """Pure-JAX f32 reference matching torch.nn.LSTM (batch_first, zero init)."""
    B, T, _ = x.shape
    H = hidden_size
    layer_in = x.astype(jnp.float32)
    h = None
    for l in range(num_layers):
        w_ih, w_hh, b_ih, b_hh = raw_weights[l]
        h = jnp.zeros((B, H), jnp.float32)
        c = jnp.zeros((B, H), jnp.float32)
        outs = []
        for t in range(T):
            g = layer_in[:, t, :] @ w_ih.T + h @ w_hh.T + b_ih + b_hh
            i = jax.nn.sigmoid(g[:, 0 * H:1 * H])
            f = jax.nn.sigmoid(g[:, 1 * H:2 * H])
            gg = jnp.tanh(g[:, 2 * H:3 * H])
            o = jax.nn.sigmoid(g[:, 3 * H:4 * H])
            c = f * c + i * gg
            h = o * jnp.tanh(c)
            outs.append(h)
        layer_in = jnp.stack(outs, axis=1)
    return h


if __name__ == "__main__":
    seq_len, input_size, hidden_size, num_layers = 8, 4, 32, 2
    batch = 2

    key = jax.random.PRNGKey(0)
    k_param, k_input = jax.random.split(key)

    enc = EncoderPallas(seq_len, input_size, hidden_size, num_layers, k_param)
    x = jax.random.normal(k_input, (batch, seq_len, input_size), jnp.float32)

    out = enc(x)
    jax.block_until_ready(out)
    assert out.shape == (batch, hidden_size), out.shape

    ref = lstm_reference(x, enc.raw_weights, hidden_size, num_layers)
    max_err = float(jnp.max(jnp.abs(out - ref)))
    # bf16 MXU operands -> allow a generous absolute tolerance.
    assert max_err < 5e-2, f"max |err| = {max_err}"
    print("KERNEL_OK")
</pallas_src>

<mosaic_0001>
module attributes {stable_mosaic.version = 11 : i64} {
  func.func @kernel(%arg0: i32, %arg1: memref<8x8x4xf32, #tpu.memory_space<vmem>>, %arg2: memref<4x512xbf16, #tpu.memory_space<vmem>>, %arg3: memref<128x512xbf16, #tpu.memory_space<vmem>>, %arg4: memref<1x512xf32, #tpu.memory_space<vmem>>, %arg5: memref<256x512xbf16, #tpu.memory_space<vmem>>, %arg6: memref<1x512xf32, #tpu.memory_space<vmem>>, %arg7: memref<8x128xf32, #tpu.memory_space<vmem>>) attributes {dimension_semantics = [#tpu.dimension_semantics<parallel>], iteration_bounds = array<i64: 1>, scalar_prefetch = 0 : i64, scratch_operands = 0 : i64, tpu.core_type = #tpu.core_type<tc>, window_params = [{transform_indices = @transform_0, window_bounds = array<i64: 8, 8, 4>}, {pipeline_mode = #tpu.pipeline_mode<synchronous>, transform_indices = @transform_1, window_bounds = array<i64: 4, 512>}, {pipeline_mode = #tpu.pipeline_mode<synchronous>, transform_indices = @transform_2, window_bounds = array<i64: 128, 512>}, {pipeline_mode = #tpu.pipeline_mode<synchronous>, transform_indices = @transform_3, window_bounds = array<i64: 1, 512>}, {pipeline_mode = #tpu.pipeline_mode<synchronous>, transform_indices = @transform_4, window_bounds = array<i64: 256, 512>}, {pipeline_mode = #tpu.pipeline_mode<synchronous>, transform_indices = @transform_5, window_bounds = array<i64: 1, 512>}, {transform_indices = @transform_6, window_bounds = array<i64: 8, 128>}]} {
    %c0 = arith.constant 0 : index
    %c0_0 = arith.constant 0 : index
    %0 = vector.load %arg2[%c0, %c0_0] : memref<4x512xbf16, #tpu.memory_space<vmem>>, vector<4x512xbf16>
    %c0_1 = arith.constant 0 : index
    %c0_2 = arith.constant 0 : index
    %1 = vector.load %arg3[%c0_1, %c0_2] : memref<128x512xbf16, #tpu.memory_space<vmem>>, vector<128x512xbf16>
    %c0_3 = arith.constant 0 : index
    %c0_4 = arith.constant 0 : index
    %2 = vector.load %arg4[%c0_3, %c0_4] : memref<1x512xf32, #tpu.memory_space<vmem>>, vector<1x512xf32>
    %c0_5 = arith.constant 0 : index
    %c0_6 = arith.constant 0 : index
    %3 = vector.load %arg5[%c0_5, %c0_6] : memref<256x512xbf16, #tpu.memory_space<vmem>>, vector<256x512xbf16>
    %c0_7 = arith.constant 0 : index
    %c0_8 = arith.constant 0 : index
    %4 = vector.load %arg6[%c0_7, %c0_8] : memref<1x512xf32, #tpu.memory_space<vmem>>, vector<1x512xf32>
    %5 = vector.shape_cast %2 : vector<1x512xf32> to vector<1x512xf32>
    %6 = vector.broadcast %5 : vector<1x512xf32> to vector<8x512xf32>
    %7 = vector.shape_cast %4 : vector<1x512xf32> to vector<1x512xf32>
    %8 = vector.broadcast %7 : vector<1x512xf32> to vector<8x512xf32>
    %c0_9 = arith.constant 0 : index
    %c0_10 = arith.constant 0 : index
    %c0_11 = arith.constant 0 : index
    %9 = vector.load %arg1[%c0_9, %c0_10, %c0_11] : memref<8x8x4xf32, #tpu.memory_space<vmem>>, vector<8x8x4xf32>
    %10 = arith.truncf %9 : vector<8x8x4xf32> to vector<8x8x4xbf16>
    %11 = vector.extract_strided_slice %10 {offsets = [0, 0, 0], sizes = [1, 8, 4], strides = [1, 1, 1]} : vector<8x8x4xbf16> to vector<1x8x4xbf16>
    %12 = vector.shape_cast %11 : vector<1x8x4xbf16> to vector<8x4xbf16>
    %cst = arith.constant dense<0.000000e+00> : vector<8x512xf32>
    %13 = tpu.matmul %12, %0, %cst {dimension_numbers = #tpu.dot_dimension_numbers<[1], [0], [0], [1], [0, 0, 1, 1], [], []>} : vector<8x4xbf16>, vector<4x512xbf16>, vector<8x512xf32> -> vector<8x512xf32>
    %14 = arith.addf %13, %6 : vector<8x512xf32>
    %15 = vector.extract_strided_slice %10 {offsets = [1, 0, 0], sizes = [1, 8, 4], strides = [1, 1, 1]} : vector<8x8x4xbf16> to vector<1x8x4xbf16>
    %16 = vector.shape_cast %15 : vector<1x8x4xbf16> to vector<8x4xbf16>
    %cst_12 = arith.constant dense<0.000000e+00> : vector<8x512xf32>
    %17 = tpu.matmul %16, %0, %cst_12 {dimension_numbers = #tpu.dot_dimension_numbers<[1], [0], [0], [1], [0, 0, 1, 1], [], []>} : vector<8x4xbf16>, vector<4x512xbf16>, vector<8x512xf32> -> vector<8x512xf32>
    %18 = arith.addf %17, %6 : vector<8x512xf32>
    %19 = vector.extract_strided_slice %10 {offsets = [2, 0, 0], sizes = [1, 8, 4], strides = [1, 1, 1]} : vector<8x8x4xbf16> to vector<1x8x4xbf16>
    %20 = vector.shape_cast %19 : vector<1x8x4xbf16> to vector<8x4xbf16>
    %cst_13 = arith.constant dense<0.000000e+00> : vector<8x512xf32>
    %21 = tpu.matmul %20, %0, %cst_13 {dimension_numbers = #tpu.dot_dimension_numbers<[1], [0], [0], [1], [0, 0, 1, 1], [], []>} : vector<8x4xbf16>, vector<4x512xbf16>, vector<8x512xf32> -> vector<8x512xf32>
    %22 = arith.addf %21, %6 : vector<8x512xf32>
    %23 = vector.extract_strided_slice %10 {offsets = [3, 0, 0], sizes = [1, 8, 4], strides = [1, 1, 1]} : vector<8x8x4xbf16> to vector<1x8x4xbf16>
    %24 = vector.shape_cast %23 : vector<1x8x4xbf16> to vector<8x4xbf16>
    %cst_14 = arith.constant dense<0.000000e+00> : vector<8x512xf32>
    %25 = tpu.matmul %24, %0, %cst_14 {dimension_numbers = #tpu.dot_dimension_numbers<[1], [0], [0], [1], [0, 0, 1, 1], [], []>} : vector<8x4xbf16>, vector<4x512xbf16>, vector<8x512xf32> -> vector<8x512xf32>
    %26 = arith.addf %25, %6 : vector<8x512xf32>
    %27 = vector.extract_strided_slice %10 {offsets = [4, 0, 0], sizes = [1, 8, 4], strides = [1, 1, 1]} : vector<8x8x4xbf16> to vector<1x8x4xbf16>
    %28 = vector.shape_cast %27 : vector<1x8x4xbf16> to vector<8x4xbf16>
    %cst_15 = arith.constant dense<0.000000e+00> : vector<8x512xf32>
    %29 = tpu.matmul %28, %0, %cst_15 {dimension_numbers = #tpu.dot_dimension_numbers<[1], [0], [0], [1], [0, 0, 1, 1], [], []>} : vector<8x4xbf16>, vector<4x512xbf16>, vector<8x512xf32> -> vector<8x512xf32>
    %30 = arith.addf %29, %6 : vector<8x512xf32>
    %31 = vector.extract_strided_slice %10 {offsets = [5, 0, 0], sizes = [1, 8, 4], strides = [1, 1, 1]} : vector<8x8x4xbf16> to vector<1x8x4xbf16>
    %32 = vector.shape_cast %31 : vector<1x8x4xbf16> to vector<8x4xbf16>
    %cst_16 = arith.constant dense<0.000000e+00> : vector<8x512xf32>
    %33 = tpu.matmul %32, %0, %cst_16 {dimension_numbers = #tpu.dot_dimension_numbers<[1], [0], [0], [1], [0, 0, 1, 1], [], []>} : vector<8x4xbf16>, vector<4x512xbf16>, vector<8x512xf32> -> vector<8x512xf32>
    %34 = arith.addf %33, %6 : vector<8x512xf32>
    %35 = vector.extract_strided_slice %10 {offsets = [6, 0, 0], sizes = [1, 8, 4], strides = [1, 1, 1]} : vector<8x8x4xbf16> to vector<1x8x4xbf16>
    %36 = vector.shape_cast %35 : vector<1x8x4xbf16> to vector<8x4xbf16>
    %cst_17 = arith.constant dense<0.000000e+00> : vector<8x512xf32>
    %37 = tpu.matmul %36, %0, %cst_17 {dimension_numbers = #tpu.dot_dimension_numbers<[1], [0], [0], [1], [0, 0, 1, 1], [], []>} : vector<8x4xbf16>, vector<4x512xbf16>, vector<8x512xf32> -> vector<8x512xf32>
    %38 = arith.addf %37, %6 : vector<8x512xf32>
    %39 = vector.extract_strided_slice %10 {offsets = [7, 0, 0], sizes = [1, 8, 4], strides = [1, 1, 1]} : vector<8x8x4xbf16> to vector<1x8x4xbf16>
    %40 = vector.shape_cast %39 : vector<1x8x4xbf16> to vector<8x4xbf16>
    %cst_18 = arith.constant dense<0.000000e+00> : vector<8x512xf32>
    %41 = tpu.matmul %40, %0, %cst_18 {dimension_numbers = #tpu.dot_dimension_numbers<[1], [0], [0], [1], [0, 0, 1, 1], [], []>} : vector<8x4xbf16>, vector<4x512xbf16>, vector<8x512xf32> -> vector<8x512xf32>
    %42 = arith.addf %41, %6 : vector<8x512xf32>
    %cst_19 = arith.constant 0.000000e+00 : f32
    %43 = vector.broadcast %cst_19 : f32 to vector<8x128xf32>
    %cst_20 = arith.constant 0.000000e+00 : f32
    %44 = vector.broadcast %cst_20 : f32 to vector<8x128xf32>
    %cst_21 = arith.constant 0.000000e+00 : f32
    %45 = vector.broadcast %cst_21 : f32 to vector<8x128xf32>
    %cst_22 = arith.constant 0.000000e+00 : f32
    %46 = vector.broadcast %cst_22 : f32 to vector<8x128xf32>
    %47 = arith.truncf %43 : vector<8x128xf32> to vector<8x128xbf16>
    %cst_23 = arith.constant dense<0.000000e+00> : vector<8x512xf32>
    %48 = tpu.matmul %47, %1, %cst_23 {dimension_numbers = #tpu.dot_dimension_numbers<[1], [0], [0], [1], [0, 0, 1, 1], [], []>} : vector<8x128xbf16>, vector<128x512xbf16>, vector<8x512xf32> -> vector<8x512xf32>
    %49 = arith.addf %14, %48 : vector<8x512xf32>
    %50 = vector.extract_strided_slice %49 {offsets = [0, 0], sizes = [8, 128], strides = [1, 1]} : vector<8x512xf32> to vector<8x128xf32>
    %51 = arith.negf %50 : vector<8x128xf32>
    %52 = math.exp %51 : vector<8x128xf32>
    %cst_24 = arith.constant 1.000000e+00 : f32
    %53 = vector.broadcast %cst_24 : f32 to vector<8x128xf32>
    %54 = arith.addf %53, %52 : vector<8x128xf32>
    %55 = arith.divf %53, %54 : vector<8x128xf32>
    %56 = vector.extract_strided_slice %49 {offsets = [0, 128], sizes = [8, 128], strides = [1, 1]} : vector<8x512xf32> to vector<8x128xf32>
    %57 = arith.negf %56 : vector<8x128xf32>
    %58 = math.exp %57 : vector<8x128xf32>
    %cst_25 = arith.constant 1.000000e+00 : f32
    %59 = vector.broadcast %cst_25 : f32 to vector<8x128xf32>
    %60 = arith.addf %59, %58 : vector<8x128xf32>
    %61 = arith.divf %59, %60 : vector<8x128xf32>
    %62 = vector.extract_strided_slice %49 {offsets = [0, 256], sizes = [8, 128], strides = [1, 1]} : vector<8x512xf32> to vector<8x128xf32>
    %63 = math.tanh %62 : vector<8x128xf32>
    %64 = vector.extract_strided_slice %49 {offsets = [0, 384], sizes = [8, 128], strides = [1, 1]} : vector<8x512xf32> to vector<8x128xf32>
    %65 = arith.negf %64 : vector<8x128xf32>
    %66 = math.exp %65 : vector<8x128xf32>
    %cst_26 = arith.constant 1.000000e+00 : f32
    %67 = vector.broadcast %cst_26 : f32 to vector<8x128xf32>
    %68 = arith.addf %67, %66 : vector<8x128xf32>
    %69 = arith.divf %67, %68 : vector<8x128xf32>
    %70 = arith.mulf %61, %45 : vector<8x128xf32>
    %71 = arith.mulf %55, %63 : vector<8x128xf32>
    %72 = arith.addf %70, %71 : vector<8x128xf32>
    %73 = math.tanh %72 : vector<8x128xf32>
    %74 = arith.mulf %69, %73 : vector<8x128xf32>
    %75 = arith.truncf %74 : vector<8x128xf32> to vector<8x128xbf16>
    %cst_27 = arith.constant dense<0.000000e+00> : vector<8x512xf32>
    %76 = tpu.matmul %75, %1, %cst_27 {dimension_numbers = #tpu.dot_dimension_numbers<[1], [0], [0], [1], [0, 0, 1, 1], [], []>} : vector<8x128xbf16>, vector<128x512xbf16>, vector<8x512xf32> -> vector<8x512xf32>
    %77 = arith.addf %18, %76 : vector<8x512xf32>
    %78 = vector.extract_strided_slice %77 {offsets = [0, 0], sizes = [8, 128], strides = [1, 1]} : vector<8x512xf32> to vector<8x128xf32>
    %79 = arith.negf %78 : vector<8x128xf32>
    %80 = math.exp %79 : vector<8x128xf32>
    %cst_28 = arith.constant 1.000000e+00 : f32
    %81 = vector.broadcast %cst_28 : f32 to vector<8x128xf32>
    %82 = arith.addf %81, %80 : vector<8x128xf32>
    %83 = arith.divf %81, %82 : vector<8x128xf32>
    %84 = vector.extract_strided_slice %77 {offsets = [0, 128], sizes = [8, 128], strides = [1, 1]} : vector<8x512xf32> to vector<8x128xf32>
    %85 = arith.negf %84 : vector<8x128xf32>
    %86 = math.exp %85 : vector<8x128xf32>
    %cst_29 = arith.constant 1.000000e+00 : f32
    %87 = vector.broadcast %cst_29 : f32 to vector<8x128xf32>
    %88 = arith.addf %87, %86 : vector<8x128xf32>
    %89 = arith.divf %87, %88 : vector<8x128xf32>
    %90 = vector.extract_strided_slice %77 {offsets = [0, 256], sizes = [8, 128], strides = [1, 1]} : vector<8x512xf32> to vector<8x128xf32>
    %91 = math.tanh %90 : vector<8x128xf32>
    %92 = vector.extract_strided_slice %77 {offsets = [0, 384], sizes = [8, 128], strides = [1, 1]} : vector<8x512xf32> to vector<8x128xf32>
    %93 = arith.negf %92 : vector<8x128xf32>
    %94 = math.exp %93 : vector<8x128xf32>
    %cst_30 = arith.constant 1.000000e+00 : f32
    %95 = vector.broadcast %cst_30 : f32 to vector<8x128xf32>
    %96 = arith.addf %95, %94 : vector<8x128xf32>
    %97 = arith.divf %95, %96 : vector<8x128xf32>
    %98 = arith.mulf %89, %72 : vector<8x128xf32>
    %99 = arith.mulf %83, %91 : vector<8x128xf32>
    %100 = arith.addf %98, %99 : vector<8x128xf32>
    %101 = math.tanh %100 : vector<8x128xf32>
    %102 = arith.mulf %97, %101 : vector<8x128xf32>
    %103 = arith.truncf %74 : vector<8x128xf32> to vector<8x128xbf16>
    %104 = arith.truncf %44 : vector<8x128xf32> to vector<8x128xbf16>
    %105 = tpu.concatenate %103, %104 in 1 : vector<8x128xbf16>, vector<8x128xbf16> -> vector<8x256xbf16>
    %cst_31 = arith.constant dense<0.000000e+00> : vector<8x512xf32>
    %106 = tpu.matmul %105, %3, %cst_31 {dimension_numbers = #tpu.dot_dimension_numbers<[1], [0], [0], [1], [0, 0, 1, 1], [], []>} : vector<8x256xbf16>, vector<256x512xbf16>, vector<8x512xf32> -> vector<8x512xf32>
    %107 = arith.addf %106, %8 : vector<8x512xf32>
    %108 = vector.extract_strided_slice %107 {offsets = [0, 0], sizes = [8, 128], strides = [1, 1]} : vector<8x512xf32> to vector<8x128xf32>
    %109 = arith.negf %108 : vector<8x128xf32>
    %110 = math.exp %109 : vector<8x128xf32>
    %cst_32 = arith.constant 1.000000e+00 : f32
    %111 = vector.broadcast %cst_32 : f32 to vector<8x128xf32>
    %112 = arith.addf %111, %110 : vector<8x128xf32>
    %113 = arith.divf %111, %112 : vector<8x128xf32>
    %114 = vector.extract_strided_slice %107 {offsets = [0, 128], sizes = [8, 128], strides = [1, 1]} : vector<8x512xf32> to vector<8x128xf32>
    %115 = arith.negf %114 : vector<8x128xf32>
    %116 = math.exp %115 : vector<8x128xf32>
    %cst_33 = arith.constant 1.000000e+00 : f32
    %117 = vector.broadcast %cst_33 : f32 to vector<8x128xf32>
    %118 = arith.addf %117, %116 : vector<8x128xf32>
    %119 = arith.divf %117, %118 : vector<8x128xf32>
    %120 = vector.extract_strided_slice %107 {offsets = [0, 256], sizes = [8, 128], strides = [1, 1]} : vector<8x512xf32> to vector<8x128xf32>
    %121 = math.tanh %120 : vector<8x128xf32>
    %122 = vector.extract_strided_slice %107 {offsets = [0, 384], sizes = [8, 128], strides = [1, 1]} : vector<8x512xf32> to vector<8x128xf32>
    %123 = arith.negf %122 : vector<8x128xf32>
    %124 = math.exp %123 : vector<8x128xf32>
    %cst_34 = arith.constant 1.000000e+00 : f32
    %125 = vector.broadcast %cst_34 : f32 to vector<8x128xf32>
    %126 = arith.addf %125, %124 : vector<8x128xf32>
    %127 = arith.divf %125, %126 : vector<8x128xf32>
    %128 = arith.mulf %119, %46 : vector<8x128xf32>
    %129 = arith.mulf %113, %121 : vector<8x128xf32>
    %130 = arith.addf %128, %129 : vector<8x128xf32>
    %131 = math.tanh %130 : vector<8x128xf32>
    %132 = arith.mulf %127, %131 : vector<8x128xf32>
    %133 = arith.truncf %102 : vector<8x128xf32> to vector<8x128xbf16>
    %cst_35 = arith.constant dense<0.000000e+00> : vector<8x512xf32>
    %134 = tpu.matmul %133, %1, %cst_35 {dimension_numbers = #tpu.dot_dimension_numbers<[1], [0], [0], [1], [0, 0, 1, 1], [], []>} : vector<8x128xbf16>, vector<128x512xbf16>, vector<8x512xf32> -> vector<8x512xf32>
    %135 = arith.addf %22, %134 : vector<8x512xf32>
    %136 = vector.extract_strided_slice %135 {offsets = [0, 0], sizes = [8, 128], strides = [1, 1]} : vector<8x512xf32> to vector<8x128xf32>
    %137 = arith.negf %136 : vector<8x128xf32>
    %138 = math.exp %137 : vector<8x128xf32>
    %cst_36 = arith.constant 1.000000e+00 : f32
    %139 = vector.broadcast %cst_36 : f32 to vector<8x128xf32>
    %140 = arith.addf %139, %138 : vector<8x128xf32>
    %141 = arith.divf %139, %140 : vector<8x128xf32>
    %142 = vector.extract_strided_slice %135 {offsets = [0, 128], sizes = [8, 128], strides = [1, 1]} : vector<8x512xf32> to vector<8x128xf32>
    %143 = arith.negf %142 : vector<8x128xf32>
    %144 = math.exp %143 : vector<8x128xf32>
    %cst_37 = arith.constant 1.000000e+00 : f32
    %145 = vector.broadcast %cst_37 : f32 to vector<8x128xf32>
    %146 = arith.addf %145, %144 : vector<8x128xf32>
    %147 = arith.divf %145, %146 : vector<8x128xf32>
    %148 = vector.extract_strided_slice %135 {offsets = [0, 256], sizes = [8, 128], strides = [1, 1]} : vector<8x512xf32> to vector<8x128xf32>
    %149 = math.tanh %148 : vector<8x128xf32>
    %150 = vector.extract_strided_slice %135 {offsets = [0, 384], sizes = [8, 128], strides = [1, 1]} : vector<8x512xf32> to vector<8x128xf32>
    %151 = arith.negf %150 : vector<8x128xf32>
    %152 = math.exp %151 : vector<8x128xf32>
    %cst_38 = arith.constant 1.000000e+00 : f32
    %153 = vector.broadcast %cst_38 : f32 to vector<8x128xf32>
    %154 = arith.addf %153, %152 : vector<8x128xf32>
    %155 = arith.divf %153, %154 : vector<8x128xf32>
    %156 = arith.mulf %147, %100 : vector<8x128xf32>
    %157 = arith.mulf %141, %149 : vector<8x128xf32>
    %158 = arith.addf %156, %157 : vector<8x128xf32>
    %159 = math.tanh %158 : vector<8x128xf32>
    %160 = arith.mulf %155, %159 : vector<8x128xf32>
    %161 = arith.truncf %102 : vector<8x128xf32> to vector<8x128xbf16>
    %162 = arith.truncf %132 : vector<8x128xf32> to vector<8x128xbf16>
    %163 = tpu.concatenate %161, %162 in 1 : vector<8x128xbf16>, vector<8x128xbf16> -> vector<8x256xbf16>
    %cst_39 = arith.constant dense<0.000000e+00> : vector<8x512xf32>
    %164 = tpu.matmul %163, %3, %cst_39 {dimension_numbers = #tpu.dot_dimension_numbers<[1], [0], [0], [1], [0, 0, 1, 1], [], []>} : vector<8x256xbf16>, vector<256x512xbf16>, vector<8x512xf32> -> vector<8x512xf32>
    %165 = arith.addf %164, %8 : vector<8x512xf32>
    %166 = vector.extract_strided_slice %165 {offsets = [0, 0], sizes = [8, 128], strides = [1, 1]} : vector<8x512xf32> to vector<8x128xf32>
    %167 = arith.negf %166 : vector<8x128xf32>
    %168 = math.exp %167 : vector<8x128xf32>
    %cst_40 = arith.constant 1.000000e+00 : f32
    %169 = vector.broadcast %cst_40 : f32 to vector<8x128xf32>
    %170 = arith.addf %169, %168 : vector<8x128xf32>
    %171 = arith.divf %169, %170 : vector<8x128xf32>
    %172 = vector.extract_strided_slice %165 {offsets = [0, 128], sizes = [8, 128], strides = [1, 1]} : vector<8x512xf32> to vector<8x128xf32>
    %173 = arith.negf %172 : vector<8x128xf32>
    %174 = math.exp %173 : vector<8x128xf32>
    %cst_41 = arith.constant 1.000000e+00 : f32
    %175 = vector.broadcast %cst_41 : f32 to vector<8x128xf32>
    %176 = arith.addf %175, %174 : vector<8x128xf32>
    %177 = arith.divf %175, %176 : vector<8x128xf32>
    %178 = vector.extract_strided_slice %165 {offsets = [0, 256], sizes = [8, 128], strides = [1, 1]} : vector<8x512xf32> to vector<8x128xf32>
    %179 = math.tanh %178 : vector<8x128xf32>
    %180 = vector.extract_strided_slice %165 {offsets = [0, 384], sizes = [8, 128], strides = [1, 1]} : vector<8x512xf32> to vector<8x128xf32>
    %181 = arith.negf %180 : vector<8x128xf32>
    %182 = math.exp %181 : vector<8x128xf32>
    %cst_42 = arith.constant 1.000000e+00 : f32
    %183 = vector.broadcast %cst_42 : f32 to vector<8x128xf32>
    %184 = arith.addf %183, %182 : vector<8x128xf32>
    %185 = arith.divf %183, %184 : vector<8x128xf32>
    %186 = arith.mulf %177, %130 : vector<8x128xf32>
    %187 = arith.mulf %171, %179 : vector<8x128xf32>
    %188 = arith.addf %186, %187 : vector<8x128xf32>
    %189 = math.tanh %188 : vector<8x128xf32>
    %190 = arith.mulf %185, %189 : vector<8x128xf32>
    %191 = arith.truncf %160 : vector<8x128xf32> to vector<8x128xbf16>
    %cst_43 = arith.constant dense<0.000000e+00> : vector<8x512xf32>
    %192 = tpu.matmul %191, %1, %cst_43 {dimension_numbers = #tpu.dot_dimension_numbers<[1], [0], [0], [1], [0, 0, 1, 1], [], []>} : vector<8x128xbf16>, vector<128x512xbf16>, vector<8x512xf32> -> vector<8x512xf32>
    %193 = arith.addf %26, %192 : vector<8x512xf32>
    %194 = vector.extract_strided_slice %193 {offsets = [0, 0], sizes = [8, 128], strides = [1, 1]} : vector<8x512xf32> to vector<8x128xf32>
    %195 = arith.negf %194 : vector<8x128xf32>
    %196 = math.exp %195 : vector<8x128xf32>
    %cst_44 = arith.constant 1.000000e+00 : f32
    %197 = vector.broadcast %cst_44 : f32 to vector<8x128xf32>
    %198 = arith.addf %197, %196 : vector<8x128xf32>
    %199 = arith.divf %197, %198 : vector<8x128xf32>
    %200 = vector.extract_strided_slice %193 {offsets = [0, 128], sizes = [8, 128], strides = [1, 1]} : vector<8x512xf32> to vector<8x128xf32>
    %201 = arith.negf %200 : vector<8x128xf32>
    %202 = math.exp %201 : vector<8x128xf32>
    %cst_45 = arith.constant 1.000000e+00 : f32
    %203 = vector.broadcast %cst_45 : f32 to vector<8x128xf32>
    %204 = arith.addf %203, %202 : vector<8x128xf32>
    %205 = arith.divf %203, %204 : vector<8x128xf32>
    %206 = vector.extract_strided_slice %193 {offsets = [0, 256], sizes = [8, 128], strides = [1, 1]} : vector<8x512xf32> to vector<8x128xf32>
    %207 = math.tanh %206 : vector<8x128xf32>
    %208 = vector.extract_strided_slice %193 {offsets = [0, 384], sizes = [8, 128], strides = [1, 1]} : vector<8x512xf32> to vector<8x128xf32>
    %209 = arith.negf %208 : vector<8x128xf32>
    %210 = math.exp %209 : vector<8x128xf32>
    %cst_46 = arith.constant 1.000000e+00 : f32
    %211 = vector.broadcast %cst_46 : f32 to vector<8x128xf32>
    %212 = arith.addf %211, %210 : vector<8x128xf32>
    %213 = arith.divf %211, %212 : vector<8x128xf32>
    %214 = arith.mulf %205, %158 : vector<8x128xf32>
    %215 = arith.mulf %199, %207 : vector<8x128xf32>
    %216 = arith.addf %214, %215 : vector<8x128xf32>
    %217 = math.tanh %216 : vector<8x128xf32>
    %218 = arith.mulf %213, %217 : vector<8x128xf32>
    %219 = arith.truncf %160 : vector<8x128xf32> to vector<8x128xbf16>
    %220 = arith.truncf %190 : vector<8x128xf32> to vector<8x128xbf16>
    %221 = tpu.concatenate %219, %220 in 1 : vector<8x128xbf16>, vector<8x128xbf16> -> vector<8x256xbf16>
    %cst_47 = arith.constant dense<0.000000e+00> : vector<8x512xf32>
    %222 = tpu.matmul %221, %3, %cst_47 {dimension_numbers = #tpu.dot_dimension_numbers<[1], [0], [0], [1], [0, 0, 1, 1], [], []>} : vector<8x256xbf16>, vector<256x512xbf16>, vector<8x512xf32> -> vector<8x512xf32>
    %223 = arith.addf %222, %8 : vector<8x512xf32>
    %224 = vector.extract_strided_slice %223 {offsets = [0, 0], sizes = [8, 128], strides = [1, 1]} : vector<8x512xf32> to vector<8x128xf32>
    %225 = arith.negf %224 : vector<8x128xf32>
    %226 = math.exp %225 : vector<8x128xf32>
    %cst_48 = arith.constant 1.000000e+00 : f32
    %227 = vector.broadcast %cst_48 : f32 to vector<8x128xf32>
    %228 = arith.addf %227, %226 : vector<8x128xf32>
    %229 = arith.divf %227, %228 : vector<8x128xf32>
    %230 = vector.extract_strided_slice %223 {offsets = [0, 128], sizes = [8, 128], strides = [1, 1]} : vector<8x512xf32> to vector<8x128xf32>
    %231 = arith.negf %230 : vector<8x128xf32>
    %232 = math.exp %231 : vector<8x128xf32>
    %cst_49 = arith.constant 1.000000e+00 : f32
    %233 = vector.broadcast %cst_49 : f32 to vector<8x128xf32>
    %234 = arith.addf %233, %232 : vector<8x128xf32>
    %235 = arith.divf %233, %234 : vector<8x128xf32>
    %236 = vector.extract_strided_slice %223 {offsets = [0, 256], sizes = [8, 128], strides = [1, 1]} : vector<8x512xf32> to vector<8x128xf32>
    %237 = math.tanh %236 : vector<8x128xf32>
    %238 = vector.extract_strided_slice %223 {offsets = [0, 384], sizes = [8, 128], strides = [1, 1]} : vector<8x512xf32> to vector<8x128xf32>
    %239 = arith.negf %238 : vector<8x128xf32>
    %240 = math.exp %239 : vector<8x128xf32>
    %cst_50 = arith.constant 1.000000e+00 : f32
    %241 = vector.broadcast %cst_50 : f32 to vector<8x128xf32>
    %242 = arith.addf %241, %240 : vector<8x128xf32>
    %243 = arith.divf %241, %242 : vector<8x128xf32>
    %244 = arith.mulf %235, %188 : vector<8x128xf32>
    %245 = arith.mulf %229, %237 : vector<8x128xf32>
    %246 = arith.addf %244, %245 : vector<8x128xf32>
    %247 = math.tanh %246 : vector<8x128xf32>
    %248 = arith.mulf %243, %247 : vector<8x128xf32>
    %249 = arith.truncf %218 : vector<8x128xf32> to vector<8x128xbf16>
    %cst_51 = arith.constant dense<0.000000e+00> : vector<8x512xf32>
    %250 = tpu.matmul %249, %1, %cst_51 {dimension_numbers = #tpu.dot_dimension_numbers<[1], [0], [0], [1], [0, 0, 1, 1], [], []>} : vector<8x128xbf16>, vector<128x512xbf16>, vector<8x512xf32> -> vector<8x512xf32>
    %251 = arith.addf %30, %250 : vector<8x512xf32>
    %252 = vector.extract_strided_slice %251 {offsets = [0, 0], sizes = [8, 128], strides = [1, 1]} : vector<8x512xf32> to vector<8x128xf32>
    %253 = arith.negf %252 : vector<8x128xf32>
    %254 = math.exp %253 : vector<8x128xf32>
    %cst_52 = arith.constant 1.000000e+00 : f32
    %255 = vector.broadcast %cst_52 : f32 to vector<8x128xf32>
    %256 = arith.addf %255, %254 : vector<8x128xf32>
    %257 = arith.divf %255, %256 : vector<8x128xf32>
    %258 = vector.extract_strided_slice %251 {offsets = [0, 128], sizes = [8, 128], strides = [1, 1]} : vector<8x512xf32> to vector<8x128xf32>
    %259 = arith.negf %258 : vector<8x128xf32>
    %260 = math.exp %259 : vector<8x128xf32>
    %cst_53 = arith.constant 1.000000e+00 : f32
    %261 = vector.broadcast %cst_53 : f32 to vector<8x128xf32>
    %262 = arith.addf %261, %260 : vector<8x128xf32>
    %263 = arith.divf %261, %262 : vector<8x128xf32>
    %264 = vector.extract_strided_slice %251 {offsets = [0, 256], sizes = [8, 128], strides = [1, 1]} : vector<8x512xf32> to vector<8x128xf32>
    %265 = math.tanh %264 : vector<8x128xf32>
    %266 = vector.extract_strided_slice %251 {offsets = [0, 384], sizes = [8, 128], strides = [1, 1]} : vector<8x512xf32> to vector<8x128xf32>
    %267 = arith.negf %266 : vector<8x128xf32>
    %268 = math.exp %267 : vector<8x128xf32>
    %cst_54 = arith.constant 1.000000e+00 : f32
    %269 = vector.broadcast %cst_54 : f32 to vector<8x128xf32>
    %270 = arith.addf %269, %268 : vector<8x128xf32>
    %271 = arith.divf %269, %270 : vector<8x128xf32>
    %272 = arith.mulf %263, %216 : vector<8x128xf32>
    %273 = arith.mulf %257, %265 : vector<8x128xf32>
    %274 = arith.addf %272, %273 : vector<8x128xf32>
    %275 = math.tanh %274 : vector<8x128xf32>
    %276 = arith.mulf %271, %275 : vector<8x128xf32>
    %277 = arith.truncf %218 : vector<8x128xf32> to vector<8x128xbf16>
    %278 = arith.truncf %248 : vector<8x128xf32> to vector<8x128xbf16>
    %279 = tpu.concatenate %277, %278 in 1 : vector<8x128xbf16>, vector<8x128xbf16> -> vector<8x256xbf16>
    %cst_55 = arith.constant dense<0.000000e+00> : vector<8x512xf32>
    %280 = tpu.matmul %279, %3, %cst_55 {dimension_numbers = #tpu.dot_dimension_numbers<[1], [0], [0], [1], [0, 0, 1, 1], [], []>} : vector<8x256xbf16>, vector<256x512xbf16>, vector<8x512xf32> -> vector<8x512xf32>
    %281 = arith.addf %280, %8 : vector<8x512xf32>
    %282 = vector.extract_strided_slice %281 {offsets = [0, 0], sizes = [8, 128], strides = [1, 1]} : vector<8x512xf32> to vector<8x128xf32>
    %283 = arith.negf %282 : vector<8x128xf32>
    %284 = math.exp %283 : vector<8x128xf32>
    %cst_56 = arith.constant 1.000000e+00 : f32
    %285 = vector.broadcast %cst_56 : f32 to vector<8x128xf32>
    %286 = arith.addf %285, %284 : vector<8x128xf32>
    %287 = arith.divf %285, %286 : vector<8x128xf32>
    %288 = vector.extract_strided_slice %281 {offsets = [0, 128], sizes = [8, 128], strides = [1, 1]} : vector<8x512xf32> to vector<8x128xf32>
    %289 = arith.negf %288 : vector<8x128xf32>
    %290 = math.exp %289 : vector<8x128xf32>
    %cst_57 = arith.constant 1.000000e+00 : f32
    %291 = vector.broadcast %cst_57 : f32 to vector<8x128xf32>
    %292 = arith.addf %291, %290 : vector<8x128xf32>
    %293 = arith.divf %291, %292 : vector<8x128xf32>
    %294 = vector.extract_strided_slice %281 {offsets = [0, 256], sizes = [8, 128], strides = [1, 1]} : vector<8x512xf32> to vector<8x128xf32>
    %295 = math.tanh %294 : vector<8x128xf32>
    %296 = vector.extract_strided_slice %281 {offsets = [0, 384], sizes = [8, 128], strides = [1, 1]} : vector<8x512xf32> to vector<8x128xf32>
    %297 = arith.negf %296 : vector<8x128xf32>
    %298 = math.exp %297 : vector<8x128xf32>
    %cst_58 = arith.constant 1.000000e+00 : f32
    %299 = vector.broadcast %cst_58 : f32 to vector<8x128xf32>
    %300 = arith.addf %299, %298 : vector<8x128xf32>
    %301 = arith.divf %299, %300 : vector<8x128xf32>
    %302 = arith.mulf %293, %246 : vector<8x128xf32>
    %303 = arith.mulf %287, %295 : vector<8x128xf32>
    %304 = arith.addf %302, %303 : vector<8x128xf32>
    %305 = math.tanh %304 : vector<8x128xf32>
    %306 = arith.mulf %301, %305 : vector<8x128xf32>
    %307 = arith.truncf %276 : vector<8x128xf32> to vector<8x128xbf16>
    %cst_59 = arith.constant dense<0.000000e+00> : vector<8x512xf32>
    %308 = tpu.matmul %307, %1, %cst_59 {dimension_numbers = #tpu.dot_dimension_numbers<[1], [0], [0], [1], [0, 0, 1, 1], [], []>} : vector<8x128xbf16>, vector<128x512xbf16>, vector<8x512xf32> -> vector<8x512xf32>
    %309 = arith.addf %34, %308 : vector<8x512xf32>
    %310 = vector.extract_strided_slice %309 {offsets = [0, 0], sizes = [8, 128], strides = [1, 1]} : vector<8x512xf32> to vector<8x128xf32>
    %311 = arith.negf %310 : vector<8x128xf32>
    %312 = math.exp %311 : vector<8x128xf32>
    %cst_60 = arith.constant 1.000000e+00 : f32
    %313 = vector.broadcast %cst_60 : f32 to vector<8x128xf32>
    %314 = arith.addf %313, %312 : vector<8x128xf32>
    %315 = arith.divf %313, %314 : vector<8x128xf32>
    %316 = vector.extract_strided_slice %309 {offsets = [0, 128], sizes = [8, 128], strides = [1, 1]} : vector<8x512xf32> to vector<8x128xf32>
    %317 = arith.negf %316 : vector<8x128xf32>
    %318 = math.exp %317 : vector<8x128xf32>
    %cst_61 = arith.constant 1.000000e+00 : f32
    %319 = vector.broadcast %cst_61 : f32 to vector<8x128xf32>
    %320 = arith.addf %319, %318 : vector<8x128xf32>
    %321 = arith.divf %319, %320 : vector<8x128xf32>
    %322 = vector.extract_strided_slice %309 {offsets = [0, 256], sizes = [8, 128], strides = [1, 1]} : vector<8x512xf32> to vector<8x128xf32>
    %323 = math.tanh %322 : vector<8x128xf32>
    %324 = vector.extract_strided_slice %309 {offsets = [0, 384], sizes = [8, 128], strides = [1, 1]} : vector<8x512xf32> to vector<8x128xf32>
    %325 = arith.negf %324 : vector<8x128xf32>
    %326 = math.exp %325 : vector<8x128xf32>
    %cst_62 = arith.constant 1.000000e+00 : f32
    %327 = vector.broadcast %cst_62 : f32 to vector<8x128xf32>
    %328 = arith.addf %327, %326 : vector<8x128xf32>
    %329 = arith.divf %327, %328 : vector<8x128xf32>
    %330 = arith.mulf %321, %274 : vector<8x128xf32>
    %331 = arith.mulf %315, %323 : vector<8x128xf32>
    %332 = arith.addf %330, %331 : vector<8x128xf32>
    %333 = math.tanh %332 : vector<8x128xf32>
    %334 = arith.mulf %329, %333 : vector<8x128xf32>
    %335 = arith.truncf %276 : vector<8x128xf32> to vector<8x128xbf16>
    %336 = arith.truncf %306 : vector<8x128xf32> to vector<8x128xbf16>
    %337 = tpu.concatenate %335, %336 in 1 : vector<8x128xbf16>, vector<8x128xbf16> -> vector<8x256xbf16>
    %cst_63 = arith.constant dense<0.000000e+00> : vector<8x512xf32>
    %338 = tpu.matmul %337, %3, %cst_63 {dimension_numbers = #tpu.dot_dimension_numbers<[1], [0], [0], [1], [0, 0, 1, 1], [], []>} : vector<8x256xbf16>, vector<256x512xbf16>, vector<8x512xf32> -> vector<8x512xf32>
    %339 = arith.addf %338, %8 : vector<8x512xf32>
    %340 = vector.extract_strided_slice %339 {offsets = [0, 0], sizes = [8, 128], strides = [1, 1]} : vector<8x512xf32> to vector<8x128xf32>
    %341 = arith.negf %340 : vector<8x128xf32>
    %342 = math.exp %341 : vector<8x128xf32>
    %cst_64 = arith.constant 1.000000e+00 : f32
    %343 = vector.broadcast %cst_64 : f32 to vector<8x128xf32>
    %344 = arith.addf %343, %342 : vector<8x128xf32>
    %345 = arith.divf %343, %344 : vector<8x128xf32>
    %346 = vector.extract_strided_slice %339 {offsets = [0, 128], sizes = [8, 128], strides = [1, 1]} : vector<8x512xf32> to vector<8x128xf32>
    %347 = arith.negf %346 : vector<8x128xf32>
    %348 = math.exp %347 : vector<8x128xf32>
    %cst_65 = arith.constant 1.000000e+00 : f32
    %349 = vector.broadcast %cst_65 : f32 to vector<8x128xf32>
    %350 = arith.addf %349, %348 : vector<8x128xf32>
    %351 = arith.divf %349, %350 : vector<8x128xf32>
    %352 = vector.extract_strided_slice %339 {offsets = [0, 256], sizes = [8, 128], strides = [1, 1]} : vector<8x512xf32> to vector<8x128xf32>
    %353 = math.tanh %352 : vector<8x128xf32>
    %354 = vector.extract_strided_slice %339 {offsets = [0, 384], sizes = [8, 128], strides = [1, 1]} : vector<8x512xf32> to vector<8x128xf32>
    %355 = arith.negf %354 : vector<8x128xf32>
    %356 = math.exp %355 : vector<8x128xf32>
    %cst_66 = arith.constant 1.000000e+00 : f32
    %357 = vector.broadcast %cst_66 : f32 to vector<8x128xf32>
    %358 = arith.addf %357, %356 : vector<8x128xf32>
    %359 = arith.divf %357, %358 : vector<8x128xf32>
    %360 = arith.mulf %351, %304 : vector<8x128xf32>
    %361 = arith.mulf %345, %353 : vector<8x128xf32>
    %362 = arith.addf %360, %361 : vector<8x128xf32>
    %363 = math.tanh %362 : vector<8x128xf32>
    %364 = arith.mulf %359, %363 : vector<8x128xf32>
    %365 = arith.truncf %334 : vector<8x128xf32> to vector<8x128xbf16>
    %cst_67 = arith.constant dense<0.000000e+00> : vector<8x512xf32>
    %366 = tpu.matmul %365, %1, %cst_67 {dimension_numbers = #tpu.dot_dimension_numbers<[1], [0], [0], [1], [0, 0, 1, 1], [], []>} : vector<8x128xbf16>, vector<128x512xbf16>, vector<8x512xf32> -> vector<8x512xf32>
    %367 = arith.addf %38, %366 : vector<8x512xf32>
    %368 = vector.extract_strided_slice %367 {offsets = [0, 0], sizes = [8, 128], strides = [1, 1]} : vector<8x512xf32> to vector<8x128xf32>
    %369 = arith.negf %368 : vector<8x128xf32>
    %370 = math.exp %369 : vector<8x128xf32>
    %cst_68 = arith.constant 1.000000e+00 : f32
    %371 = vector.broadcast %cst_68 : f32 to vector<8x128xf32>
    %372 = arith.addf %371, %370 : vector<8x128xf32>
    %373 = arith.divf %371, %372 : vector<8x128xf32>
    %374 = vector.extract_strided_slice %367 {offsets = [0, 128], sizes = [8, 128], strides = [1, 1]} : vector<8x512xf32> to vector<8x128xf32>
    %375 = arith.negf %374 : vector<8x128xf32>
    %376 = math.exp %375 : vector<8x128xf32>
    %cst_69 = arith.constant 1.000000e+00 : f32
    %377 = vector.broadcast %cst_69 : f32 to vector<8x128xf32>
    %378 = arith.addf %377, %376 : vector<8x128xf32>
    %379 = arith.divf %377, %378 : vector<8x128xf32>
    %380 = vector.extract_strided_slice %367 {offsets = [0, 256], sizes = [8, 128], strides = [1, 1]} : vector<8x512xf32> to vector<8x128xf32>
    %381 = math.tanh %380 : vector<8x128xf32>
    %382 = vector.extract_strided_slice %367 {offsets = [0, 384], sizes = [8, 128], strides = [1, 1]} : vector<8x512xf32> to vector<8x128xf32>
    %383 = arith.negf %382 : vector<8x128xf32>
    %384 = math.exp %383 : vector<8x128xf32>
    %cst_70 = arith.constant 1.000000e+00 : f32
    %385 = vector.broadcast %cst_70 : f32 to vector<8x128xf32>
    %386 = arith.addf %385, %384 : vector<8x128xf32>
    %387 = arith.divf %385, %386 : vector<8x128xf32>
    %388 = arith.mulf %379, %332 : vector<8x128xf32>
    %389 = arith.mulf %373, %381 : vector<8x128xf32>
    %390 = arith.addf %388, %389 : vector<8x128xf32>
    %391 = math.tanh %390 : vector<8x128xf32>
    %392 = arith.mulf %387, %391 : vector<8x128xf32>
    %393 = arith.truncf %334 : vector<8x128xf32> to vector<8x128xbf16>
    %394 = arith.truncf %364 : vector<8x128xf32> to vector<8x128xbf16>
    %395 = tpu.concatenate %393, %394 in 1 : vector<8x128xbf16>, vector<8x128xbf16> -> vector<8x256xbf16>
    %cst_71 = arith.constant dense<0.000000e+00> : vector<8x512xf32>
    %396 = tpu.matmul %395, %3, %cst_71 {dimension_numbers = #tpu.dot_dimension_numbers<[1], [0], [0], [1], [0, 0, 1, 1], [], []>} : vector<8x256xbf16>, vector<256x512xbf16>, vector<8x512xf32> -> vector<8x512xf32>
    %397 = arith.addf %396, %8 : vector<8x512xf32>
    %398 = vector.extract_strided_slice %397 {offsets = [0, 0], sizes = [8, 128], strides = [1, 1]} : vector<8x512xf32> to vector<8x128xf32>
    %399 = arith.negf %398 : vector<8x128xf32>
    %400 = math.exp %399 : vector<8x128xf32>
    %cst_72 = arith.constant 1.000000e+00 : f32
    %401 = vector.broadcast %cst_72 : f32 to vector<8x128xf32>
    %402 = arith.addf %401, %400 : vector<8x128xf32>
    %403 = arith.divf %401, %402 : vector<8x128xf32>
    %404 = vector.extract_strided_slice %397 {offsets = [0, 128], sizes = [8, 128], strides = [1, 1]} : vector<8x512xf32> to vector<8x128xf32>
    %405 = arith.negf %404 : vector<8x128xf32>
    %406 = math.exp %405 : vector<8x128xf32>
    %cst_73 = arith.constant 1.000000e+00 : f32
    %407 = vector.broadcast %cst_73 : f32 to vector<8x128xf32>
    %408 = arith.addf %407, %406 : vector<8x128xf32>
    %409 = arith.divf %407, %408 : vector<8x128xf32>
    %410 = vector.extract_strided_slice %397 {offsets = [0, 256], sizes = [8, 128], strides = [1, 1]} : vector<8x512xf32> to vector<8x128xf32>
    %411 = math.tanh %410 : vector<8x128xf32>
    %412 = vector.extract_strided_slice %397 {offsets = [0, 384], sizes = [8, 128], strides = [1, 1]} : vector<8x512xf32> to vector<8x128xf32>
    %413 = arith.negf %412 : vector<8x128xf32>
    %414 = math.exp %413 : vector<8x128xf32>
    %cst_74 = arith.constant 1.000000e+00 : f32
    %415 = vector.broadcast %cst_74 : f32 to vector<8x128xf32>
    %416 = arith.addf %415, %414 : vector<8x128xf32>
    %417 = arith.divf %415, %416 : vector<8x128xf32>
    %418 = arith.mulf %409, %362 : vector<8x128xf32>
    %419 = arith.mulf %403, %411 : vector<8x128xf32>
    %420 = arith.addf %418, %419 : vector<8x128xf32>
    %421 = math.tanh %420 : vector<8x128xf32>
    %422 = arith.mulf %417, %421 : vector<8x128xf32>
    %423 = arith.truncf %392 : vector<8x128xf32> to vector<8x128xbf16>
    %cst_75 = arith.constant dense<0.000000e+00> : vector<8x512xf32>
    %424 = tpu.matmul %423, %1, %cst_75 {dimension_numbers = #tpu.dot_dimension_numbers<[1], [0], [0], [1], [0, 0, 1, 1], [], []>} : vector<8x128xbf16>, vector<128x512xbf16>, vector<8x512xf32> -> vector<8x512xf32>
    %425 = arith.addf %42, %424 : vector<8x512xf32>
    %426 = vector.extract_strided_slice %425 {offsets = [0, 0], sizes = [8, 128], strides = [1, 1]} : vector<8x512xf32> to vector<8x128xf32>
    %427 = arith.negf %426 : vector<8x128xf32>
    %428 = math.exp %427 : vector<8x128xf32>
    %cst_76 = arith.constant 1.000000e+00 : f32
    %429 = vector.broadcast %cst_76 : f32 to vector<8x128xf32>
    %430 = arith.addf %429, %428 : vector<8x128xf32>
    %431 = arith.divf %429, %430 : vector<8x128xf32>
    %432 = vector.extract_strided_slice %425 {offsets = [0, 128], sizes = [8, 128], strides = [1, 1]} : vector<8x512xf32> to vector<8x128xf32>
    %433 = arith.negf %432 : vector<8x128xf32>
    %434 = math.exp %433 : vector<8x128xf32>
    %cst_77 = arith.constant 1.000000e+00 : f32
    %435 = vector.broadcast %cst_77 : f32 to vector<8x128xf32>
    %436 = arith.addf %435, %434 : vector<8x128xf32>
    %437 = arith.divf %435, %436 : vector<8x128xf32>
    %438 = vector.extract_strided_slice %425 {offsets = [0, 256], sizes = [8, 128], strides = [1, 1]} : vector<8x512xf32> to vector<8x128xf32>
    %439 = math.tanh %438 : vector<8x128xf32>
    %440 = vector.extract_strided_slice %425 {offsets = [0, 384], sizes = [8, 128], strides = [1, 1]} : vector<8x512xf32> to vector<8x128xf32>
    %441 = arith.negf %440 : vector<8x128xf32>
    %442 = math.exp %441 : vector<8x128xf32>
    %cst_78 = arith.constant 1.000000e+00 : f32
    %443 = vector.broadcast %cst_78 : f32 to vector<8x128xf32>
    %444 = arith.addf %443, %442 : vector<8x128xf32>
    %445 = arith.divf %443, %444 : vector<8x128xf32>
    %446 = arith.mulf %437, %390 : vector<8x128xf32>
    %447 = arith.mulf %431, %439 : vector<8x128xf32>
    %448 = arith.addf %446, %447 : vector<8x128xf32>
    %449 = math.tanh %448 : vector<8x128xf32>
    %450 = arith.mulf %445, %449 : vector<8x128xf32>
    %451 = arith.truncf %392 : vector<8x128xf32> to vector<8x128xbf16>
    %452 = arith.truncf %422 : vector<8x128xf32> to vector<8x128xbf16>
    %453 = tpu.concatenate %451, %452 in 1 : vector<8x128xbf16>, vector<8x128xbf16> -> vector<8x256xbf16>
    %cst_79 = arith.constant dense<0.000000e+00> : vector<8x512xf32>
    %454 = tpu.matmul %453, %3, %cst_79 {dimension_numbers = #tpu.dot_dimension_numbers<[1], [0], [0], [1], [0, 0, 1, 1], [], []>} : vector<8x256xbf16>, vector<256x512xbf16>, vector<8x512xf32> -> vector<8x512xf32>
    %455 = arith.addf %454, %8 : vector<8x512xf32>
    %456 = vector.extract_strided_slice %455 {offsets = [0, 0], sizes = [8, 128], strides = [1, 1]} : vector<8x512xf32> to vector<8x128xf32>
    %457 = arith.negf %456 : vector<8x128xf32>
    %458 = math.exp %457 : vector<8x128xf32>
    %cst_80 = arith.constant 1.000000e+00 : f32
    %459 = vector.broadcast %cst_80 : f32 to vector<8x128xf32>
    %460 = arith.addf %459, %458 : vector<8x128xf32>
    %461 = arith.divf %459, %460 : vector<8x128xf32>
    %462 = vector.extract_strided_slice %455 {offsets = [0, 128], sizes = [8, 128], strides = [1, 1]} : vector<8x512xf32> to vector<8x128xf32>
    %463 = arith.negf %462 : vector<8x128xf32>
    %464 = math.exp %463 : vector<8x128xf32>
    %cst_81 = arith.constant 1.000000e+00 : f32
    %465 = vector.broadcast %cst_81 : f32 to vector<8x128xf32>
    %466 = arith.addf %465, %464 : vector<8x128xf32>
    %467 = arith.divf %465, %466 : vector<8x128xf32>
    %468 = vector.extract_strided_slice %455 {offsets = [0, 256], sizes = [8, 128], strides = [1, 1]} : vector<8x512xf32> to vector<8x128xf32>
    %469 = math.tanh %468 : vector<8x128xf32>
    %470 = vector.extract_strided_slice %455 {offsets = [0, 384], sizes = [8, 128], strides = [1, 1]} : vector<8x512xf32> to vector<8x128xf32>
    %471 = arith.negf %470 : vector<8x128xf32>
    %472 = math.exp %471 : vector<8x128xf32>
    %cst_82 = arith.constant 1.000000e+00 : f32
    %473 = vector.broadcast %cst_82 : f32 to vector<8x128xf32>
    %474 = arith.addf %473, %472 : vector<8x128xf32>
    %475 = arith.divf %473, %474 : vector<8x128xf32>
    %476 = arith.mulf %467, %420 : vector<8x128xf32>
    %477 = arith.mulf %461, %469 : vector<8x128xf32>
    %478 = arith.addf %476, %477 : vector<8x128xf32>
    %479 = math.tanh %478 : vector<8x128xf32>
    %480 = arith.mulf %475, %479 : vector<8x128xf32>
    %481 = arith.truncf %450 : vector<8x128xf32> to vector<8x128xbf16>
    %482 = arith.truncf %480 : vector<8x128xf32> to vector<8x128xbf16>
    %483 = tpu.concatenate %481, %482 in 1 : vector<8x128xbf16>, vector<8x128xbf16> -> vector<8x256xbf16>
    %cst_83 = arith.constant dense<0.000000e+00> : vector<8x512xf32>
    %484 = tpu.matmul %483, %3, %cst_83 {dimension_numbers = #tpu.dot_dimension_numbers<[1], [0], [0], [1], [0, 0, 1, 1], [], []>} : vector<8x256xbf16>, vector<256x512xbf16>, vector<8x512xf32> -> vector<8x512xf32>
    %485 = arith.addf %484, %8 : vector<8x512xf32>
    %486 = vector.extract_strided_slice %485 {offsets = [0, 0], sizes = [8, 128], strides = [1, 1]} : vector<8x512xf32> to vector<8x128xf32>
    %487 = arith.negf %486 : vector<8x128xf32>
    %488 = math.exp %487 : vector<8x128xf32>
    %cst_84 = arith.constant 1.000000e+00 : f32
    %489 = vector.broadcast %cst_84 : f32 to vector<8x128xf32>
    %490 = arith.addf %489, %488 : vector<8x128xf32>
    %491 = arith.divf %489, %490 : vector<8x128xf32>
    %492 = vector.extract_strided_slice %485 {offsets = [0, 128], sizes = [8, 128], strides = [1, 1]} : vector<8x512xf32> to vector<8x128xf32>
    %493 = arith.negf %492 : vector<8x128xf32>
    %494 = math.exp %493 : vector<8x128xf32>
    %cst_85 = arith.constant 1.000000e+00 : f32
    %495 = vector.broadcast %cst_85 : f32 to vector<8x128xf32>
    %496 = arith.addf %495, %494 : vector<8x128xf32>
    %497 = arith.divf %495, %496 : vector<8x128xf32>
    %498 = vector.extract_strided_slice %485 {offsets = [0, 256], sizes = [8, 128], strides = [1, 1]} : vector<8x512xf32> to vector<8x128xf32>
    %499 = math.tanh %498 : vector<8x128xf32>
    %500 = vector.extract_strided_slice %485 {offsets = [0, 384], sizes = [8, 128], strides = [1, 1]} : vector<8x512xf32> to vector<8x128xf32>
    %501 = arith.negf %500 : vector<8x128xf32>
    %502 = math.exp %501 : vector<8x128xf32>
    %cst_86 = arith.constant 1.000000e+00 : f32
    %503 = vector.broadcast %cst_86 : f32 to vector<8x128xf32>
    %504 = arith.addf %503, %502 : vector<8x128xf32>
    %505 = arith.divf %503, %504 : vector<8x128xf32>
    %506 = arith.mulf %497, %478 : vector<8x128xf32>
    %507 = arith.mulf %491, %499 : vector<8x128xf32>
    %508 = arith.addf %506, %507 : vector<8x128xf32>
    %509 = math.tanh %508 : vector<8x128xf32>
    %510 = arith.mulf %505, %509 : vector<8x128xf32>
    %c0_87 = arith.constant 0 : index
    %c0_88 = arith.constant 0 : index
    %511 = vector.load %arg7[%c0_87, %c0_88] : memref<8x128xf32, #tpu.memory_space<vmem>>, vector<8x128xf32>
    tpu.vector_store %arg7[%c0_87, %c0_88], %510 {strides = array<i32>} : memref<8x128xf32, #tpu.memory_space<vmem>>, vector<8x128xf32>,
    return
  }
  func.func @transform_0(%arg0: i32) -> (i32, i32, i32) {
    %c0_i32 = arith.constant 0 : i32
    %c0_i32_0 = arith.constant 0 : i32
    %c0_i32_1 = arith.constant 0 : i32
    return %c0_i32, %arg0, %c0_i32_0 : i32, i32, i32
  }
  func.func @transform_1(%arg0: i32) -> (i32, i32) {
    %c0_i32 = arith.constant 0 : i32
    %c0_i32_0 = arith.constant 0 : i32
    %c0_i32_1 = arith.constant 0 : i32
    return %c0_i32, %c0_i32_0 : i32, i32
  }
  func.func @transform_2(%arg0: i32) -> (i32, i32) {
    %c0_i32 = arith.constant 0 : i32
    %c0_i32_0 = arith.constant 0 : i32
    %c0_i32_1 = arith.constant 0 : i32
    return %c0_i32, %c0_i32_0 : i32, i32
  }
  func.func @transform_3(%arg0: i32) -> (i32, i32) {
    %c0_i32 = arith.constant 0 : i32
    %c0_i32_0 = arith.constant 0 : i32
    %c0_i32_1 = arith.constant 0 : i32
    return %c0_i32, %c0_i32_0 : i32, i32
  }
  func.func @transform_4(%arg0: i32) -> (i32, i32) {
    %c0_i32 = arith.constant 0 : i32
    %c0_i32_0 = arith.constant 0 : i32
    %c0_i32_1 = arith.constant 0 : i32
    return %c0_i32, %c0_i32_0 : i32, i32
  }
  func.func @transform_5(%arg0: i32) -> (i32, i32) {
    %c0_i32 = arith.constant 0 : i32
    %c0_i32_0 = arith.constant 0 : i32
    %c0_i32_1 = arith.constant 0 : i32
    return %c0_i32, %c0_i32_0 : i32, i32
  }
  func.func @transform_6(%arg0: i32) -> (i32, i32) {
    %c0_i32 = arith.constant 0 : i32
    %c0_i32_0 = arith.constant 0 : i32
    return %arg0, %c0_i32 : i32, i32
  }
}

</mosaic_0001>

<llo_original>
// kernel: a_call__.1
$region0: #{a_call__.1}
  #allocation0 [shape = 'u32[]', space=smem, size = 0x4, offset = 0x4, fixed_abs, tag = 'smem constant byte address 0x4 - core index']
  #allocation1 [shape = 'u32[144,128]{1,0:T(1,128)}', space=vmem, size = 0x12000, scoped, tag = 'internal scratch']
  %s0 = inlined_call_operand.vmem [shape: f32[8,8,4], index: 0, kind: input, shape index: {}]
  %s1 = inlined_call_operand.vmem [shape: bf16[4,512], index: 1, kind: input, shape index: {}]
  %s2 = inlined_call_operand.vmem [shape: bf16[128,512], index: 2, kind: input, shape index: {}]
  %s3 = inlined_call_operand.vmem [shape: f32[1,512], index: 3, kind: input, shape index: {}]
  %s4 = inlined_call_operand.vmem [shape: bf16[256,512], index: 4, kind: input, shape index: {}]
  %s5 = inlined_call_operand.vmem [shape: f32[1,512], index: 5, kind: input, shape index: {}]
  %s6 = inlined_call_operand.vmem [shape: f32[8,128], index: 6, kind: output, shape index: {}]
  %s7 = sld [smem:[#allocation0]]
  $region34: #{a_call__.1} parent=0
    _
  %s9 = ssub.s32 1, %s7
  %s10 = scalar_select 0, %s9, %s7
  // Predicated region
  $region2: #{a_call__.1} parent=0 // pred_check
    _
  $region3: #{a_call__.1} parent=0 // pred_check_branch
    %12 = sbr.rel (0) target = $region5
  $region4: #{a_call__.1} parent=0 // pred_region
    _
  $region5: #{a_call__.1} parent=0 // pred_fallthru
    _
  // Predicated region
  $region6: #{a_call__.1} parent=0 // pred_check
    _
  $region7: #{a_call__.1} parent=0 // pred_check_branch
    %14 = sbr.rel (0) target = $region9
  $region8: #{a_call__.1} parent=0 // pred_region
    _
  $region9: #{a_call__.1} parent=0 // pred_fallthru
    _
  // Predicated region
  $region10: #{a_call__.1} parent=0 // pred_check
    _
  $region11: #{a_call__.1} parent=0 // pred_check_branch
    %16 = sbr.rel (0) target = $region13
  $region12: #{a_call__.1} parent=0 // pred_region
    _
  $region13: #{a_call__.1} parent=0 // pred_fallthru
    _
  // Predicated region
  $region14: #{a_call__.1} parent=0 // pred_check
    _
  $region15: #{a_call__.1} parent=0 // pred_check_branch
    %18 = sbr.rel (0) target = $region17
  $region16: #{a_call__.1} parent=0 // pred_region
    _
  $region17: #{a_call__.1} parent=0 // pred_fallthru
    _
  // Predicated region
  $region18: #{a_call__.1} parent=0 // pred_check
    _
  $region19: #{a_call__.1} parent=0 // pred_check_branch
    %20 = sbr.rel (0) target = $region21
  $region20: #{a_call__.1} parent=0 // pred_region
    _
  $region21: #{a_call__.1} parent=0 // pred_fallthru
    _
  // Predicated region
  $region22: #{a_call__.1} parent=0 // pred_check
    _
  $region23: #{a_call__.1} parent=0 // pred_check_branch
    %22 = sbr.rel (0) target = $region25
  $region24: #{a_call__.1} parent=0 // pred_region
    _
  $region25: #{a_call__.1} parent=0 // pred_fallthru
    _
  %v24 = vld [vmem:[%s1] sm:$0xff]
  %v25 = vld [vmem:[%s2] sm:$0xff]
  %v26 = vld [vmem:[%s2 + $0x8] sm:$0xff]
  %v27 = vld [vmem:[%s2 + $0x10] sm:$0xff]
  %v28 = vld [vmem:[%s2 + $0x18] sm:$0xff]
  %v29 = vld [vmem:[%s2 + $0x20] sm:$0xff]
  %v30 = vld [vmem:[%s2 + $0x28] sm:$0xff]
  %v31 = vld [vmem:[%s2 + $0x30] sm:$0xff]
  %v32 = vld [vmem:[%s2 + $0x38] sm:$0xff]
  %v33 = vld [vmem:[%s2 + $0x40] sm:$0xff]
  %v34 = vld [vmem:[%s2 + $0x48] sm:$0xff]
  %v35 = vld [vmem:[%s2 + $0x50] sm:$0xff]
  %v36 = vld [vmem:[%s2 + $0x58] sm:$0xff]
  %v37 = vld [vmem:[%s2 + $0x60] sm:$0xff]
  %v38 = vld [vmem:[%s2 + $0x68] sm:$0xff]
  %v39 = vld [vmem:[%s2 + $0x70] sm:$0xff]
  %v40 = vld [vmem:[%s2 + $0x78] sm:$0xff]
  %v41 = vld [vmem:[%s2 + $0x80] sm:$0xff]
  %v42 = vld [vmem:[%s2 + $0x88] sm:$0xff]
  %v43 = vld [vmem:[%s2 + $0x90] sm:$0xff]
  %v44 = vld [vmem:[%s2 + $0x98] sm:$0xff]
  %v45 = vld [vmem:[%s2 + $0xa0] sm:$0xff]
  %v46 = vld [vmem:[%s2 + $0xa8] sm:$0xff]
  %v47 = vld [vmem:[%s2 + $0xb0] sm:$0xff]
  %v48 = vld [vmem:[%s2 + $0xb8] sm:$0xff]
  %v49 = vld [vmem:[%s2 + $0xc0] sm:$0xff]
  %v50 = vld [vmem:[%s2 + $0xc8] sm:$0xff]
  %v51 = vld [vmem:[%s2 + $0xd0] sm:$0xff]
  %v52 = vld [vmem:[%s2 + $0xd8] sm:$0xff]
  %v53 = vld [vmem:[%s2 + $0xe0] sm:$0xff]
  %v54 = vld [vmem:[%s2 + $0xe8] sm:$0xff]
  %v55 = vld [vmem:[%s2 + $0xf0] sm:$0xff]
  %v56 = vld [vmem:[%s2 + $0xf8] sm:$0xff]
  %v57 = vld [vmem:[%s3] sm:$0xf]
  %v58 = vld [vmem:[%s4] sm:$0xff]
  %v59 = vld [vmem:[%s4 + $0x8] sm:$0xff]
  %v60 = vld [vmem:[%s4 + $0x10] sm:$0xff]
  %v61 = vld [vmem:[%s4 + $0x18] sm:$0xff]
  %v62 = vld [vmem:[%s4 + $0x20] sm:$0xff]
  %v63 = vld [vmem:[%s4 + $0x28] sm:$0xff]
  %v64 = vld [vmem:[%s4 + $0x30] sm:$0xff]
  %v65 = vld [vmem:[%s4 + $0x38] sm:$0xff]
  %v66 = vld [vmem:[%s4 + $0x40] sm:$0xff]
  %v67 = vld [vmem:[%s4 + $0x48] sm:$0xff]
  %v68 = vld [vmem:[%s4 + $0x50] sm:$0xff]
  %v69 = vld [vmem:[%s4 + $0x58] sm:$0xff]
  %v70 = vld [vmem:[%s4 + $0x60] sm:$0xff]
  %v71 = vld [vmem:[%s4 + $0x68] sm:$0xff]
  %v72 = vld [vmem:[%s4 + $0x70] sm:$0xff]
  %v73 = vld [vmem:[%s4 + $0x78] sm:$0xff]
  %v74 = vld [vmem:[%s4 + $0x80] sm:$0xff]
  %v75 = vld [vmem:[%s4 + $0x88] sm:$0xff]
  %v76 = vld [vmem:[%s4 + $0x90] sm:$0xff]
  %v77 = vld [vmem:[%s4 + $0x98] sm:$0xff]
  %v78 = vld [vmem:[%s4 + $0xa0] sm:$0xff]
  %v79 = vld [vmem:[%s4 + $0xa8] sm:$0xff]
  %v80 = vld [vmem:[%s4 + $0xb0] sm:$0xff]
  %v81 = vld [vmem:[%s4 + $0xb8] sm:$0xff]
  %v82 = vld [vmem:[%s4 + $0xc0] sm:$0xff]
  %v83 = vld [vmem:[%s4 + $0xc8] sm:$0xff]
  %v84 = vld [vmem:[%s4 + $0xd0] sm:$0xff]
  %v85 = vld [vmem:[%s4 + $0xd8] sm:$0xff]
  %v86 = vld [vmem:[%s4 + $0xe0] sm:$0xff]
  %v87 = vld [vmem:[%s4 + $0xe8] sm:$0xff]
  %v88 = vld [vmem:[%s4 + $0xf0] sm:$0xff]
  %v89 = vld [vmem:[%s4 + $0xf8] sm:$0xff]
  %v90 = vld [vmem:[%s4 + $0x100] sm:$0xff]
  %v91 = vld [vmem:[%s4 + $0x108] sm:$0xff]
  %v92 = vld [vmem:[%s4 + $0x110] sm:$0xff]
  %v93 = vld [vmem:[%s4 + $0x118] sm:$0xff]
  %v94 = vld [vmem:[%s4 + $0x120] sm:$0xff]
  %v95 = vld [vmem:[%s4 + $0x128] sm:$0xff]
  %v96 = vld [vmem:[%s4 + $0x130] sm:$0xff]
  %v97 = vld [vmem:[%s4 + $0x138] sm:$0xff]
  %v98 = vld [vmem:[%s4 + $0x140] sm:$0xff]
  %v99 = vld [vmem:[%s4 + $0x148] sm:$0xff]
  %v100 = vld [vmem:[%s4 + $0x150] sm:$0xff]
  %v101 = vld [vmem:[%s4 + $0x158] sm:$0xff]
  %v102 = vld [vmem:[%s4 + $0x160] sm:$0xff]
  %v103 = vld [vmem:[%s4 + $0x168] sm:$0xff]
  %v104 = vld [vmem:[%s4 + $0x170] sm:$0xff]
  %v105 = vld [vmem:[%s4 + $0x178] sm:$0xff]
  %v106 = vld [vmem:[%s4 + $0x180] sm:$0xff]
  %v107 = vld [vmem:[%s4 + $0x188] sm:$0xff]
  %v108 = vld [vmem:[%s4 + $0x190] sm:$0xff]
  %v109 = vld [vmem:[%s4 + $0x198] sm:$0xff]
  %v110 = vld [vmem:[%s4 + $0x1a0] sm:$0xff]
  %v111 = vld [vmem:[%s4 + $0x1a8] sm:$0xff]
  %v112 = vld [vmem:[%s4 + $0x1b0] sm:$0xff]
  %v113 = vld [vmem:[%s4 + $0x1b8] sm:$0xff]
  %v114 = vld [vmem:[%s4 + $0x1c0] sm:$0xff]
  %v115 = vld [vmem:[%s4 + $0x1c8] sm:$0xff]
  %v116 = vld [vmem:[%s4 + $0x1d0] sm:$0xff]
  %v117 = vld [vmem:[%s4 + $0x1d8] sm:$0xff]
  %v118 = vld [vmem:[%s4 + $0x1e0] sm:$0xff]
  %v119 = vld [vmem:[%s4 + $0x1e8] sm:$0xff]
  %v120 = vld [vmem:[%s4 + $0x1f0] sm:$0xff]
  %v121 = vld [vmem:[%s4 + $0x1f8] sm:$0xff]
  %v122 = vld [vmem:[%s5] sm:$0xf]
  %v124 = vlaneseq
  %v125 = vshrl.u32 %v124, 7
  %v126 = vsub.s32 0, %v125
  %v127 = vrot.slane %v57, %v126
  %v128 = vlaneseq
  %v129 = vshrl.u32 %v128, 7
  %v130 = vsub.s32 1, %v129
  %v131 = vrot.slane %v57, %v130
  %v132 = vlaneseq
  %v133 = vshrl.u32 %v132, 7
  %v134 = vsub.s32 2, %v133
  %v135 = vrot.slane %v57, %v134
  %v136 = vlaneseq
  %v137 = vshrl.u32 %v136, 7
  %v138 = vsub.s32 3, %v137
  %v139 = vrot.slane %v57, %v138
  %v145 = vlaneseq
  %v146 = vshrl.u32 %v145, 7
  %v147 = vsub.s32 0, %v146
  %v148 = vrot.slane %v122, %v147
  %v149 = vlaneseq
  %v150 = vshrl.u32 %v149, 7
  %v151 = vsub.s32 1, %v150
  %v152 = vrot.slane %v122, %v151
  %v153 = vlaneseq
  %v154 = vshrl.u32 %v153, 7
  %v155 = vsub.s32 2, %v154
  %v156 = vrot.slane %v122, %v155
  %v157 = vlaneseq
  %v158 = vshrl.u32 %v157, 7
  %v159 = vsub.s32 3, %v158
  %v160 = vrot.slane %v122, %v159
  %v165 = vld [vmem:[%s0] sm:$0xff]
  %v166 = vld [vmem:[%s0 + $0x8] sm:$0xff]
  %v167 = vld [vmem:[%s0 + $0x10] sm:$0xff]
  %v168 = vld [vmem:[%s0 + $0x18] sm:$0xff]
  %v169 = vld [vmem:[%s0 + $0x20] sm:$0xff]
  %v170 = vld [vmem:[%s0 + $0x28] sm:$0xff]
  %v171 = vld [vmem:[%s0 + $0x30] sm:$0xff]
  %v172 = vld [vmem:[%s0 + $0x38] sm:$0xff]
  %v173 = vpack.c.bf16 %v165, %v165
  %v174 = vpack.c.bf16 %v166, %v166
  %v175 = vpack.c.bf16 %v167, %v167
  %v176 = vpack.c.bf16 %v168, %v168
  %v177 = vpack.c.bf16 %v169, %v169
  %v178 = vpack.c.bf16 %v170, %v170
  %v179 = vpack.c.bf16 %v171, %v171
  %v180 = vpack.c.bf16 %v172, %v172
  %v182 = vcombine.high %v24, %v24
  %v184 = vunpack.c.l.s4 1983009808
  %v185 = vunpack.c.0.s8 %v184
  %v186 = vlaneseq
  %v187 = vshrl.u32 %v186, 7
  %v188 = vsub.s32 %v185, %v187
  %v189 = vrot.slane %v24, %v188
  %v191 = vunpack.c.l.s4 1983009808
  %v192 = vunpack.c.0.s8 %v191
  %v193 = vlaneseq
  %v194 = vshrl.u32 %v193, 7
  %v195 = vsub.s32 %v192, %v194
  %v196 = vrot.slane %v182, %v195
  %v197 = vcombine.high %v189, %v189
  %v198 = vcombine.high %v196, %v196
  %vm199 = vcmask 31744
  %v201 = vsel %vm199, %v173, 0
  %vm203 = vcmask 1041408
  %v205 = vsel %vm203, %v189, 0
  %v208 = vsel %vm203, %v197, 0
  %v211 = vsel %vm203, %v196, 0
  %v214 = vsel %vm203, %v198, 0
  %216 = vmatprep.subr.bf16.mxu0 %v208
  %217 = vmatpush1.bf16.msra.mxu0 %v205
  %218 = vmatprep.subr.bf16.mxu0 0
  %219 = vmatpush1.bf16.msra.mxu0 0
  %220 = vmatprep.subr.bf16.mxu0 0
  %221 = vmatpush1.bf16.msra.mxu0 0
  %222 = vmatprep.subr.bf16.mxu0 0
  %223 = vmatpush1.bf16.msra.mxu0 0
  %224 = vmatprep.subr.bf16.mxu0 0
  %225 = vmatpush1.bf16.msra.mxu0 0
  %226 = vmatprep.subr.bf16.mxu0 0
  %227 = vmatpush1.bf16.msra.mxu0 0
  %228 = vmatprep.subr.bf16.mxu0 0
  %229 = vmatpush1.bf16.msra.mxu0 0
  %230 = vmatprep.subr.bf16.mxu0 0
  %231 = vmatpush1.bf16.msra.mxu0 0
  %232 = vmatprep.subr.bf16.mxu0 0
  %233 = vmatpush1.bf16.msra.mxu0 0
  %234 = vmatprep.subr.bf16.mxu0 0
  %235 = vmatpush1.bf16.msra.mxu0 0
  %236 = vmatprep.subr.bf16.mxu0 0
  %237 = vmatpush1.bf16.msra.mxu0 0
  %238 = vmatprep.subr.bf16.mxu0 0
  %239 = vmatpush1.bf16.msra.mxu0 0
  %240 = vmatprep.subr.bf16.mxu0 0
  %241 = vmatpush1.bf16.msra.mxu0 0
  %242 = vmatprep.subr.bf16.mxu0 0
  %243 = vmatpush1.bf16.msra.mxu0 0
  %244 = vmatprep.subr.bf16.mxu0 0
  %245 = vmatpush1.bf16.msra.mxu0 0
  %246 = vmatprep.subr.bf16.mxu0 0
  %247 = vmatpush1.bf16.msra.mxu0 0
  %248 = vmatprep.mubr.bf16.mxu0 0
  %249 = vmatmul.mubr.bf16.gmra.mrb[0].mxu0 %v201
  %v250 = vpop.f32.mrb[0].mxu0
  %v251 = vadd.f32 %v127, %v250
  %v252 = vpop.f32.mrb[0].mxu0
  %v253 = vadd.f32 %v131, %v252
  %v254 = vpop.f32.mrb[0].mxu0
  %v255 = vpop.f32.mrb[0].mxu0
  %256 = vdwg.mxu0
  %257 = vmatprep.subr.bf16.mxu0 %v214
  %258 = vmatpush1.bf16.msra.mxu0 %v211
  %259 = vmatprep.subr.bf16.mxu0 0
  %260 = vmatpush1.bf16.msra.mxu0 0
  %261 = vmatprep.subr.bf16.mxu0 0
  %262 = vmatpush1.bf16.msra.mxu0 0
  %263 = vmatprep.subr.bf16.mxu0 0
  %264 = vmatpush1.bf16.msra.mxu0 0
  %265 = vmatprep.subr.bf16.mxu0 0
  %266 = vmatpush1.bf16.msra.mxu0 0
  %267 = vmatprep.subr.bf16.mxu0 0
  %268 = vmatpush1.bf16.msra.mxu0 0
  %269 = vmatprep.subr.bf16.mxu0 0
  %270 = vmatpush1.bf16.msra.mxu0 0
  %271 = vmatprep.subr.bf16.mxu0 0
  %272 = vmatpush1.bf16.msra.mxu0 0
  %273 = vmatprep.subr.bf16.mxu0 0
  %274 = vmatpush1.bf16.msra.mxu0 0
  %275 = vmatprep.subr.bf16.mxu0 0
  %276 = vmatpush1.bf16.msra.mxu0 0
  %277 = vmatprep.subr.bf16.mxu0 0
  %278 = vmatpush1.bf16.msra.mxu0 0
  %279 = vmatprep.subr.bf16.mxu0 0
  %280 = vmatpush1.bf16.msra.mxu0 0
  %281 = vmatprep.subr.bf16.mxu0 0
  %282 = vmatpush1.bf16.msra.mxu0 0
  %283 = vmatprep.subr.bf16.mxu0 0
  %284 = vmatpush1.bf16.msra.mxu0 0
  %285 = vmatprep.subr.bf16.mxu0 0
  %286 = vmatpush1.bf16.msra.mxu0 0
  %287 = vmatprep.subr.bf16.mxu0 0
  %288 = vmatpush1.bf16.msra.mxu0 0
  %289 = vmatprep.mubr.bf16.mxu0 0
  %290 = vmatmul.mubr.bf16.gmra.mrb[0].mxu0 %v201
  %v291 = vpop.f32.mrb[0].mxu0
  %v292 = vadd.f32 %v135, %v291
  %v293 = vpop.f32.mrb[0].mxu0
  %v294 = vadd.f32 %v139, %v293
  %v295 = vpop.f32.mrb[0].mxu0
  %v296 = vpop.f32.mrb[0].mxu0
  %297 = vdwg.mxu0
  %v299 = vsel %vm199, %v174, 0
  %301 = vmatprep.subr.bf16.mxu0 %v208
  %302 = vmatpush1.bf16.msra.mxu0 %v205
  %303 = vmatprep.subr.bf16.mxu0 0
  %304 = vmatpush1.bf16.msra.mxu0 0
  %305 = vmatprep.subr.bf16.mxu0 0
  %306 = vmatpush1.bf16.msra.mxu0 0
  %307 = vmatprep.subr.bf16.mxu0 0
  %308 = vmatpush1.bf16.msra.mxu0 0
  %309 = vmatprep.subr.bf16.mxu0 0
  %310 = vmatpush1.bf16.msra.mxu0 0
  %311 = vmatprep.subr.bf16.mxu0 0
  %312 = vmatpush1.bf16.msra.mxu0 0
  %313 = vmatprep.subr.bf16.mxu0 0
  %314 = vmatpush1.bf16.msra.mxu0 0
  %315 = vmatprep.subr.bf16.mxu0 0
  %316 = vmatpush1.bf16.msra.mxu0 0
  %317 = vmatprep.subr.bf16.mxu0 0
  %318 = vmatpush1.bf16.msra.mxu0 0
  %319 = vmatprep.subr.bf16.mxu0 0
  %320 = vmatpush1.bf16.msra.mxu0 0
  %321 = vmatprep.subr.bf16.mxu0 0
  %322 = vmatpush1.bf16.msra.mxu0 0
  %323 = vmatprep.subr.bf16.mxu0 0
  %324 = vmatpush1.bf16.msra.mxu0 0
  %325 = vmatprep.subr.bf16.mxu0 0
  %326 = vmatpush1.bf16.msra.mxu0 0
  %327 = vmatprep.subr.bf16.mxu0 0
  %328 = vmatpush1.bf16.msra.mxu0 0
  %329 = vmatprep.subr.bf16.mxu0 0
  %330 = vmatpush1.bf16.msra.mxu0 0
  %331 = vmatprep.subr.bf16.mxu0 0
  %332 = vmatpush1.bf16.msra.mxu0 0
  %333 = vmatprep.mubr.bf16.mxu0 0
  %334 = vmatmul.mubr.bf16.gmra.mrb[0].mxu0 %v299
  %v335 = vpop.f32.mrb[0].mxu0
  %v336 = vadd.f32 %v127, %v335
  %v337 = vpop.f32.mrb[0].mxu0
  %v338 = vadd.f32 %v131, %v337
  %v339 = vpop.f32.mrb[0].mxu0
  %v340 = vpop.f32.mrb[0].mxu0
  %341 = vdwg.mxu0
  %342 = vmatprep.subr.bf16.mxu0 %v214
  %343 = vmatpush1.bf16.msra.mxu0 %v211
  %344 = vmatprep.subr.bf16.mxu0 0
  %345 = vmatpush1.bf16.msra.mxu0 0
  %346 = vmatprep.subr.bf16.mxu0 0
  %347 = vmatpush1.bf16.msra.mxu0 0
  %348 = vmatprep.subr.bf16.mxu0 0
  %349 = vmatpush1.bf16.msra.mxu0 0
  %350 = vmatprep.subr.bf16.mxu0 0
  %351 = vmatpush1.bf16.msra.mxu0 0
  %352 = vmatprep.subr.bf16.mxu0 0
  %353 = vmatpush1.bf16.msra.mxu0 0
  %354 = vmatprep.subr.bf16.mxu0 0
  %355 = vmatpush1.bf16.msra.mxu0 0
  %356 = vmatprep.subr.bf16.mxu0 0
  %357 = vmatpush1.bf16.msra.mxu0 0
  %358 = vmatprep.subr.bf16.mxu0 0
  %359 = vmatpush1.bf16.msra.mxu0 0
  %360 = vmatprep.subr.bf16.mxu0 0
  %361 = vmatpush1.bf16.msra.mxu0 0
  %362 = vmatprep.subr.bf16.mxu0 0
  %363 = vmatpush1.bf16.msra.mxu0 0
  %364 = vmatprep.subr.bf16.mxu0 0
  %365 = vmatpush1.bf16.msra.mxu0 0
  %366 = vmatprep.subr.bf16.mxu0 0
  %367 = vmatpush1.bf16.msra.mxu0 0
  %368 = vmatprep.subr.bf16.mxu0 0
  %369 = vmatpush1.bf16.msra.mxu0 0
  %370 = vmatprep.subr.bf16.mxu0 0
  %371 = vmatpush1.bf16.msra.mxu0 0
  %372 = vmatprep.subr.bf16.mxu0 0
  %373 = vmatpush1.bf16.msra.mxu0 0
  %374 = vmatprep.mubr.bf16.mxu0 0
  %375 = vmatmul.mubr.bf16.gmra.mrb[0].mxu0 %v299
  %v376 = vpop.f32.mrb[0].mxu0
  %v377 = vadd.f32 %v135, %v376
  %v378 = vpop.f32.mrb[0].mxu0
  %v379 = vadd.f32 %v139, %v378
  %v380 = vpop.f32.mrb[0].mxu0
  %v381 = vpop.f32.mrb[0].mxu0
  %382 = vdwg.mxu0
  %v384 = vsel %vm199, %v175, 0
  %386 = vmatprep.subr.bf16.mxu0 %v208
  %387 = vmatpush1.bf16.msra.mxu0 %v205
  %388 = vmatprep.subr.bf16.mxu0 0
  %389 = vmatpush1.bf16.msra.mxu0 0
  %390 = vmatprep.subr.bf16.mxu0 0
  %391 = vmatpush1.bf16.msra.mxu0 0
  %392 = vmatprep.subr.bf16.mxu0 0
  %393 = vmatpush1.bf16.msra.mxu0 0
  %394 = vmatprep.subr.bf16.mxu0 0
  %395 = vmatpush1.bf16.msra.mxu0 0
  %396 = vmatprep.subr.bf16.mxu0 0
  %397 = vmatpush1.bf16.msra.mxu0 0
  %398 = vmatprep.subr.bf16.mxu0 0
  %399 = vmatpush1.bf16.msra.mxu0 0
  %400 = vmatprep.subr.bf16.mxu0 0
  %401 = vmatpush1.bf16.msra.mxu0 0
  %402 = vmatprep.subr.bf16.mxu0 0
  %403 = vmatpush1.bf16.msra.mxu0 0
  %404 = vmatprep.subr.bf16.mxu0 0
  %405 = vmatpush1.bf16.msra.mxu0 0
  %406 = vmatprep.subr.bf16.mxu0 0
  %407 = vmatpush1.bf16.msra.mxu0 0
  %408 = vmatprep.subr.bf16.mxu0 0
  %409 = vmatpush1.bf16.msra.mxu0 0
  %410 = vmatprep.subr.bf16.mxu0 0
  %411 = vmatpush1.bf16.msra.mxu0 0
  %412 = vmatprep.subr.bf16.mxu0 0
  %413 = vmatpush1.bf16.msra.mxu0 0
  %414 = vmatprep.subr.bf16.mxu0 0
  %415 = vmatpush1.bf16.msra.mxu0 0
  %416 = vmatprep.subr.bf16.mxu0 0
  %417 = vmatpush1.bf16.msra.mxu0 0
  %418 = vmatprep.mubr.bf16.mxu0 0
  %419 = vmatmul.mubr.bf16.gmra.mrb[0].mxu0 %v384
  %v420 = vpop.f32.mrb[0].mxu0
  %v421 = vadd.f32 %v127, %v420
  %v422 = vpop.f32.mrb[0].mxu0
  %v423 = vadd.f32 %v131, %v422
  %v424 = vpop.f32.mrb[0].mxu0
  %v425 = vpop.f32.mrb[0].mxu0
  %426 = vdwg.mxu0
  %427 = vmatprep.subr.bf16.mxu0 %v214
  %428 = vmatpush1.bf16.msra.mxu0 %v211
  %429 = vmatprep.subr.bf16.mxu0 0
  %430 = vmatpush1.bf16.msra.mxu0 0
  %431 = vmatprep.subr.bf16.mxu0 0
  %432 = vmatpush1.bf16.msra.mxu0 0
  %433 = vmatprep.subr.bf16.mxu0 0
  %434 = vmatpush1.bf16.msra.mxu0 0
  %435 = vmatprep.subr.bf16.mxu0 0
  %436 = vmatpush1.bf16.msra.mxu0 0
  %437 = vmatprep.subr.bf16.mxu0 0
  %438 = vmatpush1.bf16.msra.mxu0 0
  %439 = vmatprep.subr.bf16.mxu0 0
  %440 = vmatpush1.bf16.msra.mxu0 0
  %441 = vmatprep.subr.bf16.mxu0 0
  %442 = vmatpush1.bf16.msra.mxu0 0
  %443 = vmatprep.subr.bf16.mxu0 0
  %444 = vmatpush1.bf16.msra.mxu0 0
  %445 = vmatprep.subr.bf16.mxu0 0
  %446 = vmatpush1.bf16.msra.mxu0 0
  %447 = vmatprep.subr.bf16.mxu0 0
  %448 = vmatpush1.bf16.msra.mxu0 0
  %449 = vmatprep.subr.bf16.mxu0 0
  %450 = vmatpush1.bf16.msra.mxu0 0
  %451 = vmatprep.subr.bf16.mxu0 0
  %452 = vmatpush1.bf16.msra.mxu0 0
  %453 = vmatprep.subr.bf16.mxu0 0
  %454 = vmatpush1.bf16.msra.mxu0 0
  %455 = vmatprep.subr.bf16.mxu0 0
  %456 = vmatpush1.bf16.msra.mxu0 0
  %457 = vmatprep.subr.bf16.mxu0 0
  %458 = vmatpush1.bf16.msra.mxu0 0
  %459 = vmatprep.mubr.bf16.mxu0 0
  %460 = vmatmul.mubr.bf16.gmra.mrb[0].mxu0 %v384
  %v461 = vpop.f32.mrb[0].mxu0
  %v462 = vadd.f32 %v135, %v461
  %v463 = vpop.f32.mrb[0].mxu0
  %v464 = vadd.f32 %v139, %v463
  %v465 = vpop.f32.mrb[0].mxu0
  %v466 = vpop.f32.mrb[0].mxu0
  %467 = vdwg.mxu0
  %v469 = vsel %vm199, %v176, 0
  %471 = vmatprep.subr.bf16.mxu0 %v208
  %472 = vmatpush1.bf16.msra.mxu0 %v205
  %473 = vmatprep.subr.bf16.mxu0 0
  %474 = vmatpush1.bf16.msra.mxu0 0
  %475 = vmatprep.subr.bf16.mxu0 0
  %476 = vmatpush1.bf16.msra.mxu0 0
  %477 = vmatprep.subr.bf16.mxu0 0
  %478 = vmatpush1.bf16.msra.mxu0 0
  %479 = vmatprep.subr.bf16.mxu0 0
  %480 = vmatpush1.bf16.msra.mxu0 0
  %481 = vmatprep.subr.bf16.mxu0 0
  %482 = vmatpush1.bf16.msra.mxu0 0
  %483 = vmatprep.subr.bf16.mxu0 0
  %484 = vmatpush1.bf16.msra.mxu0 0
  %485 = vmatprep.subr.bf16.mxu0 0
  %486 = vmatpush1.bf16.msra.mxu0 0
  %487 = vmatprep.subr.bf16.mxu0 0
  %488 = vmatpush1.bf16.msra.mxu0 0
  %489 = vmatprep.subr.bf16.mxu0 0
  %490 = vmatpush1.bf16.msra.mxu0 0
  %491 = vmatprep.subr.bf16.mxu0 0
  %492 = vmatpush1.bf16.msra.mxu0 0
  %493 = vmatprep.subr.bf16.mxu0 0
  %494 = vmatpush1.bf16.msra.mxu0 0
  %495 = vmatprep.subr.bf16.mxu0 0
  %496 = vmatpush1.bf16.msra.mxu0 0
  %497 = vmatprep.subr.bf16.mxu0 0
  %498 = vmatpush1.bf16.msra.mxu0 0
  %499 = vmatprep.subr.bf16.mxu0 0
  %500 = vmatpush1.bf16.msra.mxu0 0
  %501 = vmatprep.subr.bf16.mxu0 0
  %502 = vmatpush1.bf16.msra.mxu0 0
  %503 = vmatprep.mubr.bf16.mxu0 0
  %504 = vmatmul.mubr.bf16.gmra.mrb[0].mxu0 %v469
  %v505 = vpop.f32.mrb[0].mxu0
  %v506 = vadd.f32 %v127, %v505
  %v507 = vpop.f32.mrb[0].mxu0
  %v508 = vadd.f32 %v131, %v507
  %v509 = vpop.f32.mrb[0].mxu0
  %v510 = vpop.f32.mrb[0].mxu0
  %511 = vdwg.mxu0
  %512 = vmatprep.subr.bf16.mxu0 %v214
  %513 = vmatpush1.bf16.msra.mxu0 %v211
  %514 = vmatprep.subr.bf16.mxu0 0
  %515 = vmatpush1.bf16.msra.mxu0 0
  %516 = vmatprep.subr.bf16.mxu0 0
  %517 = vmatpush1.bf16.msra.mxu0 0
  %518 = vmatprep.subr.bf16.mxu0 0
  %519 = vmatpush1.bf16.msra.mxu0 0
  %520 = vmatprep.subr.bf16.mxu0 0
  %521 = vmatpush1.bf16.msra.mxu0 0
  %522 = vmatprep.subr.bf16.mxu0 0
  %523 = vmatpush1.bf16.msra.mxu0 0
  %524 = vmatprep.subr.bf16.mxu0 0
  %525 = vmatpush1.bf16.msra.mxu0 0
  %526 = vmatprep.subr.bf16.mxu0 0
  %527 = vmatpush1.bf16.msra.mxu0 0
  %528 = vmatprep.subr.bf16.mxu0 0
  %529 = vmatpush1.bf16.msra.mxu0 0
  %530 = vmatprep.subr.bf16.mxu0 0
  %531 = vmatpush1.bf16.msra.mxu0 0
  %532 = vmatprep.subr.bf16.mxu0 0
  %533 = vmatpush1.bf16.msra.mxu0 0
  %534 = vmatprep.subr.bf16.mxu0 0
  %535 = vmatpush1.bf16.msra.mxu0 0
  %536 = vmatprep.subr.bf16.mxu0 0
  %537 = vmatpush1.bf16.msra.mxu0 0
  %538 = vmatprep.subr.bf16.mxu0 0
  %539 = vmatpush1.bf16.msra.mxu0 0
  %540 = vmatprep.subr.bf16.mxu0 0
  %541 = vmatpush1.bf16.msra.mxu0 0
  %542 = vmatprep.subr.bf16.mxu0 0
  %543 = vmatpush1.bf16.msra.mxu0 0
  %544 = vmatprep.mubr.bf16.mxu0 0
  %545 = vmatmul.mubr.bf16.gmra.mrb[0].mxu0 %v469
  %v546 = vpop.f32.mrb[0].mxu0
  %v547 = vadd.f32 %v135, %v546
  %v548 = vpop.f32.mrb[0].mxu0
  %v549 = vadd.f32 %v139, %v548
  %v550 = vpop.f32.mrb[0].mxu0
  %v551 = vpop.f32.mrb[0].mxu0
  %552 = vdwg.mxu0
  %v554 = vsel %vm199, %v177, 0
  %556 = vmatprep.subr.bf16.mxu0 %v208
  %557 = vmatpush1.bf16.msra.mxu0 %v205
  %558 = vmatprep.subr.bf16.mxu0 0
  %559 = vmatpush1.bf16.msra.mxu0 0
  %560 = vmatprep.subr.bf16.mxu0 0
  %561 = vmatpush1.bf16.msra.mxu0 0
  %562 = vmatprep.subr.bf16.mxu0 0
  %563 = vmatpush1.bf16.msra.mxu0 0
  %564 = vmatprep.subr.bf16.mxu0 0
  %565 = vmatpush1.bf16.msra.mxu0 0
  %566 = vmatprep.subr.bf16.mxu0 0
  %567 = vmatpush1.bf16.msra.mxu0 0
  %568 = vmatprep.subr.bf16.mxu0 0
  %569 = vmatpush1.bf16.msra.mxu0 0
  %570 = vmatprep.subr.bf16.mxu0 0
  %571 = vmatpush1.bf16.msra.mxu0 0
  %572 = vmatprep.subr.bf16.mxu0 0
  %573 = vmatpush1.bf16.msra.mxu0 0
  %574 = vmatprep.subr.bf16.mxu0 0
  %575 = vmatpush1.bf16.msra.mxu0 0
  %576 = vmatprep.subr.bf16.mxu0 0
  %577 = vmatpush1.bf16.msra.mxu0 0
  %578 = vmatprep.subr.bf16.mxu0 0
  %579 = vmatpush1.bf16.msra.mxu0 0
  %580 = vmatprep.subr.bf16.mxu0 0
  %581 = vmatpush1.bf16.msra.mxu0 0
  %582 = vmatprep.subr.bf16.mxu0 0
  %583 = vmatpush1.bf16.msra.mxu0 0
  %584 = vmatprep.subr.bf16.mxu0 0
  %585 = vmatpush1.bf16.msra.mxu0 0
  %586 = vmatprep.subr.bf16.mxu0 0
  %587 = vmatpush1.bf16.msra.mxu0 0
  %588 = vmatprep.mubr.bf16.mxu0 0
  %589 = vmatmul.mubr.bf16.gmra.mrb[0].mxu0 %v554
  %v590 = vpop.f32.mrb[0].mxu0
  %v591 = vadd.f32 %v127, %v590
  %v592 = vpop.f32.mrb[0].mxu0
  %v593 = vadd.f32 %v131, %v592
  %v594 = vpop.f32.mrb[0].mxu0
  %v595 = vpop.f32.mrb[0].mxu0
  %596 = vdwg.mxu0
  %597 = vmatprep.subr.bf16.mxu0 %v214
  %598 = vmatpush1.bf16.msra.mxu0 %v211
  %599 = vmatprep.subr.bf16.mxu0 0
  %600 = vmatpush1.bf16.msra.mxu0 0
  %601 = vmatprep.subr.bf16.mxu0 0
  %602 = vmatpush1.bf16.msra.mxu0 0
  %603 = vmatprep.subr.bf16.mxu0 0
  %604 = vmatpush1.bf16.msra.mxu0 0
  %605 = vmatprep.subr.bf16.mxu0 0
  %606 = vmatpush1.bf16.msra.mxu0 0
  %607 = vmatprep.subr.bf16.mxu0 0
  %608 = vmatpush1.bf16.msra.mxu0 0
  %609 = vmatprep.subr.bf16.mxu0 0
  %610 = vmatpush1.bf16.msra.mxu0 0
  %611 = vmatprep.subr.bf16.mxu0 0
  %612 = vmatpush1.bf16.msra.mxu0 0
  %613 = vmatprep.subr.bf16.mxu0 0
  %614 = vmatpush1.bf16.msra.mxu0 0
  %615 = vmatprep.subr.bf16.mxu0 0
  %616 = vmatpush1.bf16.msra.mxu0 0
  %617 = vmatprep.subr.bf16.mxu0 0
  %618 = vmatpush1.bf16.msra.mxu0 0
  %619 = vmatprep.subr.bf16.mxu0 0
  %620 = vmatpush1.bf16.msra.mxu0 0
  %621 = vmatprep.subr.bf16.mxu0 0
  %622 = vmatpush1.bf16.msra.mxu0 0
  %623 = vmatprep.subr.bf16.mxu0 0
  %624 = vmatpush1.bf16.msra.mxu0 0
  %625 = vmatprep.subr.bf16.mxu0 0
  %626 = vmatpush1.bf16.msra.mxu0 0
  %627 = vmatprep.subr.bf16.mxu0 0
  %628 = vmatpush1.bf16.msra.mxu0 0
  %629 = vmatprep.mubr.bf16.mxu0 0
  %630 = vmatmul.mubr.bf16.gmra.mrb[0].mxu0 %v554
  %v631 = vpop.f32.mrb[0].mxu0
  %v632 = vadd.f32 %v135, %v631
  %v633 = vpop.f32.mrb[0].mxu0
  %v634 = vadd.f32 %v139, %v633
  %v635 = vpop.f32.mrb[0].mxu0
  %v636 = vpop.f32.mrb[0].mxu0
  %637 = vdwg.mxu0
  %v639 = vsel %vm199, %v178, 0
  %641 = vmatprep.subr.bf16.mxu0 %v208
  %642 = vmatpush1.bf16.msra.mxu0 %v205
  %643 = vmatprep.subr.bf16.mxu0 0
  %644 = vmatpush1.bf16.msra.mxu0 0
  %645 = vmatprep.subr.bf16.mxu0 0
  %646 = vmatpush1.bf16.msra.mxu0 0
  %647 = vmatprep.subr.bf16.mxu0 0
  %648 = vmatpush1.bf16.msra.mxu0 0
  %649 = vmatprep.subr.bf16.mxu0 0
  %650 = vmatpush1.bf16.msra.mxu0 0
  %651 = vmatprep.subr.bf16.mxu0 0
  %652 = vmatpush1.bf16.msra.mxu0 0
  %653 = vmatprep.subr.bf16.mxu0 0
  %654 = vmatpush1.bf16.msra.mxu0 0
  %655 = vmatprep.subr.bf16.mxu0 0
  %656 = vmatpush1.bf16.msra.mxu0 0
  %657 = vmatprep.subr.bf16.mxu0 0
  %658 = vmatpush1.bf16.msra.mxu0 0
  %659 = vmatprep.subr.bf16.mxu0 0
  %660 = vmatpush1.bf16.msra.mxu0 0
  %661 = vmatprep.subr.bf16.mxu0 0
  %662 = vmatpush1.bf16.msra.mxu0 0
  %663 = vmatprep.subr.bf16.mxu0 0
  %664 = vmatpush1.bf16.msra.mxu0 0
  %665 = vmatprep.subr.bf16.mxu0 0
  %666 = vmatpush1.bf16.msra.mxu0 0
  %667 = vmatprep.subr.bf16.mxu0 0
  %668 = vmatpush1.bf16.msra.mxu0 0
  %669 = vmatprep.subr.bf16.mxu0 0
  %670 = vmatpush1.bf16.msra.mxu0 0
  %671 = vmatprep.subr.bf16.mxu0 0
  %672 = vmatpush1.bf16.msra.mxu0 0
  %673 = vmatprep.mubr.bf16.mxu0 0
  %674 = vmatmul.mubr.bf16.gmra.mrb[0].mxu0 %v639
  %v675 = vpop.f32.mrb[0].mxu0
  %v676 = vadd.f32 %v127, %v675
  %v677 = vpop.f32.mrb[0].mxu0
  %v678 = vadd.f32 %v131, %v677
  %v679 = vpop.f32.mrb[0].mxu0
  %v680 = vpop.f32.mrb[0].mxu0
  %681 = vdwg.mxu0
  %682 = vmatprep.subr.bf16.mxu0 %v214
  %683 = vmatpush1.bf16.msra.mxu0 %v211
  %684 = vmatprep.subr.bf16.mxu0 0
  %685 = vmatpush1.bf16.msra.mxu0 0
  %686 = vmatprep.subr.bf16.mxu0 0
  %687 = vmatpush1.bf16.msra.mxu0 0
  %688 = vmatprep.subr.bf16.mxu0 0
  %689 = vmatpush1.bf16.msra.mxu0 0
  %690 = vmatprep.subr.bf16.mxu0 0
  %691 = vmatpush1.bf16.msra.mxu0 0
  %692 = vmatprep.subr.bf16.mxu0 0
  %693 = vmatpush1.bf16.msra.mxu0 0
  %694 = vmatprep.subr.bf16.mxu0 0
  %695 = vmatpush1.bf16.msra.mxu0 0
  %696 = vmatprep.subr.bf16.mxu0 0
  %697 = vmatpush1.bf16.msra.mxu0 0
  %698 = vmatprep.subr.bf16.mxu0 0
  %699 = vmatpush1.bf16.msra.mxu0 0
  %700 = vmatprep.subr.bf16.mxu0 0
  %701 = vmatpush1.bf16.msra.mxu0 0
  %702 = vmatprep.subr.bf16.mxu0 0
  %703 = vmatpush1.bf16.msra.mxu0 0
  %704 = vmatprep.subr.bf16.mxu0 0
  %705 = vmatpush1.bf16.msra.mxu0 0
  %706 = vmatprep.subr.bf16.mxu0 0
  %707 = vmatpush1.bf16.msra.mxu0 0
  %708 = vmatprep.subr.bf16.mxu0 0
  %709 = vmatpush1.bf16.msra.mxu0 0
  %710 = vmatprep.subr.bf16.mxu0 0
  %711 = vmatpush1.bf16.msra.mxu0 0
  %712 = vmatprep.subr.bf16.mxu0 0
  %713 = vmatpush1.bf16.msra.mxu0 0
  %714 = vmatprep.mubr.bf16.mxu0 0
  %715 = vmatmul.mubr.bf16.gmra.mrb[0].mxu0 %v639
  %v716 = vpop.f32.mrb[0].mxu0
  %v717 = vadd.f32 %v135, %v716
  %v718 = vpop.f32.mrb[0].mxu0
  %v719 = vadd.f32 %v139, %v718
  %v720 = vpop.f32.mrb[0].mxu0
  %v721 = vpop.f32.mrb[0].mxu0
  %722 = vdwg.mxu0
  %v724 = vsel %vm199, %v179, 0
  %726 = vmatprep.subr.bf16.mxu0 %v208
  %727 = vmatpush1.bf16.msra.mxu0 %v205
  %728 = vmatprep.subr.bf16.mxu0 0
  %729 = vmatpush1.bf16.msra.mxu0 0
  %730 = vmatprep.subr.bf16.mxu0 0
  %731 = vmatpush1.bf16.msra.mxu0 0
  %732 = vmatprep.subr.bf16.mxu0 0
  %733 = vmatpush1.bf16.msra.mxu0 0
  %734 = vmatprep.subr.bf16.mxu0 0
  %735 = vmatpush1.bf16.msra.mxu0 0
  %736 = vmatprep.subr.bf16.mxu0 0
  %737 = vmatpush1.bf16.msra.mxu0 0
  %738 = vmatprep.subr.bf16.mxu0 0
  %739 = vmatpush1.bf16.msra.mxu0 0
  %740 = vmatprep.subr.bf16.mxu0 0
  %741 = vmatpush1.bf16.msra.mxu0 0
  %742 = vmatprep.subr.bf16.mxu0 0
  %743 = vmatpush1.bf16.msra.mxu0 0
  %744 = vmatprep.subr.bf16.mxu0 0
  %745 = vmatpush1.bf16.msra.mxu0 0
  %746 = vmatprep.subr.bf16.mxu0 0
  %747 = vmatpush1.bf16.msra.mxu0 0
  %748 = vmatprep.subr.bf16.mxu0 0
  %749 = vmatpush1.bf16.msra.mxu0 0
  %750 = vmatprep.subr.bf16.mxu0 0
  %751 = vmatpush1.bf16.msra.mxu0 0
  %752 = vmatprep.subr.bf16.mxu0 0
  %753 = vmatpush1.bf16.msra.mxu0 0
  %754 = vmatprep.subr.bf16.mxu0 0
  %755 = vmatpush1.bf16.msra.mxu0 0
  %756 = vmatprep.subr.bf16.mxu0 0
  %757 = vmatpush1.bf16.msra.mxu0 0
  %758 = vmatprep.mubr.bf16.mxu0 0
  %759 = vmatmul.mubr.bf16.gmra.mrb[0].mxu0 %v724
  %v760 = vpop.f32.mrb[0].mxu0
  %v761 = vadd.f32 %v127, %v760
  %v762 = vpop.f32.mrb[0].mxu0
  %v763 = vadd.f32 %v131, %v762
  %v764 = vpop.f32.mrb[0].mxu0
  %v765 = vpop.f32.mrb[0].mxu0
  %766 = vdwg.mxu0
  %767 = vmatprep.subr.bf16.mxu0 %v214
  %768 = vmatpush1.bf16.msra.mxu0 %v211
  %769 = vmatprep.subr.bf16.mxu0 0
  %770 = vmatpush1.bf16.msra.mxu0 0
  %771 = vmatprep.subr.bf16.mxu0 0
  %772 = vmatpush1.bf16.msra.mxu0 0
  %773 = vmatprep.subr.bf16.mxu0 0
  %774 = vmatpush1.bf16.msra.mxu0 0
  %775 = vmatprep.subr.bf16.mxu0 0
  %776 = vmatpush1.bf16.msra.mxu0 0
  %777 = vmatprep.subr.bf16.mxu0 0
  %778 = vmatpush1.bf16.msra.mxu0 0
  %779 = vmatprep.subr.bf16.mxu0 0
  %780 = vmatpush1.bf16.msra.mxu0 0
  %781 = vmatprep.subr.bf16.mxu0 0
  %782 = vmatpush1.bf16.msra.mxu0 0
  %783 = vmatprep.subr.bf16.mxu0 0
  %784 = vmatpush1.bf16.msra.mxu0 0
  %785 = vmatprep.subr.bf16.mxu0 0
  %786 = vmatpush1.bf16.msra.mxu0 0
  %787 = vmatprep.subr.bf16.mxu0 0
  %788 = vmatpush1.bf16.msra.mxu0 0
  %789 = vmatprep.subr.bf16.mxu0 0
  %790 = vmatpush1.bf16.msra.mxu0 0
  %791 = vmatprep.subr.bf16.mxu0 0
  %792 = vmatpush1.bf16.msra.mxu0 0
  %793 = vmatprep.subr.bf16.mxu0 0
  %794 = vmatpush1.bf16.msra.mxu0 0
  %795 = vmatprep.subr.bf16.mxu0 0
  %796 = vmatpush1.bf16.msra.mxu0 0
  %797 = vmatprep.subr.bf16.mxu0 0
  %798 = vmatpush1.bf16.msra.mxu0 0
  %799 = vmatprep.mubr.bf16.mxu0 0
  %800 = vmatmul.mubr.bf16.gmra.mrb[0].mxu0 %v724
  %v801 = vpop.f32.mrb[0].mxu0
  %v802 = vadd.f32 %v135, %v801
  %v803 = vpop.f32.mrb[0].mxu0
  %v804 = vadd.f32 %v139, %v803
  %v805 = vpop.f32.mrb[0].mxu0
  %v806 = vpop.f32.mrb[0].mxu0
  %807 = vdwg.mxu0
  %v809 = vsel %vm199, %v180, 0
  %811 = vmatprep.subr.bf16.mxu0 %v208
  %812 = vmatpush1.bf16.msra.mxu0 %v205
  %813 = vmatprep.subr.bf16.mxu0 0
  %814 = vmatpush1.bf16.msra.mxu0 0
  %815 = vmatprep.subr.bf16.mxu0 0
  %816 = vmatpush1.bf16.msra.mxu0 0
  %817 = vmatprep.subr.bf16.mxu0 0
  %818 = vmatpush1.bf16.msra.mxu0 0
  %819 = vmatprep.subr.bf16.mxu0 0
  %820 = vmatpush1.bf16.msra.mxu0 0
  %821 = vmatprep.subr.bf16.mxu0 0
  %822 = vmatpush1.bf16.msra.mxu0 0
  %823 = vmatprep.subr.bf16.mxu0 0
  %824 = vmatpush1.bf16.msra.mxu0 0
  %825 = vmatprep.subr.bf16.mxu0 0
  %826 = vmatpush1.bf16.msra.mxu0 0
  %827 = vmatprep.subr.bf16.mxu0 0
  %828 = vmatpush1.bf16.msra.mxu0 0
  %829 = vmatprep.subr.bf16.mxu0 0
  %830 = vmatpush1.bf16.msra.mxu0 0
  %831 = vmatprep.subr.bf16.mxu0 0
  %832 = vmatpush1.bf16.msra.mxu0 0
  %833 = vmatprep.subr.bf16.mxu0 0
  %834 = vmatpush1.bf16.msra.mxu0 0
  %835 = vmatprep.subr.bf16.mxu0 0
  %836 = vmatpush1.bf16.msra.mxu0 0
  %837 = vmatprep.subr.bf16.mxu0 0
  %838 = vmatpush1.bf16.msra.mxu0 0
  %839 = vmatprep.subr.bf16.mxu0 0
  %840 = vmatpush1.bf16.msra.mxu0 0
  %841 = vmatprep.subr.bf16.mxu0 0
  %842 = vmatpush1.bf16.msra.mxu0 0
  %843 = vmatprep.mubr.bf16.mxu0 0
  %844 = vmatmul.mubr.bf16.gmra.mrb[0].mxu0 %v809
  %v845 = vpop.f32.mrb[0].mxu0
  %v846 = vadd.f32 %v127, %v845
  %v847 = vpop.f32.mrb[0].mxu0
  %v848 = vadd.f32 %v131, %v847
  %v849 = vpop.f32.mrb[0].mxu0
  %v850 = vpop.f32.mrb[0].mxu0
  %851 = vdwg.mxu0
  %852 = vmatprep.subr.bf16.mxu0 %v214
  %853 = vmatpush1.bf16.msra.mxu0 %v211
  %854 = vmatprep.subr.bf16.mxu0 0
  %855 = vmatpush1.bf16.msra.mxu0 0
  %856 = vmatprep.subr.bf16.mxu0 0
  %857 = vmatpush1.bf16.msra.mxu0 0
  %858 = vmatprep.subr.bf16.mxu0 0
  %859 = vmatpush1.bf16.msra.mxu0 0
  %860 = vmatprep.subr.bf16.mxu0 0
  %861 = vmatpush1.bf16.msra.mxu0 0
  %862 = vmatprep.subr.bf16.mxu0 0
  %863 = vmatpush1.bf16.msra.mxu0 0
  %864 = vmatprep.subr.bf16.mxu0 0
  %865 = vmatpush1.bf16.msra.mxu0 0
  %866 = vmatprep.subr.bf16.mxu0 0
  %867 = vmatpush1.bf16.msra.mxu0 0
  %868 = vmatprep.subr.bf16.mxu0 0
  %869 = vmatpush1.bf16.msra.mxu0 0
  %870 = vmatprep.subr.bf16.mxu0 0
  %871 = vmatpush1.bf16.msra.mxu0 0
  %872 = vmatprep.subr.bf16.mxu0 0
  %873 = vmatpush1.bf16.msra.mxu0 0
  %874 = vmatprep.subr.bf16.mxu0 0
  %875 = vmatpush1.bf16.msra.mxu0 0
  %876 = vmatprep.subr.bf16.mxu0 0
  %877 = vmatpush1.bf16.msra.mxu0 0
  %878 = vmatprep.subr.bf16.mxu0 0
  %879 = vmatpush1.bf16.msra.mxu0 0
  %880 = vmatprep.subr.bf16.mxu0 0
  %881 = vmatpush1.bf16.msra.mxu0 0
  %882 = vmatprep.subr.bf16.mxu0 0
  %883 = vmatpush1.bf16.msra.mxu0 0
  %884 = vmatprep.mubr.bf16.mxu0 0
  %885 = vmatmul.mubr.bf16.gmra.mrb[0].mxu0 %v809
  %v886 = vpop.f32.mrb[0].mxu0
  %v887 = vadd.f32 %v135, %v886
  %v888 = vpop.f32.mrb[0].mxu0
  %v889 = vadd.f32 %v139, %v888
  %v890 = vpop.f32.mrb[0].mxu0
  %v891 = vpop.f32.mrb[0].mxu0
  %892 = vdwg.mxu0
  %v925 = vunpack.c.l.b16 %v25
  %v926 = vunpack.c.h.b16 %v25
  %v927 = vunpack.c.l.b16 %v26
  %v928 = vunpack.c.h.b16 %v26
  %v929 = vunpack.c.l.b16 %v27
  %v930 = vunpack.c.h.b16 %v27
  %v931 = vunpack.c.l.b16 %v28
  %v932 = vunpack.c.h.b16 %v28
  %v933 = vunpack.c.l.b16 %v29
  %v934 = vunpack.c.h.b16 %v29
  %v935 = vunpack.c.l.b16 %v30
  %v936 = vunpack.c.h.b16 %v30
  %v937 = vunpack.c.l.b16 %v31
  %v938 = vunpack.c.h.b16 %v31
  %v939 = vunpack.c.l.b16 %v32
  %v940 = vunpack.c.h.b16 %v32
  %v941 = vunpack.c.l.b16 %v33
  %v942 = vunpack.c.h.b16 %v33
  %v943 = vunpack.c.l.b16 %v34
  %v944 = vunpack.c.h.b16 %v34
  %v945 = vunpack.c.l.b16 %v35
  %v946 = vunpack.c.h.b16 %v35
  %v947 = vunpack.c.l.b16 %v36
  %v948 = vunpack.c.h.b16 %v36
  %v949 = vunpack.c.l.b16 %v37
  %v950 = vunpack.c.h.b16 %v37
  %v951 = vunpack.c.l.b16 %v38
  %v952 = vunpack.c.h.b16 %v38
  %v953 = vunpack.c.l.b16 %v39
  %v954 = vunpack.c.h.b16 %v39
  %v955 = vunpack.c.l.b16 %v40
  %v956 = vunpack.c.h.b16 %v40
  %v957 = vunpack.c.l.b16 %v41
  %v958 = vunpack.c.h.b16 %v41
  %v959 = vunpack.c.l.b16 %v42
  %v960 = vunpack.c.h.b16 %v42
  %v961 = vunpack.c.l.b16 %v43
  %v962 = vunpack.c.h.b16 %v43
  %v963 = vunpack.c.l.b16 %v44
  %v964 = vunpack.c.h.b16 %v44
  %v965 = vunpack.c.l.b16 %v45
  %v966 = vunpack.c.h.b16 %v45
  %v967 = vunpack.c.l.b16 %v46
  %v968 = vunpack.c.h.b16 %v46
  %v969 = vunpack.c.l.b16 %v47
  %v970 = vunpack.c.h.b16 %v47
  %v971 = vunpack.c.l.b16 %v48
  %v972 = vunpack.c.h.b16 %v48
  %v973 = vunpack.c.l.b16 %v49
  %v974 = vunpack.c.h.b16 %v49
  %v975 = vunpack.c.l.b16 %v50
  %v976 = vunpack.c.h.b16 %v50
  %v977 = vunpack.c.l.b16 %v51
  %v978 = vunpack.c.h.b16 %v51
  %v979 = vunpack.c.l.b16 %v52
  %v980 = vunpack.c.h.b16 %v52
  %v981 = vunpack.c.l.b16 %v53
  %v982 = vunpack.c.h.b16 %v53
  %v983 = vunpack.c.l.b16 %v54
  %v984 = vunpack.c.h.b16 %v54
  %v985 = vunpack.c.l.b16 %v55
  %v986 = vunpack.c.h.b16 %v55
  %v987 = vunpack.c.l.b16 %v56
  %v988 = vunpack.c.h.b16 %v56
  %v989 = vpack.c.b16 %v929, %v925
  %v990 = vpack.c.b16 %v930, %v926
  %v991 = vpack.c.b16 %v931, %v927
  %v992 = vpack.c.b16 %v932, %v928
  %v993 = vpack.c.b16 %v937, %v933
  %v994 = vpack.c.b16 %v938, %v934
  %v995 = vpack.c.b16 %v939, %v935
  %v996 = vpack.c.b16 %v940, %v936
  %v997 = vpack.c.b16 %v945, %v941
  %v998 = vpack.c.b16 %v946, %v942
  %v999 = vpack.c.b16 %v947, %v943
  %v1000 = vpack.c.b16 %v948, %v944
  %v1001 = vpack.c.b16 %v953, %v949
  %v1002 = vpack.c.b16 %v954, %v950
  %v1003 = vpack.c.b16 %v955, %v951
  %v1004 = vpack.c.b16 %v956, %v952
  %v1005 = vpack.c.b16 %v961, %v957
  %v1006 = vpack.c.b16 %v962, %v958
  %v1007 = vpack.c.b16 %v963, %v959
  %v1008 = vpack.c.b16 %v964, %v960
  %v1009 = vpack.c.b16 %v969, %v965
  %v1010 = vpack.c.b16 %v970, %v966
  %v1011 = vpack.c.b16 %v971, %v967
  %v1012 = vpack.c.b16 %v972, %v968
  %v1013 = vpack.c.b16 %v977, %v973
  %v1014 = vpack.c.b16 %v978, %v974
  %v1015 = vpack.c.b16 %v979, %v975
  %v1016 = vpack.c.b16 %v980, %v976
  %v1017 = vpack.c.b16 %v985, %v981
  %v1018 = vpack.c.b16 %v986, %v982
  %v1019 = vpack.c.b16 %v987, %v983
  %v1020 = vpack.c.b16 %v988, %v984
  %1053 = vmatprep.subr.bf16.mxu0 %v990
  %1054 = vmatpush1.bf16.msra.mxu0 %v989
  %1055 = vmatprep.subr.bf16.mxu0 %v994
  %1056 = vmatpush1.bf16.msra.mxu0 %v993
  %1057 = vmatprep.subr.bf16.mxu0 %v998
  %1058 = vmatpush1.bf16.msra.mxu0 %v997
  %1059 = vmatprep.subr.bf16.mxu0 %v1002
  %1060 = vmatpush1.bf16.msra.mxu0 %v1001
  %1061 = vmatprep.subr.bf16.mxu0 %v1006
  %1062 = vmatpush1.bf16.msra.mxu0 %v1005
  %1063 = vmatprep.subr.bf16.mxu0 %v1010
  %1064 = vmatpush1.bf16.msra.mxu0 %v1009
  %1065 = vmatprep.subr.bf16.mxu0 %v1014
  %1066 = vmatpush1.bf16.msra.mxu0 %v1013
  %1067 = vmatprep.subr.bf16.mxu0 %v1018
  %1068 = vmatpush1.bf16.msra.mxu0 %v1017
  %1069 = vmatprep.subr.bf16.mxu0 0
  %1070 = vmatpush1.bf16.msra.mxu0 0
  %1071 = vmatprep.subr.bf16.mxu0 0
  %1072 = vmatpush1.bf16.msra.mxu0 0
  %1073 = vmatprep.subr.bf16.mxu0 0
  %1074 = vmatpush1.bf16.msra.mxu0 0
  %1075 = vmatprep.subr.bf16.mxu0 0
  %1076 = vmatpush1.bf16.msra.mxu0 0
  %1077 = vmatprep.subr.bf16.mxu0 0
  %1078 = vmatpush1.bf16.msra.mxu0 0
  %1079 = vmatprep.subr.bf16.mxu0 0
  %1080 = vmatpush1.bf16.msra.mxu0 0
  %1081 = vmatprep.subr.bf16.mxu0 0
  %1082 = vmatpush1.bf16.msra.mxu0 0
  %1083 = vmatprep.subr.bf16.mxu0 0
  %1084 = vmatpush1.bf16.msra.mxu0 0
  %1085 = vmatprep.mubr.bf16.mxu0 0
  %1086 = vmatmul.mubr.bf16.gmra.mrb[0].mxu0 0
  %v1087 = vpop.f32.mrb[0].mxu0
  %v1088 = vadd.f32 0.0, %v1087
  %v1089 = vpop.f32.mrb[0].mxu0
  %v1090 = vadd.f32 0.0, %v1089
  %v1091 = vpop.f32.mrb[0].mxu0
  %v1092 = vpop.f32.mrb[0].mxu0
  %1093 = vdwg.mxu0
  %1094 = vmatprep.subr.bf16.mxu0 %v992
  %1095 = vmatpush1.bf16.msra.mxu0 %v991
  %1096 = vmatprep.subr.bf16.mxu0 %v996
  %1097 = vmatpush1.bf16.msra.mxu0 %v995
  %1098 = vmatprep.subr.bf16.mxu0 %v1000
  %1099 = vmatpush1.bf16.msra.mxu0 %v999
  %1100 = vmatprep.subr.bf16.mxu0 %v1004
  %1101 = vmatpush1.bf16.msra.mxu0 %v1003
  %1102 = vmatprep.subr.bf16.mxu0 %v1008
  %1103 = vmatpush1.bf16.msra.mxu0 %v1007
  %1104 = vmatprep.subr.bf16.mxu0 %v1012
  %1105 = vmatpush1.bf16.msra.mxu0 %v1011
  %1106 = vmatprep.subr.bf16.mxu0 %v1016
  %1107 = vmatpush1.bf16.msra.mxu0 %v1015
  %1108 = vmatprep.subr.bf16.mxu0 %v1020
  %1109 = vmatpush1.bf16.msra.mxu0 %v1019
  %1110 = vmatprep.subr.bf16.mxu0 0
  %1111 = vmatpush1.bf16.msra.mxu0 0
  %1112 = vmatprep.subr.bf16.mxu0 0
  %1113 = vmatpush1.bf16.msra.mxu0 0
  %1114 = vmatprep.subr.bf16.mxu0 0
  %1115 = vmatpush1.bf16.msra.mxu0 0
  %1116 = vmatprep.subr.bf16.mxu0 0
  %1117 = vmatpush1.bf16.msra.mxu0 0
  %1118 = vmatprep.subr.bf16.mxu0 0
  %1119 = vmatpush1.bf16.msra.mxu0 0
  %1120 = vmatprep.subr.bf16.mxu0 0
  %1121 = vmatpush1.bf16.msra.mxu0 0
  %1122 = vmatprep.subr.bf16.mxu0 0
  %1123 = vmatpush1.bf16.msra.mxu0 0
  %1124 = vmatprep.subr.bf16.mxu0 0
  %1125 = vmatpush1.bf16.msra.mxu0 0
  %1126 = vmatprep.mubr.bf16.mxu0 0
  %1127 = vmatmul.mubr.bf16.gmra.mrb[0].mxu0 0
  %v1128 = vpop.f32.mrb[0].mxu0
  %v1129 = vadd.f32 0.0, %v1128
  %v1130 = vpop.f32.mrb[0].mxu0
  %v1131 = vadd.f32 0.0, %v1130
  %v1132 = vpop.f32.mrb[0].mxu0
  %v1133 = vpop.f32.mrb[0].mxu0
  %1134 = vdwg.mxu0
  %v1135 = vadd.f32 %v251, %v1088
  %v1136 = vadd.f32 %v253, %v1090
  %v1137 = vadd.f32 %v292, %v1129
  %v1138 = vadd.f32 %v294, %v1131
  %v1139 = vxor.u32 %v1135, 2147483648
  %v1140 = vmul.f32 %v1139, 1.442695
  %v1141 = vpow.pop %v1140
  %v1142 = vadd.f32 %v1141, 1.0
  %v1143 = vrcp.pop %v1142
  %v1144 = vmul.f32 1.0, %v1143
  %v1145 = vxor.u32 %v1136, 2147483648
  %v1146 = vmul.f32 %v1145, 1.442695
  %v1147 = vpow.pop %v1146
  %v1148 = vadd.f32 %v1147, 1.0
  %v1149 = vrcp.pop %v1148
  %v1150 = vmul.f32 1.0, %v1149
  %v1151 = vtanh.pop %v1137
  %v1152 = vxor.u32 %v1138, 2147483648
  %v1153 = vmul.f32 %v1152, 1.442695
  %v1154 = vpow.pop %v1153
  %v1155 = vadd.f32 %v1154, 1.0
  %v1156 = vrcp.pop %v1155
  %v1157 = vmul.f32 1.0, %v1156
  %v1158 = vmul.f32 %v1150, 0.0
  %v1159 = vmul.f32 %v1144, %v1151
  %v1160 = vadd.f32 %v1158, %v1159
  %v1161 = vtanh.pop %v1160
  %v1162 = vmul.f32 %v1157, %v1161
  %v1163 = vpack.c.bf16 %v1162, %v1162
  %1164 = vmatprep.subr.bf16.mxu0 %v990
  %1165 = vmatpush1.bf16.msra.mxu0 %v989
  %1166 = vmatprep.subr.bf16.mxu0 %v994
  %1167 = vmatpush1.bf16.msra.mxu0 %v993
  %1168 = vmatprep.subr.bf16.mxu0 %v998
  %1169 = vmatpush1.bf16.msra.mxu0 %v997
  %1170 = vmatprep.subr.bf16.mxu0 %v1002
  %1171 = vmatpush1.bf16.msra.mxu0 %v1001
  %1172 = vmatprep.subr.bf16.mxu0 %v1006
  %1173 = vmatpush1.bf16.msra.mxu0 %v1005
  %1174 = vmatprep.subr.bf16.mxu0 %v1010
  %1175 = vmatpush1.bf16.msra.mxu0 %v1009
  %1176 = vmatprep.subr.bf16.mxu0 %v1014
  %1177 = vmatpush1.bf16.msra.mxu0 %v1013
  %1178 = vmatprep.subr.bf16.mxu0 %v1018
  %1179 = vmatpush1.bf16.msra.mxu0 %v1017
  %1180 = vmatprep.subr.bf16.mxu0 0
  %1181 = vmatpush1.bf16.msra.mxu0 0
  %1182 = vmatprep.subr.bf16.mxu0 0
  %1183 = vmatpush1.bf16.msra.mxu0 0
  %1184 = vmatprep.subr.bf16.mxu0 0
  %1185 = vmatpush1.bf16.msra.mxu0 0
  %1186 = vmatprep.subr.bf16.mxu0 0
  %1187 = vmatpush1.bf16.msra.mxu0 0
  %1188 = vmatprep.subr.bf16.mxu0 0
  %1189 = vmatpush1.bf16.msra.mxu0 0
  %1190 = vmatprep.subr.bf16.mxu0 0
  %1191 = vmatpush1.bf16.msra.mxu0 0
  %1192 = vmatprep.subr.bf16.mxu0 0
  %1193 = vmatpush1.bf16.msra.mxu0 0
  %1194 = vmatprep.subr.bf16.mxu0 0
  %1195 = vmatpush1.bf16.msra.mxu0 0
  %1196 = vmatprep.mubr.bf16.mxu0 0
  %1197 = vmatmul.mubr.bf16.gmra.mrb[0].mxu0 %v1163
  %v1198 = vpop.f32.mrb[0].mxu0
  %v1199 = vadd.f32 0.0, %v1198
  %v1200 = vpop.f32.mrb[0].mxu0
  %v1201 = vadd.f32 0.0, %v1200
  %v1202 = vpop.f32.mrb[0].mxu0
  %v1203 = vpop.f32.mrb[0].mxu0
  %1204 = vdwg.mxu0
  %1205 = vmatprep.subr.bf16.mxu0 %v992
  %1206 = vmatpush1.bf16.msra.mxu0 %v991
  %1207 = vmatprep.subr.bf16.mxu0 %v996
  %1208 = vmatpush1.bf16.msra.mxu0 %v995
  %1209 = vmatprep.subr.bf16.mxu0 %v1000
  %1210 = vmatpush1.bf16.msra.mxu0 %v999
  %1211 = vmatprep.subr.bf16.mxu0 %v1004
  %1212 = vmatpush1.bf16.msra.mxu0 %v1003
  %1213 = vmatprep.subr.bf16.mxu0 %v1008
  %1214 = vmatpush1.bf16.msra.mxu0 %v1007
  %1215 = vmatprep.subr.bf16.mxu0 %v1012
  %1216 = vmatpush1.bf16.msra.mxu0 %v1011
  %1217 = vmatprep.subr.bf16.mxu0 %v1016
  %1218 = vmatpush1.bf16.msra.mxu0 %v1015
  %1219 = vmatprep.subr.bf16.mxu0 %v1020
  %1220 = vmatpush1.bf16.msra.mxu0 %v1019
  %1221 = vmatprep.subr.bf16.mxu0 0
  %1222 = vmatpush1.bf16.msra.mxu0 0
  %1223 = vmatprep.subr.bf16.mxu0 0
  %1224 = vmatpush1.bf16.msra.mxu0 0
  %1225 = vmatprep.subr.bf16.mxu0 0
  %1226 = vmatpush1.bf16.msra.mxu0 0
  %1227 = vmatprep.subr.bf16.mxu0 0
  %1228 = vmatpush1.bf16.msra.mxu0 0
  %1229 = vmatprep.subr.bf16.mxu0 0
  %1230 = vmatpush1.bf16.msra.mxu0 0
  %1231 = vmatprep.subr.bf16.mxu0 0
  %1232 = vmatpush1.bf16.msra.mxu0 0
  %1233 = vmatprep.subr.bf16.mxu0 0
  %1234 = vmatpush1.bf16.msra.mxu0 0
  %1235 = vmatprep.subr.bf16.mxu0 0
  %1236 = vmatpush1.bf16.msra.mxu0 0
  %1237 = vmatprep.mubr.bf16.mxu0 0
  %1238 = vmatmul.mubr.bf16.gmra.mrb[0].mxu0 %v1163
  %v1239 = vpop.f32.mrb[0].mxu0
  %v1240 = vadd.f32 0.0, %v1239
  %v1241 = vpop.f32.mrb[0].mxu0
  %v1242 = vadd.f32 0.0, %v1241
  %v1243 = vpop.f32.mrb[0].mxu0
  %v1244 = vpop.f32.mrb[0].mxu0
  %1245 = vdwg.mxu0
  %v1246 = vadd.f32 %v336, %v1199
  %v1247 = vadd.f32 %v338, %v1201
  %v1248 = vadd.f32 %v377, %v1240
  %v1249 = vadd.f32 %v379, %v1242
  %v1250 = vxor.u32 %v1246, 2147483648
  %v1251 = vmul.f32 %v1250, 1.442695
  %v1252 = vpow.pop %v1251
  %v1253 = vadd.f32 %v1252, 1.0
  %v1254 = vrcp.pop %v1253
  %v1255 = vmul.f32 1.0, %v1254
  %v1256 = vxor.u32 %v1247, 2147483648
  %v1257 = vmul.f32 %v1256, 1.442695
  %v1258 = vpow.pop %v1257
  %v1259 = vadd.f32 %v1258, 1.0
  %v1260 = vrcp.pop %v1259
  %v1261 = vmul.f32 1.0, %v1260
  %v1262 = vtanh.pop %v1248
  %v1263 = vxor.u32 %v1249, 2147483648
  %v1264 = vmul.f32 %v1263, 1.442695
  %v1265 = vpow.pop %v1264
  %v1266 = vadd.f32 %v1265, 1.0
  %v1267 = vrcp.pop %v1266
  %v1268 = vmul.f32 1.0, %v1267
  %v1269 = vmul.f32 %v1261, %v1160
  %v1270 = vmul.f32 %v1255, %v1262
  %v1271 = vadd.f32 %v1269, %v1270
  %v1272 = vtanh.pop %v1271
  %v1273 = vmul.f32 %v1268, %v1272
  %v1338 = vunpack.c.l.b16 %v58
  %v1339 = vunpack.c.h.b16 %v58
  %v1340 = vunpack.c.l.b16 %v59
  %v1341 = vunpack.c.h.b16 %v59
  %v1342 = vunpack.c.l.b16 %v60
  %v1343 = vunpack.c.h.b16 %v60
  %v1344 = vunpack.c.l.b16 %v61
  %v1345 = vunpack.c.h.b16 %v61
  %v1346 = vunpack.c.l.b16 %v62
  %v1347 = vunpack.c.h.b16 %v62
  %v1348 = vunpack.c.l.b16 %v63
  %v1349 = vunpack.c.h.b16 %v63
  %v1350 = vunpack.c.l.b16 %v64
  %v1351 = vunpack.c.h.b16 %v64
  %v1352 = vunpack.c.l.b16 %v65
  %v1353 = vunpack.c.h.b16 %v65
  %v1354 = vunpack.c.l.b16 %v66
  %v1355 = vunpack.c.h.b16 %v66
  %v1356 = vunpack.c.l.b16 %v67
  %v1357 = vunpack.c.h.b16 %v67
  %v1358 = vunpack.c.l.b16 %v68
  %v1359 = vunpack.c.h.b16 %v68
  %v1360 = vunpack.c.l.b16 %v69
  %v1361 = vunpack.c.h.b16 %v69
  %v1362 = vunpack.c.l.b16 %v70
  %v1363 = vunpack.c.h.b16 %v70
  %v1364 = vunpack.c.l.b16 %v71
  %v1365 = vunpack.c.h.b16 %v71
  %v1366 = vunpack.c.l.b16 %v72
  %v1367 = vunpack.c.h.b16 %v72
  %v1368 = vunpack.c.l.b16 %v73
  %v1369 = vunpack.c.h.b16 %v73
  %v1370 = vunpack.c.l.b16 %v74
  %v1371 = vunpack.c.h.b16 %v74
  %v1372 = vunpack.c.l.b16 %v75
  %v1373 = vunpack.c.h.b16 %v75
  %v1374 = vunpack.c.l.b16 %v76
  %v1375 = vunpack.c.h.b16 %v76
  %v1376 = vunpack.c.l.b16 %v77
  %v1377 = vunpack.c.h.b16 %v77
  %v1378 = vunpack.c.l.b16 %v78
  %v1379 = vunpack.c.h.b16 %v78
  %v1380 = vunpack.c.l.b16 %v79
  %v1381 = vunpack.c.h.b16 %v79
  %v1382 = vunpack.c.l.b16 %v80
  %v1383 = vunpack.c.h.b16 %v80
  %v1384 = vunpack.c.l.b16 %v81
  %v1385 = vunpack.c.h.b16 %v81
  %v1386 = vunpack.c.l.b16 %v82
  %v1387 = vunpack.c.h.b16 %v82
  %v1388 = vunpack.c.l.b16 %v83
  %v1389 = vunpack.c.h.b16 %v83
  %v1390 = vunpack.c.l.b16 %v84
  %v1391 = vunpack.c.h.b16 %v84
  %v1392 = vunpack.c.l.b16 %v85
  %v1393 = vunpack.c.h.b16 %v85
  %v1394 = vunpack.c.l.b16 %v86
  %v1395 = vunpack.c.h.b16 %v86
  %v1396 = vunpack.c.l.b16 %v87
  %v1397 = vunpack.c.h.b16 %v87
  %v1398 = vunpack.c.l.b16 %v88
  %v1399 = vunpack.c.h.b16 %v88
  %v1400 = vunpack.c.l.b16 %v89
  %v1401 = vunpack.c.h.b16 %v89
  %v1402 = vunpack.c.l.b16 %v90
  %v1403 = vunpack.c.h.b16 %v90
  %v1404 = vunpack.c.l.b16 %v91
  %v1405 = vunpack.c.h.b16 %v91
  %v1406 = vunpack.c.l.b16 %v92
  %v1407 = vunpack.c.h.b16 %v92
  %v1408 = vunpack.c.l.b16 %v93
  %v1409 = vunpack.c.h.b16 %v93
  %v1410 = vunpack.c.l.b16 %v94
  %v1411 = vunpack.c.h.b16 %v94
  %v1412 = vunpack.c.l.b16 %v95
  %v1413 = vunpack.c.h.b16 %v95
  %v1414 = vunpack.c.l.b16 %v96
  %v1415 = vunpack.c.h.b16 %v96
  %v1416 = vunpack.c.l.b16 %v97
  %v1417 = vunpack.c.h.b16 %v97
  %v1418 = vunpack.c.l.b16 %v98
  %v1419 = vunpack.c.h.b16 %v98
  %v1420 = vunpack.c.l.b16 %v99
  %v1421 = vunpack.c.h.b16 %v99
  %v1422 = vunpack.c.l.b16 %v100
  %v1423 = vunpack.c.h.b16 %v100
  %v1424 = vunpack.c.l.b16 %v101
  %v1425 = vunpack.c.h.b16 %v101
  %v1426 = vunpack.c.l.b16 %v102
  %v1427 = vunpack.c.h.b16 %v102
  %v1428 = vunpack.c.l.b16 %v103
  %v1429 = vunpack.c.h.b16 %v103
  %v1430 = vunpack.c.l.b16 %v104
  %v1431 = vunpack.c.h.b16 %v104
  %v1432 = vunpack.c.l.b16 %v105
  %v1433 = vunpack.c.h.b16 %v105
  %v1434 = vunpack.c.l.b16 %v106
  %v1435 = vunpack.c.h.b16 %v106
  %v1436 = vunpack.c.l.b16 %v107
  %v1437 = vunpack.c.h.b16 %v107
  %v1438 = vunpack.c.l.b16 %v108
  %v1439 = vunpack.c.h.b16 %v108
  %v1440 = vunpack.c.l.b16 %v109
  %v1441 = vunpack.c.h.b16 %v109
  %v1442 = vunpack.c.l.b16 %v110
  %v1443 = vunpack.c.h.b16 %v110
  %v1444 = vunpack.c.l.b16 %v111
  %v1445 = vunpack.c.h.b16 %v111
  %v1446 = vunpack.c.l.b16 %v112
  %v1447 = vunpack.c.h.b16 %v112
  %v1448 = vunpack.c.l.b16 %v113
  %v1449 = vunpack.c.h.b16 %v113
  %v1450 = vunpack.c.l.b16 %v114
  %v1451 = vunpack.c.h.b16 %v114
  %v1452 = vunpack.c.l.b16 %v115
  %v1453 = vunpack.c.h.b16 %v115
  %v1454 = vunpack.c.l.b16 %v116
  %v1455 = vunpack.c.h.b16 %v116
  %v1456 = vunpack.c.l.b16 %v117
  %v1457 = vunpack.c.h.b16 %v117
  %v1458 = vunpack.c.l.b16 %v118
  %v1459 = vunpack.c.h.b16 %v118
  %v1460 = vunpack.c.l.b16 %v119
  %v1461 = vunpack.c.h.b16 %v119
  %v1462 = vunpack.c.l.b16 %v120
  %v1463 = vunpack.c.h.b16 %v120
  %v1464 = vunpack.c.l.b16 %v121
  %v1465 = vunpack.c.h.b16 %v121
  %v1466 = vpack.c.b16 %v1342, %v1338
  %v1467 = vpack.c.b16 %v1343, %v1339
  %v1468 = vpack.c.b16 %v1344, %v1340
  %v1469 = vpack.c.b16 %v1345, %v1341
  %v1470 = vpack.c.b16 %v1350, %v1346
  %v1471 = vpack.c.b16 %v1351, %v1347
  %v1472 = vpack.c.b16 %v1352, %v1348
  %v1473 = vpack.c.b16 %v1353, %v1349
  %v1474 = vpack.c.b16 %v1358, %v1354
  %v1475 = vpack.c.b16 %v1359, %v1355
  %v1476 = vpack.c.b16 %v1360, %v1356
  %v1477 = vpack.c.b16 %v1361, %v1357
  %v1478 = vpack.c.b16 %v1366, %v1362
  %v1479 = vpack.c.b16 %v1367, %v1363
  %v1480 = vpack.c.b16 %v1368, %v1364
  %v1481 = vpack.c.b16 %v1369, %v1365
  %v1482 = vpack.c.b16 %v1374, %v1370
  %v1483 = vpack.c.b16 %v1375, %v1371
  %v1484 = vpack.c.b16 %v1376, %v1372
  %v1485 = vpack.c.b16 %v1377, %v1373
  %v1486 = vpack.c.b16 %v1382, %v1378
  %v1487 = vpack.c.b16 %v1383, %v1379
  %v1488 = vpack.c.b16 %v1384, %v1380
  %v1489 = vpack.c.b16 %v1385, %v1381
  %v1490 = vpack.c.b16 %v1390, %v1386
  %v1491 = vpack.c.b16 %v1391, %v1387
  %v1492 = vpack.c.b16 %v1392, %v1388
  %v1493 = vpack.c.b16 %v1393, %v1389
  %v1494 = vpack.c.b16 %v1398, %v1394
  %v1495 = vpack.c.b16 %v1399, %v1395
  %v1496 = vpack.c.b16 %v1400, %v1396
  %v1497 = vpack.c.b16 %v1401, %v1397
  %v1498 = vpack.c.b16 %v1406, %v1402
  %v1499 = vpack.c.b16 %v1407, %v1403
  %v1500 = vpack.c.b16 %v1408, %v1404
  %v1501 = vpack.c.b16 %v1409, %v1405
  %v1502 = vpack.c.b16 %v1414, %v1410
  %v1503 = vpack.c.b16 %v1415, %v1411
  %v1504 = vpack.c.b16 %v1416, %v1412
  %v1505 = vpack.c.b16 %v1417, %v1413
  %v1506 = vpack.c.b16 %v1422, %v1418
  %v1507 = vpack.c.b16 %v1423, %v1419
  %v1508 = vpack.c.b16 %v1424, %v1420
  %v1509 = vpack.c.b16 %v1425, %v1421
  %v1510 = vpack.c.b16 %v1430, %v1426
  %v1511 = vpack.c.b16 %v1431, %v1427
  %v1512 = vpack.c.b16 %v1432, %v1428
  %v1513 = vpack.c.b16 %v1433, %v1429
  %v1514 = vpack.c.b16 %v1438, %v1434
  %v1515 = vpack.c.b16 %v1439, %v1435
  %v1516 = vpack.c.b16 %v1440, %v1436
  %v1517 = vpack.c.b16 %v1441, %v1437
  %v1518 = vpack.c.b16 %v1446, %v1442
  %v1519 = vpack.c.b16 %v1447, %v1443
  %v1520 = vpack.c.b16 %v1448, %v1444
  %v1521 = vpack.c.b16 %v1449, %v1445
  %v1522 = vpack.c.b16 %v1454, %v1450
  %v1523 = vpack.c.b16 %v1455, %v1451
  %v1524 = vpack.c.b16 %v1456, %v1452
  %v1525 = vpack.c.b16 %v1457, %v1453
  %v1526 = vpack.c.b16 %v1462, %v1458
  %v1527 = vpack.c.b16 %v1463, %v1459
  %v1528 = vpack.c.b16 %v1464, %v1460
  %v1529 = vpack.c.b16 %v1465, %v1461
  %1594 = vmatprep.subr.bf16.mxu0 %v1467
  %1595 = vmatpush1.bf16.msra.mxu0 %v1466
  %1596 = vmatprep.subr.bf16.mxu0 %v1471
  %1597 = vmatpush1.bf16.msra.mxu0 %v1470
  %1598 = vmatprep.subr.bf16.mxu0 %v1475
  %1599 = vmatpush1.bf16.msra.mxu0 %v1474
  %1600 = vmatprep.subr.bf16.mxu0 %v1479
  %1601 = vmatpush1.bf16.msra.mxu0 %v1478
  %1602 = vmatprep.subr.bf16.mxu0 %v1483
  %1603 = vmatpush1.bf16.msra.mxu0 %v1482
  %1604 = vmatprep.subr.bf16.mxu0 %v1487
  %1605 = vmatpush1.bf16.msra.mxu0 %v1486
  %1606 = vmatprep.subr.bf16.mxu0 %v1491
  %1607 = vmatpush1.bf16.msra.mxu0 %v1490
  %1608 = vmatprep.subr.bf16.mxu0 %v1495
  %1609 = vmatpush1.bf16.msra.mxu0 %v1494
  %1610 = vmatprep.subr.bf16.mxu0 %v1499
  %1611 = vmatpush1.bf16.msra.mxu0 %v1498
  %1612 = vmatprep.subr.bf16.mxu0 %v1503
  %1613 = vmatpush1.bf16.msra.mxu0 %v1502
  %1614 = vmatprep.subr.bf16.mxu0 %v1507
  %1615 = vmatpush1.bf16.msra.mxu0 %v1506
  %1616 = vmatprep.subr.bf16.mxu0 %v1511
  %1617 = vmatpush1.bf16.msra.mxu0 %v1510
  %1618 = vmatprep.subr.bf16.mxu0 %v1515
  %1619 = vmatpush1.bf16.msra.mxu0 %v1514
  %1620 = vmatprep.subr.bf16.mxu0 %v1519
  %1621 = vmatpush1.bf16.msra.mxu0 %v1518
  %1622 = vmatprep.subr.bf16.mxu0 %v1523
  %1623 = vmatpush1.bf16.msra.mxu0 %v1522
  %1624 = vmatprep.subr.bf16.mxu0 %v1527
  %1625 = vmatpush1.bf16.msra.mxu0 %v1526
  %1626 = vmatprep.mubr.bf16.mxu0 0
  %1627 = vmatmul.mubr.bf16.gmra.mrb[0].mxu0 %v1163
  %v1628 = vpop.f32.mrb[0].mxu0
  %v1629 = vadd.f32 %v148, %v1628
  %v1630 = vpop.f32.mrb[0].mxu0
  %v1631 = vadd.f32 %v152, %v1630
  %v1632 = vpop.f32.mrb[0].mxu0
  %v1633 = vpop.f32.mrb[0].mxu0
  %1634 = vdwg.mxu0
  %1635 = vmatprep.subr.bf16.mxu0 %v1469
  %1636 = vmatpush1.bf16.msra.mxu0 %v1468
  %1637 = vmatprep.subr.bf16.mxu0 %v1473
  %1638 = vmatpush1.bf16.msra.mxu0 %v1472
  %1639 = vmatprep.subr.bf16.mxu0 %v1477
  %1640 = vmatpush1.bf16.msra.mxu0 %v1476
  %1641 = vmatprep.subr.bf16.mxu0 %v1481
  %1642 = vmatpush1.bf16.msra.mxu0 %v1480
  %1643 = vmatprep.subr.bf16.mxu0 %v1485
  %1644 = vmatpush1.bf16.msra.mxu0 %v1484
  %1645 = vmatprep.subr.bf16.mxu0 %v1489
  %1646 = vmatpush1.bf16.msra.mxu0 %v1488
  %1647 = vmatprep.subr.bf16.mxu0 %v1493
  %1648 = vmatpush1.bf16.msra.mxu0 %v1492
  %1649 = vmatprep.subr.bf16.mxu0 %v1497
  %1650 = vmatpush1.bf16.msra.mxu0 %v1496
  %1651 = vmatprep.subr.bf16.mxu0 %v1501
  %1652 = vmatpush1.bf16.msra.mxu0 %v1500
  %1653 = vmatprep.subr.bf16.mxu0 %v1505
  %1654 = vmatpush1.bf16.msra.mxu0 %v1504
  %1655 = vmatprep.subr.bf16.mxu0 %v1509
  %1656 = vmatpush1.bf16.msra.mxu0 %v1508
  %1657 = vmatprep.subr.bf16.mxu0 %v1513
  %1658 = vmatpush1.bf16.msra.mxu0 %v1512
  %1659 = vmatprep.subr.bf16.mxu0 %v1517
  %1660 = vmatpush1.bf16.msra.mxu0 %v1516
  %1661 = vmatprep.subr.bf16.mxu0 %v1521
  %1662 = vmatpush1.bf16.msra.mxu0 %v1520
  %1663 = vmatprep.subr.bf16.mxu0 %v1525
  %1664 = vmatpush1.bf16.msra.mxu0 %v1524
  %1665 = vmatprep.subr.bf16.mxu0 %v1529
  %1666 = vmatpush1.bf16.msra.mxu0 %v1528
  %1667 = vmatprep.mubr.bf16.mxu0 0
  %1668 = vmatmul.mubr.bf16.gmra.mrb[0].mxu0 %v1163
  %v1669 = vpop.f32.mrb[0].mxu0
  %v1670 = vadd.f32 %v156, %v1669
  %v1671 = vpop.f32.mrb[0].mxu0
  %v1672 = vadd.f32 %v160, %v1671
  %v1673 = vpop.f32.mrb[0].mxu0
  %v1674 = vpop.f32.mrb[0].mxu0
  %1675 = vdwg.mxu0
  %v1676 = vxor.u32 %v1629, 2147483648
  %v1677 = vmul.f32 %v1676, 1.442695
  %v1678 = vpow.pop %v1677
  %v1679 = vadd.f32 %v1678, 1.0
  %v1680 = vrcp.pop %v1679
  %v1681 = vmul.f32 1.0, %v1680
  %v1682 = vxor.u32 %v1631, 2147483648
  %v1683 = vmul.f32 %v1682, 1.442695
  %v1684 = vpow.pop %v1683
  %v1685 = vadd.f32 %v1684, 1.0
  %v1686 = vrcp.pop %v1685
  %v1687 = vmul.f32 1.0, %v1686
  %v1688 = vtanh.pop %v1670
  %v1689 = vxor.u32 %v1672, 2147483648
  %v1690 = vmul.f32 %v1689, 1.442695
  %v1691 = vpow.pop %v1690
  %v1692 = vadd.f32 %v1691, 1.0
  %v1693 = vrcp.pop %v1692
  %v1694 = vmul.f32 1.0, %v1693
  %v1695 = vmul.f32 %v1687, 0.0
  %v1696 = vmul.f32 %v1681, %v1688
  %v1697 = vadd.f32 %v1695, %v1696
  %v1698 = vtanh.pop %v1697
  %v1699 = vmul.f32 %v1694, %v1698
  %v1700 = vpack.c.bf16 %v1273, %v1273
  %1701 = vmatprep.subr.bf16.mxu0 %v990
  %1702 = vmatpush1.bf16.msra.mxu0 %v989
  %1703 = vmatprep.subr.bf16.mxu0 %v994
  %1704 = vmatpush1.bf16.msra.mxu0 %v993
  %1705 = vmatprep.subr.bf16.mxu0 %v998
  %1706 = vmatpush1.bf16.msra.mxu0 %v997
  %1707 = vmatprep.subr.bf16.mxu0 %v1002
  %1708 = vmatpush1.bf16.msra.mxu0 %v1001
  %1709 = vmatprep.subr.bf16.mxu0 %v1006
  %1710 = vmatpush1.bf16.msra.mxu0 %v1005
  %1711 = vmatprep.subr.bf16.mxu0 %v1010
  %1712 = vmatpush1.bf16.msra.mxu0 %v1009
  %1713 = vmatprep.subr.bf16.mxu0 %v1014
  %1714 = vmatpush1.bf16.msra.mxu0 %v1013
  %1715 = vmatprep.subr.bf16.mxu0 %v1018
  %1716 = vmatpush1.bf16.msra.mxu0 %v1017
  %1717 = vmatprep.subr.bf16.mxu0 0
  %1718 = vmatpush1.bf16.msra.mxu0 0
  %1719 = vmatprep.subr.bf16.mxu0 0
  %1720 = vmatpush1.bf16.msra.mxu0 0
  %1721 = vmatprep.subr.bf16.mxu0 0
  %1722 = vmatpush1.bf16.msra.mxu0 0
  %1723 = vmatprep.subr.bf16.mxu0 0
  %1724 = vmatpush1.bf16.msra.mxu0 0
  %1725 = vmatprep.subr.bf16.mxu0 0
  %1726 = vmatpush1.bf16.msra.mxu0 0
  %1727 = vmatprep.subr.bf16.mxu0 0
  %1728 = vmatpush1.bf16.msra.mxu0 0
  %1729 = vmatprep.subr.bf16.mxu0 0
  %1730 = vmatpush1.bf16.msra.mxu0 0
  %1731 = vmatprep.subr.bf16.mxu0 0
  %1732 = vmatpush1.bf16.msra.mxu0 0
  %1733 = vmatprep.mubr.bf16.mxu0 0
  %1734 = vmatmul.mubr.bf16.gmra.mrb[0].mxu0 %v1700
  %v1735 = vpop.f32.mrb[0].mxu0
  %v1736 = vadd.f32 0.0, %v1735
  %v1737 = vpop.f32.mrb[0].mxu0
  %v1738 = vadd.f32 0.0, %v1737
  %v1739 = vpop.f32.mrb[0].mxu0
  %v1740 = vpop.f32.mrb[0].mxu0
  %1741 = vdwg.mxu0
  %1742 = vmatprep.subr.bf16.mxu0 %v992
  %1743 = vmatpush1.bf16.msra.mxu0 %v991
  %1744 = vmatprep.subr.bf16.mxu0 %v996
  %1745 = vmatpush1.bf16.msra.mxu0 %v995
  %1746 = vmatprep.subr.bf16.mxu0 %v1000
  %1747 = vmatpush1.bf16.msra.mxu0 %v999
  %1748 = vmatprep.subr.bf16.mxu0 %v1004
  %1749 = vmatpush1.bf16.msra.mxu0 %v1003
  %1750 = vmatprep.subr.bf16.mxu0 %v1008
  %1751 = vmatpush1.bf16.msra.mxu0 %v1007
  %1752 = vmatprep.subr.bf16.mxu0 %v1012
  %1753 = vmatpush1.bf16.msra.mxu0 %v1011
  %1754 = vmatprep.subr.bf16.mxu0 %v1016
  %1755 = vmatpush1.bf16.msra.mxu0 %v1015
  %1756 = vmatprep.subr.bf16.mxu0 %v1020
  %1757 = vmatpush1.bf16.msra.mxu0 %v1019
  %1758 = vmatprep.subr.bf16.mxu0 0
  %1759 = vmatpush1.bf16.msra.mxu0 0
  %1760 = vmatprep.subr.bf16.mxu0 0
  %1761 = vmatpush1.bf16.msra.mxu0 0
  %1762 = vmatprep.subr.bf16.mxu0 0
  %1763 = vmatpush1.bf16.msra.mxu0 0
  %1764 = vmatprep.subr.bf16.mxu0 0
  %1765 = vmatpush1.bf16.msra.mxu0 0
  %1766 = vmatprep.subr.bf16.mxu0 0
  %1767 = vmatpush1.bf16.msra.mxu0 0
  %1768 = vmatprep.subr.bf16.mxu0 0
  %1769 = vmatpush1.bf16.msra.mxu0 0
  %1770 = vmatprep.subr.bf16.mxu0 0
  %1771 = vmatpush1.bf16.msra.mxu0 0
  %1772 = vmatprep.subr.bf16.mxu0 0
  %1773 = vmatpush1.bf16.msra.mxu0 0
  %1774 = vmatprep.mubr.bf16.mxu0 0
  %1775 = vmatmul.mubr.bf16.gmra.mrb[0].mxu0 %v1700
  %v1776 = vpop.f32.mrb[0].mxu0
  %v1777 = vadd.f32 0.0, %v1776
  %v1778 = vpop.f32.mrb[0].mxu0
  %v1779 = vadd.f32 0.0, %v1778
  %v1780 = vpop.f32.mrb[0].mxu0
  %v1781 = vpop.f32.mrb[0].mxu0
  %1782 = vdwg.mxu0
  %v1783 = vadd.f32 %v421, %v1736
  %v1784 = vadd.f32 %v423, %v1738
  %v1785 = vadd.f32 %v462, %v1777
  %v1786 = vadd.f32 %v464, %v1779
  %v1787 = vxor.u32 %v1783, 2147483648
  %v1788 = vmul.f32 %v1787, 1.442695
  %v1789 = vpow.pop %v1788
  %v1790 = vadd.f32 %v1789, 1.0
  %v1791 = vrcp.pop %v1790
  %v1792 = vmul.f32 1.0, %v1791
  %v1793 = vxor.u32 %v1784, 2147483648
  %v1794 = vmul.f32 %v1793, 1.442695
  %v1795 = vpow.pop %v1794
  %v1796 = vadd.f32 %v1795, 1.0
  %v1797 = vrcp.pop %v1796
  %v1798 = vmul.f32 1.0, %v1797
  %v1799 = vtanh.pop %v1785
  %v1800 = vxor.u32 %v1786, 2147483648
  %v1801 = vmul.f32 %v1800, 1.442695
  %v1802 = vpow.pop %v1801
  %v1803 = vadd.f32 %v1802, 1.0
  %v1804 = vrcp.pop %v1803
  %v1805 = vmul.f32 1.0, %v1804
  %v1806 = vmul.f32 %v1798, %v1271
  %v1807 = vmul.f32 %v1792, %v1799
  %v1808 = vadd.f32 %v1806, %v1807
  %v1809 = vtanh.pop %v1808
  %v1810 = vmul.f32 %v1805, %v1809
  %v1811 = vpack.c.bf16 %v1699, %v1699
  %1812 = vmatprep.subr.bf16.mxu0 %v1467
  %1813 = vmatpush1.bf16.msra.mxu0 %v1466
  %1814 = vmatprep.subr.bf16.mxu0 %v1471
  %1815 = vmatpush1.bf16.msra.mxu0 %v1470
  %1816 = vmatprep.subr.bf16.mxu0 %v1475
  %1817 = vmatpush1.bf16.msra.mxu0 %v1474
  %1818 = vmatprep.subr.bf16.mxu0 %v1479
  %1819 = vmatpush1.bf16.msra.mxu0 %v1478
  %1820 = vmatprep.subr.bf16.mxu0 %v1483
  %1821 = vmatpush1.bf16.msra.mxu0 %v1482
  %1822 = vmatprep.subr.bf16.mxu0 %v1487
  %1823 = vmatpush1.bf16.msra.mxu0 %v1486
  %1824 = vmatprep.subr.bf16.mxu0 %v1491
  %1825 = vmatpush1.bf16.msra.mxu0 %v1490
  %1826 = vmatprep.subr.bf16.mxu0 %v1495
  %1827 = vmatpush1.bf16.msra.mxu0 %v1494
  %1828 = vmatprep.subr.bf16.mxu0 %v1499
  %1829 = vmatpush1.bf16.msra.mxu0 %v1498
  %1830 = vmatprep.subr.bf16.mxu0 %v1503
  %1831 = vmatpush1.bf16.msra.mxu0 %v1502
  %1832 = vmatprep.subr.bf16.mxu0 %v1507
  %1833 = vmatpush1.bf16.msra.mxu0 %v1506
  %1834 = vmatprep.subr.bf16.mxu0 %v1511
  %1835 = vmatpush1.bf16.msra.mxu0 %v1510
  %1836 = vmatprep.subr.bf16.mxu0 %v1515
  %1837 = vmatpush1.bf16.msra.mxu0 %v1514
  %1838 = vmatprep.subr.bf16.mxu0 %v1519
  %1839 = vmatpush1.bf16.msra.mxu0 %v1518
  %1840 = vmatprep.subr.bf16.mxu0 %v1523
  %1841 = vmatpush1.bf16.msra.mxu0 %v1522
  %1842 = vmatprep.subr.bf16.mxu0 %v1527
  %1843 = vmatpush1.bf16.msra.mxu0 %v1526
  %1844 = vmatprep.mubr.bf16.mxu0 %v1811
  %1845 = vmatmul.mubr.bf16.gmra.mrb[0].mxu0 %v1700
  %v1846 = vpop.f32.mrb[0].mxu0
  %v1847 = vadd.f32 %v148, %v1846
  %v1848 = vpop.f32.mrb[0].mxu0
  %v1849 = vadd.f32 %v152, %v1848
  %v1850 = vpop.f32.mrb[0].mxu0
  %v1851 = vpop.f32.mrb[0].mxu0
  %1852 = vdwg.mxu0
  %1853 = vmatprep.subr.bf16.mxu0 %v1469
  %1854 = vmatpush1.bf16.msra.mxu0 %v1468
  %1855 = vmatprep.subr.bf16.mxu0 %v1473
  %1856 = vmatpush1.bf16.msra.mxu0 %v1472
  %1857 = vmatprep.subr.bf16.mxu0 %v1477
  %1858 = vmatpush1.bf16.msra.mxu0 %v1476
  %1859 = vmatprep.subr.bf16.mxu0 %v1481
  %1860 = vmatpush1.bf16.msra.mxu0 %v1480
  %1861 = vmatprep.subr.bf16.mxu0 %v1485
  %1862 = vmatpush1.bf16.msra.mxu0 %v1484
  %1863 = vmatprep.subr.bf16.mxu0 %v1489
  %1864 = vmatpush1.bf16.msra.mxu0 %v1488
  %1865 = vmatprep.subr.bf16.mxu0 %v1493
  %1866 = vmatpush1.bf16.msra.mxu0 %v1492
  %1867 = vmatprep.subr.bf16.mxu0 %v1497
  %1868 = vmatpush1.bf16.msra.mxu0 %v1496
  %1869 = vmatprep.subr.bf16.mxu0 %v1501
  %1870 = vmatpush1.bf16.msra.mxu0 %v1500
  %1871 = vmatprep.subr.bf16.mxu0 %v1505
  %1872 = vmatpush1.bf16.msra.mxu0 %v1504
  %1873 = vmatprep.subr.bf16.mxu0 %v1509
  %1874 = vmatpush1.bf16.msra.mxu0 %v1508
  %1875 = vmatprep.subr.bf16.mxu0 %v1513
  %1876 = vmatpush1.bf16.msra.mxu0 %v1512
  %1877 = vmatprep.subr.bf16.mxu0 %v1517
  %1878 = vmatpush1.bf16.msra.mxu0 %v1516
  %1879 = vmatprep.subr.bf16.mxu0 %v1521
  %1880 = vmatpush1.bf16.msra.mxu0 %v1520
  %1881 = vmatprep.subr.bf16.mxu0 %v1525
  %1882 = vmatpush1.bf16.msra.mxu0 %v1524
  %1883 = vmatprep.subr.bf16.mxu0 %v1529
  %1884 = vmatpush1.bf16.msra.mxu0 %v1528
  %1885 = vmatprep.mubr.bf16.mxu0 %v1811
  %1886 = vmatmul.mubr.bf16.gmra.mrb[0].mxu0 %v1700
  %v1887 = vpop.f32.mrb[0].mxu0
  %v1888 = vadd.f32 %v156, %v1887
  %v1889 = vpop.f32.mrb[0].mxu0
  %v1890 = vadd.f32 %v160, %v1889
  %v1891 = vpop.f32.mrb[0].mxu0
  %v1892 = vpop.f32.mrb[0].mxu0
  %1893 = vdwg.mxu0
  %v1894 = vxor.u32 %v1847, 2147483648
  %v1895 = vmul.f32 %v1894, 1.442695
  %v1896 = vpow.pop %v1895
  %v1897 = vadd.f32 %v1896, 1.0
  %v1898 = vrcp.pop %v1897
  %v1899 = vmul.f32 1.0, %v1898
  %v1900 = vxor.u32 %v1849, 2147483648
  %v1901 = vmul.f32 %v1900, 1.442695
  %v1902 = vpow.pop %v1901
  %v1903 = vadd.f32 %v1902, 1.0
  %v1904 = vrcp.pop %v1903
  %v1905 = vmul.f32 1.0, %v1904
  %v1906 = vtanh.pop %v1888
  %v1907 = vxor.u32 %v1890, 2147483648
  %v1908 = vmul.f32 %v1907, 1.442695
  %v1909 = vpow.pop %v1908
  %v1910 = vadd.f32 %v1909, 1.0
  %v1911 = vrcp.pop %v1910
  %v1912 = vmul.f32 1.0, %v1911
  %v1913 = vmul.f32 %v1905, %v1697
  %v1914 = vmul.f32 %v1899, %v1906
  %v1915 = vadd.f32 %v1913, %v1914
  %v1916 = vtanh.pop %v1915
  %v1917 = vmul.f32 %v1912, %v1916
  %v1918 = vpack.c.bf16 %v1810, %v1810
  %1919 = vmatprep.subr.bf16.mxu0 %v990
  %1920 = vmatpush1.bf16.msra.mxu0 %v989
  %1921 = vmatprep.subr.bf16.mxu0 %v994
  %1922 = vmatpush1.bf16.msra.mxu0 %v993
  %1923 = vmatprep.subr.bf16.mxu0 %v998
  %1924 = vmatpush1.bf16.msra.mxu0 %v997
  %1925 = vmatprep.subr.bf16.mxu0 %v1002
  %1926 = vmatpush1.bf16.msra.mxu0 %v1001
  %1927 = vmatprep.subr.bf16.mxu0 %v1006
  %1928 = vmatpush1.bf16.msra.mxu0 %v1005
  %1929 = vmatprep.subr.bf16.mxu0 %v1010
  %1930 = vmatpush1.bf16.msra.mxu0 %v1009
  %1931 = vmatprep.subr.bf16.mxu0 %v1014
  %1932 = vmatpush1.bf16.msra.mxu0 %v1013
  %1933 = vmatprep.subr.bf16.mxu0 %v1018
  %1934 = vmatpush1.bf16.msra.mxu0 %v1017
  %1935 = vmatprep.subr.bf16.mxu0 0
  %1936 = vmatpush1.bf16.msra.mxu0 0
  %1937 = vmatprep.subr.bf16.mxu0 0
  %1938 = vmatpush1.bf16.msra.mxu0 0
  %1939 = vmatprep.subr.bf16.mxu0 0
  %1940 = vmatpush1.bf16.msra.mxu0 0
  %1941 = vmatprep.subr.bf16.mxu0 0
  %1942 = vmatpush1.bf16.msra.mxu0 0
  %1943 = vmatprep.subr.bf16.mxu0 0
  %1944 = vmatpush1.bf16.msra.mxu0 0
  %1945 = vmatprep.subr.bf16.mxu0 0
  %1946 = vmatpush1.bf16.msra.mxu0 0
  %1947 = vmatprep.subr.bf16.mxu0 0
  %1948 = vmatpush1.bf16.msra.mxu0 0
  %1949 = vmatprep.subr.bf16.mxu0 0
  %1950 = vmatpush1.bf16.msra.mxu0 0
  %1951 = vmatprep.mubr.bf16.mxu0 0
  %1952 = vmatmul.mubr.bf16.gmra.mrb[0].mxu0 %v1918
  %v1953 = vpop.f32.mrb[0].mxu0
  %v1954 = vadd.f32 0.0, %v1953
  %v1955 = vpop.f32.mrb[0].mxu0
  %v1956 = vadd.f32 0.0, %v1955
  %v1957 = vpop.f32.mrb[0].mxu0
  %v1958 = vpop.f32.mrb[0].mxu0
  %1959 = vdwg.mxu0
  %1960 = vmatprep.subr.bf16.mxu0 %v992
  %1961 = vmatpush1.bf16.msra.mxu0 %v991
  %1962 = vmatprep.subr.bf16.mxu0 %v996
  %1963 = vmatpush1.bf16.msra.mxu0 %v995
  %1964 = vmatprep.subr.bf16.mxu0 %v1000
  %1965 = vmatpush1.bf16.msra.mxu0 %v999
  %1966 = vmatprep.subr.bf16.mxu0 %v1004
  %1967 = vmatpush1.bf16.msra.mxu0 %v1003
  %1968 = vmatprep.subr.bf16.mxu0 %v1008
  %1969 = vmatpush1.bf16.msra.mxu0 %v1007
  %1970 = vmatprep.subr.bf16.mxu0 %v1012
  %1971 = vmatpush1.bf16.msra.mxu0 %v1011
  %1972 = vmatprep.subr.bf16.mxu0 %v1016
  %1973 = vmatpush1.bf16.msra.mxu0 %v1015
  %1974 = vmatprep.subr.bf16.mxu0 %v1020
  %1975 = vmatpush1.bf16.msra.mxu0 %v1019
  %1976 = vmatprep.subr.bf16.mxu0 0
  %1977 = vmatpush1.bf16.msra.mxu0 0
  %1978 = vmatprep.subr.bf16.mxu0 0
  %1979 = vmatpush1.bf16.msra.mxu0 0
  %1980 = vmatprep.subr.bf16.mxu0 0
  %1981 = vmatpush1.bf16.msra.mxu0 0
  %1982 = vmatprep.subr.bf16.mxu0 0
  %1983 = vmatpush1.bf16.msra.mxu0 0
  %1984 = vmatprep.subr.bf16.mxu0 0
  %1985 = vmatpush1.bf16.msra.mxu0 0
  %1986 = vmatprep.subr.bf16.mxu0 0
  %1987 = vmatpush1.bf16.msra.mxu0 0
  %1988 = vmatprep.subr.bf16.mxu0 0
  %1989 = vmatpush1.bf16.msra.mxu0 0
  %1990 = vmatprep.subr.bf16.mxu0 0
  %1991 = vmatpush1.bf16.msra.mxu0 0
  %1992 = vmatprep.mubr.bf16.mxu0 0
  %1993 = vmatmul.mubr.bf16.gmra.mrb[0].mxu0 %v1918
  %v1994 = vpop.f32.mrb[0].mxu0
  %v1995 = vadd.f32 0.0, %v1994
  %v1996 = vpop.f32.mrb[0].mxu0
  %v1997 = vadd.f32 0.0, %v1996
  %v1998 = vpop.f32.mrb[0].mxu0
  %v1999 = vpop.f32.mrb[0].mxu0
  %2000 = vdwg.mxu0
  %v2001 = vadd.f32 %v506, %v1954
  %v2002 = vadd.f32 %v508, %v1956
  %v2003 = vadd.f32 %v547, %v1995
  %v2004 = vadd.f32 %v549, %v1997
  %v2005 = vxor.u32 %v2001, 2147483648
  %v2006 = vmul.f32 %v2005, 1.442695
  %v2007 = vpow.pop %v2006
  %v2008 = vadd.f32 %v2007, 1.0
  %v2009 = vrcp.pop %v2008
  %v2010 = vmul.f32 1.0, %v2009
  %v2011 = vxor.u32 %v2002, 2147483648
  %v2012 = vmul.f32 %v2011, 1.442695
  %v2013 = vpow.pop %v2012
  %v2014 = vadd.f32 %v2013, 1.0
  %v2015 = vrcp.pop %v2014
  %v2016 = vmul.f32 1.0, %v2015
  %v2017 = vtanh.pop %v2003
  %v2018 = vxor.u32 %v2004, 2147483648
  %v2019 = vmul.f32 %v2018, 1.442695
  %v2020 = vpow.pop %v2019
  %v2021 = vadd.f32 %v2020, 1.0
  %v2022 = vrcp.pop %v2021
  %v2023 = vmul.f32 1.0, %v2022
  %v2024 = vmul.f32 %v2016, %v1808
  %v2025 = vmul.f32 %v2010, %v2017
  %v2026 = vadd.f32 %v2024, %v2025
  %v2027 = vtanh.pop %v2026
  %v2028 = vmul.f32 %v2023, %v2027
  %v2029 = vpack.c.bf16 %v1917, %v1917
  %2030 = vmatprep.subr.bf16.mxu0 %v1467
  %2031 = vmatpush1.bf16.msra.mxu0 %v1466
  %2032 = vmatprep.subr.bf16.mxu0 %v1471
  %2033 = vmatpush1.bf16.msra.mxu0 %v1470
  %2034 = vmatprep.subr.bf16.mxu0 %v1475
  %2035 = vmatpush1.bf16.msra.mxu0 %v1474
  %2036 = vmatprep.subr.bf16.mxu0 %v1479
  %2037 = vmatpush1.bf16.msra.mxu0 %v1478
  %2038 = vmatprep.subr.bf16.mxu0 %v1483
  %2039 = vmatpush1.bf16.msra.mxu0 %v1482
  %2040 = vmatprep.subr.bf16.mxu0 %v1487
  %2041 = vmatpush1.bf16.msra.mxu0 %v1486
  %2042 = vmatprep.subr.bf16.mxu0 %v1491
  %2043 = vmatpush1.bf16.msra.mxu0 %v1490
  %2044 = vmatprep.subr.bf16.mxu0 %v1495
  %2045 = vmatpush1.bf16.msra.mxu0 %v1494
  %2046 = vmatprep.subr.bf16.mxu0 %v1499
  %2047 = vmatpush1.bf16.msra.mxu0 %v1498
  %2048 = vmatprep.subr.bf16.mxu0 %v1503
  %2049 = vmatpush1.bf16.msra.mxu0 %v1502
  %2050 = vmatprep.subr.bf16.mxu0 %v1507
  %2051 = vmatpush1.bf16.msra.mxu0 %v1506
  %2052 = vmatprep.subr.bf16.mxu0 %v1511
  %2053 = vmatpush1.bf16.msra.mxu0 %v1510
  %2054 = vmatprep.subr.bf16.mxu0 %v1515
  %2055 = vmatpush1.bf16.msra.mxu0 %v1514
  %2056 = vmatprep.subr.bf16.mxu0 %v1519
  %2057 = vmatpush1.bf16.msra.mxu0 %v1518
  %2058 = vmatprep.subr.bf16.mxu0 %v1523
  %2059 = vmatpush1.bf16.msra.mxu0 %v1522
  %2060 = vmatprep.subr.bf16.mxu0 %v1527
  %2061 = vmatpush1.bf16.msra.mxu0 %v1526
  %2062 = vmatprep.mubr.bf16.mxu0 %v2029
  %2063 = vmatmul.mubr.bf16.gmra.mrb[0].mxu0 %v1918
  %v2064 = vpop.f32.mrb[0].mxu0
  %v2065 = vadd.f32 %v148, %v2064
  %v2066 = vpop.f32.mrb[0].mxu0
  %v2067 = vadd.f32 %v152, %v2066
  %v2068 = vpop.f32.mrb[0].mxu0
  %v2069 = vpop.f32.mrb[0].mxu0
  %2070 = vdwg.mxu0
  %2071 = vmatprep.subr.bf16.mxu0 %v1469
  %2072 = vmatpush1.bf16.msra.mxu0 %v1468
  %2073 = vmatprep.subr.bf16.mxu0 %v1473
  %2074 = vmatpush1.bf16.msra.mxu0 %v1472
  %2075 = vmatprep.subr.bf16.mxu0 %v1477
  %2076 = vmatpush1.bf16.msra.mxu0 %v1476
  %2077 = vmatprep.subr.bf16.mxu0 %v1481
  %2078 = vmatpush1.bf16.msra.mxu0 %v1480
  %2079 = vmatprep.subr.bf16.mxu0 %v1485
  %2080 = vmatpush1.bf16.msra.mxu0 %v1484
  %2081 = vmatprep.subr.bf16.mxu0 %v1489
  %2082 = vmatpush1.bf16.msra.mxu0 %v1488
  %2083 = vmatprep.subr.bf16.mxu0 %v1493
  %2084 = vmatpush1.bf16.msra.mxu0 %v1492
  %2085 = vmatprep.subr.bf16.mxu0 %v1497
  %2086 = vmatpush1.bf16.msra.mxu0 %v1496
  %2087 = vmatprep.subr.bf16.mxu0 %v1501
  %2088 = vmatpush1.bf16.msra.mxu0 %v1500
  %2089 = vmatprep.subr.bf16.mxu0 %v1505
  %2090 = vmatpush1.bf16.msra.mxu0 %v1504
  %2091 = vmatprep.subr.bf16.mxu0 %v1509
  %2092 = vmatpush1.bf16.msra.mxu0 %v1508
  %2093 = vmatprep.subr.bf16.mxu0 %v1513
  %2094 = vmatpush1.bf16.msra.mxu0 %v1512
  %2095 = vmatprep.subr.bf16.mxu0 %v1517
  %2096 = vmatpush1.bf16.msra.mxu0 %v1516
  %2097 = vmatprep.subr.bf16.mxu0 %v1521
  %2098 = vmatpush1.bf16.msra.mxu0 %v1520
  %2099 = vmatprep.subr.bf16.mxu0 %v1525
  %2100 = vmatpush1.bf16.msra.mxu0 %v1524
  %2101 = vmatprep.subr.bf16.mxu0 %v1529
  %2102 = vmatpush1.bf16.msra.mxu0 %v1528
  %2103 = vmatprep.mubr.bf16.mxu0 %v2029
  %2104 = vmatmul.mubr.bf16.gmra.mrb[0].mxu0 %v1918
  %v2105 = vpop.f32.mrb[0].mxu0
  %v2106 = vadd.f32 %v156, %v2105
  %v2107 = vpop.f32.mrb[0].mxu0
  %v2108 = vadd.f32 %v160, %v2107
  %v2109 = vpop.f32.mrb[0].mxu0
  %v2110 = vpop.f32.mrb[0].mxu0
  %2111 = vdwg.mxu0
  %v2112 = vxor.u32 %v2065, 2147483648
  %v2113 = vmul.f32 %v2112, 1.442695
  %v2114 = vpow.pop %v2113
  %v2115 = vadd.f32 %v2114, 1.0
  %v2116 = vrcp.pop %v2115
  %v2117 = vmul.f32 1.0, %v2116
  %v2118 = vxor.u32 %v2067, 2147483648
  %v2119 = vmul.f32 %v2118, 1.442695
  %v2120 = vpow.pop %v2119
  %v2121 = vadd.f32 %v2120, 1.0
  %v2122 = vrcp.pop %v2121
  %v2123 = vmul.f32 1.0, %v2122
  %v2124 = vtanh.pop %v2106
  %v2125 = vxor.u32 %v2108, 2147483648
  %v2126 = vmul.f32 %v2125, 1.442695
  %v2127 = vpow.pop %v2126
  %v2128 = vadd.f32 %v2127, 1.0
  %v2129 = vrcp.pop %v2128
  %v2130 = vmul.f32 1.0, %v2129
  %v2131 = vmul.f32 %v2123, %v1915
  %v2132 = vmul.f32 %v2117, %v2124
  %v2133 = vadd.f32 %v2131, %v2132
  %v2134 = vtanh.pop %v2133
  %v2135 = vmul.f32 %v2130, %v2134
  %v2136 = vpack.c.bf16 %v2028, %v2028
  %2137 = vmatprep.subr.bf16.mxu0 %v990
  %2138 = vmatpush1.bf16.msra.mxu0 %v989
  %2139 = vmatprep.subr.bf16.mxu0 %v994
  %2140 = vmatpush1.bf16.msra.mxu0 %v993
  %2141 = vmatprep.subr.bf16.mxu0 %v998
  %2142 = vmatpush1.bf16.msra.mxu0 %v997
  %2143 = vmatprep.subr.bf16.mxu0 %v1002
  %2144 = vmatpush1.bf16.msra.mxu0 %v1001
  %2145 = vmatprep.subr.bf16.mxu0 %v1006
  %2146 = vmatpush1.bf16.msra.mxu0 %v1005
  %2147 = vmatprep.subr.bf16.mxu0 %v1010
  %2148 = vmatpush1.bf16.msra.mxu0 %v1009
  %2149 = vmatprep.subr.bf16.mxu0 %v1014
  %2150 = vmatpush1.bf16.msra.mxu0 %v1013
  %2151 = vmatprep.subr.bf16.mxu0 %v1018
  %2152 = vmatpush1.bf16.msra.mxu0 %v1017
  %2153 = vmatprep.subr.bf16.mxu0 0
  %2154 = vmatpush1.bf16.msra.mxu0 0
  %2155 = vmatprep.subr.bf16.mxu0 0
  %2156 = vmatpush1.bf16.msra.mxu0 0
  %2157 = vmatprep.subr.bf16.mxu0 0
  %2158 = vmatpush1.bf16.msra.mxu0 0
  %2159 = vmatprep.subr.bf16.mxu0 0
  %2160 = vmatpush1.bf16.msra.mxu0 0
  %2161 = vmatprep.subr.bf16.mxu0 0
  %2162 = vmatpush1.bf16.msra.mxu0 0
  %2163 = vmatprep.subr.bf16.mxu0 0
  %2164 = vmatpush1.bf16.msra.mxu0 0
  %2165 = vmatprep.subr.bf16.mxu0 0
  %2166 = vmatpush1.bf16.msra.mxu0 0
  %2167 = vmatprep.subr.bf16.mxu0 0
  %2168 = vmatpush1.bf16.msra.mxu0 0
  %2169 = vmatprep.mubr.bf16.mxu0 0
  %2170 = vmatmul.mubr.bf16.gmra.mrb[0].mxu0 %v2136
  %v2171 = vpop.f32.mrb[0].mxu0
  %v2172 = vadd.f32 0.0, %v2171
  %v2173 = vpop.f32.mrb[0].mxu0
  %v2174 = vadd.f32 0.0, %v2173
  %v2175 = vpop.f32.mrb[0].mxu0
  %v2176 = vpop.f32.mrb[0].mxu0
  %2177 = vdwg.mxu0
  %2178 = vmatprep.subr.bf16.mxu0 %v992
  %2179 = vmatpush1.bf16.msra.mxu0 %v991
  %2180 = vmatprep.subr.bf16.mxu0 %v996
  %2181 = vmatpush1.bf16.msra.mxu0 %v995
  %2182 = vmatprep.subr.bf16.mxu0 %v1000
  %2183 = vmatpush1.bf16.msra.mxu0 %v999
  %2184 = vmatprep.subr.bf16.mxu0 %v1004
  %2185 = vmatpush1.bf16.msra.mxu0 %v1003
  %2186 = vmatprep.subr.bf16.mxu0 %v1008
  %2187 = vmatpush1.bf16.msra.mxu0 %v1007
  %2188 = vmatprep.subr.bf16.mxu0 %v1012
  %2189 = vmatpush1.bf16.msra.mxu0 %v1011
  %2190 = vmatprep.subr.bf16.mxu0 %v1016
  %2191 = vmatpush1.bf16.msra.mxu0 %v1015
  %2192 = vmatprep.subr.bf16.mxu0 %v1020
  %2193 = vmatpush1.bf16.msra.mxu0 %v1019
  %2194 = vmatprep.subr.bf16.mxu0 0
  %2195 = vmatpush1.bf16.msra.mxu0 0
  %2196 = vmatprep.subr.bf16.mxu0 0
  %2197 = vmatpush1.bf16.msra.mxu0 0
  %2198 = vmatprep.subr.bf16.mxu0 0
  %2199 = vmatpush1.bf16.msra.mxu0 0
  %2200 = vmatprep.subr.bf16.mxu0 0
  %2201 = vmatpush1.bf16.msra.mxu0 0
  %2202 = vmatprep.subr.bf16.mxu0 0
  %2203 = vmatpush1.bf16.msra.mxu0 0
  %2204 = vmatprep.subr.bf16.mxu0 0
  %2205 = vmatpush1.bf16.msra.mxu0 0
  %2206 = vmatprep.subr.bf16.mxu0 0
  %2207 = vmatpush1.bf16.msra.mxu0 0
  %2208 = vmatprep.subr.bf16.mxu0 0
  %2209 = vmatpush1.bf16.msra.mxu0 0
  %2210 = vmatprep.mubr.bf16.mxu0 0
  %2211 = vmatmul.mubr.bf16.gmra.mrb[0].mxu0 %v2136
  %v2212 = vpop.f32.mrb[0].mxu0
  %v2213 = vadd.f32 0.0, %v2212
  %v2214 = vpop.f32.mrb[0].mxu0
  %v2215 = vadd.f32 0.0, %v2214
  %v2216 = vpop.f32.mrb[0].mxu0
  %v2217 = vpop.f32.mrb[0].mxu0
  %2218 = vdwg.mxu0
  %v2219 = vadd.f32 %v591, %v2172
  %v2220 = vadd.f32 %v593, %v2174
  %v2221 = vadd.f32 %v632, %v2213
  %v2222 = vadd.f32 %v634, %v2215
  %v2223 = vxor.u32 %v2219, 2147483648
  %v2224 = vmul.f32 %v2223, 1.442695
  %v2225 = vpow.pop %v2224
  %v2226 = vadd.f32 %v2225, 1.0
  %v2227 = vrcp.pop %v2226
  %v2228 = vmul.f32 1.0, %v2227
  %v2229 = vxor.u32 %v2220, 2147483648
  %v2230 = vmul.f32 %v2229, 1.442695
  %v2231 = vpow.pop %v2230
  %v2232 = vadd.f32 %v2231, 1.0
  %v2233 = vrcp.pop %v2232
  %v2234 = vmul.f32 1.0, %v2233
  %v2235 = vtanh.pop %v2221
  %v2236 = vxor.u32 %v2222, 2147483648
  %v2237 = vmul.f32 %v2236, 1.442695
  %v2238 = vpow.pop %v2237
  %v2239 = vadd.f32 %v2238, 1.0
  %v2240 = vrcp.pop %v2239
  %v2241 = vmul.f32 1.0, %v2240
  %v2242 = vmul.f32 %v2234, %v2026
  %v2243 = vmul.f32 %v2228, %v2235
  %v2244 = vadd.f32 %v2242, %v2243
  %v2245 = vtanh.pop %v2244
  %v2246 = vmul.f32 %v2241, %v2245
  %v2247 = vpack.c.bf16 %v2135, %v2135
  %2248 = vmatprep.subr.bf16.mxu0 %v1467
  %2249 = vmatpush1.bf16.msra.mxu0 %v1466
  %2250 = vmatprep.subr.bf16.mxu0 %v1471
  %2251 = vmatpush1.bf16.msra.mxu0 %v1470
  %2252 = vmatprep.subr.bf16.mxu0 %v1475
  %2253 = vmatpush1.bf16.msra.mxu0 %v1474
  %2254 = vmatprep.subr.bf16.mxu0 %v1479
  %2255 = vmatpush1.bf16.msra.mxu0 %v1478
  %2256 = vmatprep.subr.bf16.mxu0 %v1483
  %2257 = vmatpush1.bf16.msra.mxu0 %v1482
  %2258 = vmatprep.subr.bf16.mxu0 %v1487
  %2259 = vmatpush1.bf16.msra.mxu0 %v1486
  %2260 = vmatprep.subr.bf16.mxu0 %v1491
  %2261 = vmatpush1.bf16.msra.mxu0 %v1490
  %2262 = vmatprep.subr.bf16.mxu0 %v1495
  %2263 = vmatpush1.bf16.msra.mxu0 %v1494
  %2264 = vmatprep.subr.bf16.mxu0 %v1499
  %2265 = vmatpush1.bf16.msra.mxu0 %v1498
  %2266 = vmatprep.subr.bf16.mxu0 %v1503
  %2267 = vmatpush1.bf16.msra.mxu0 %v1502
  %2268 = vmatprep.subr.bf16.mxu0 %v1507
  %2269 = vmatpush1.bf16.msra.mxu0 %v1506
  %2270 = vmatprep.subr.bf16.mxu0 %v1511
  %2271 = vmatpush1.bf16.msra.mxu0 %v1510
  %2272 = vmatprep.subr.bf16.mxu0 %v1515
  %2273 = vmatpush1.bf16.msra.mxu0 %v1514
  %2274 = vmatprep.subr.bf16.mxu0 %v1519
  %2275 = vmatpush1.bf16.msra.mxu0 %v1518
  %2276 = vmatprep.subr.bf16.mxu0 %v1523
  %2277 = vmatpush1.bf16.msra.mxu0 %v1522
  %2278 = vmatprep.subr.bf16.mxu0 %v1527
  %2279 = vmatpush1.bf16.msra.mxu0 %v1526
  %2280 = vmatprep.mubr.bf16.mxu0 %v2247
  %2281 = vmatmul.mubr.bf16.gmra.mrb[0].mxu0 %v2136
  %v2282 = vpop.f32.mrb[0].mxu0
  %v2283 = vadd.f32 %v148, %v2282
  %v2284 = vpop.f32.mrb[0].mxu0
  %v2285 = vadd.f32 %v152, %v2284
  %v2286 = vpop.f32.mrb[0].mxu0
  %v2287 = vpop.f32.mrb[0].mxu0
  %2288 = vdwg.mxu0
  %2289 = vmatprep.subr.bf16.mxu0 %v1469
  %2290 = vmatpush1.bf16.msra.mxu0 %v1468
  %2291 = vmatprep.subr.bf16.mxu0 %v1473
  %2292 = vmatpush1.bf16.msra.mxu0 %v1472
  %2293 = vmatprep.subr.bf16.mxu0 %v1477
  %2294 = vmatpush1.bf16.msra.mxu0 %v1476
  %2295 = vmatprep.subr.bf16.mxu0 %v1481
  %2296 = vmatpush1.bf16.msra.mxu0 %v1480
  %2297 = vmatprep.subr.bf16.mxu0 %v1485
  %2298 = vmatpush1.bf16.msra.mxu0 %v1484
  %2299 = vmatprep.subr.bf16.mxu0 %v1489
  %2300 = vmatpush1.bf16.msra.mxu0 %v1488
  %2301 = vmatprep.subr.bf16.mxu0 %v1493
  %2302 = vmatpush1.bf16.msra.mxu0 %v1492
  %2303 = vmatprep.subr.bf16.mxu0 %v1497
  %2304 = vmatpush1.bf16.msra.mxu0 %v1496
  %2305 = vmatprep.subr.bf16.mxu0 %v1501
  %2306 = vmatpush1.bf16.msra.mxu0 %v1500
  %2307 = vmatprep.subr.bf16.mxu0 %v1505
  %2308 = vmatpush1.bf16.msra.mxu0 %v1504
  %2309 = vmatprep.subr.bf16.mxu0 %v1509
  %2310 = vmatpush1.bf16.msra.mxu0 %v1508
  %2311 = vmatprep.subr.bf16.mxu0 %v1513
  %2312 = vmatpush1.bf16.msra.mxu0 %v1512
  %2313 = vmatprep.subr.bf16.mxu0 %v1517
  %2314 = vmatpush1.bf16.msra.mxu0 %v1516
  %2315 = vmatprep.subr.bf16.mxu0 %v1521
  %2316 = vmatpush1.bf16.msra.mxu0 %v1520
  %2317 = vmatprep.subr.bf16.mxu0 %v1525
  %2318 = vmatpush1.bf16.msra.mxu0 %v1524
  %2319 = vmatprep.subr.bf16.mxu0 %v1529
  %2320 = vmatpush1.bf16.msra.mxu0 %v1528
  %2321 = vmatprep.mubr.bf16.mxu0 %v2247
  %2322 = vmatmul.mubr.bf16.gmra.mrb[0].mxu0 %v2136
  %v2323 = vpop.f32.mrb[0].mxu0
  %v2324 = vadd.f32 %v156, %v2323
  %v2325 = vpop.f32.mrb[0].mxu0
  %v2326 = vadd.f32 %v160, %v2325
  %v2327 = vpop.f32.mrb[0].mxu0
  %v2328 = vpop.f32.mrb[0].mxu0
  %2329 = vdwg.mxu0
  %v2330 = vxor.u32 %v2283, 2147483648
  %v2331 = vmul.f32 %v2330, 1.442695
  %v2332 = vpow.pop %v2331
  %v2333 = vadd.f32 %v2332, 1.0
  %v2334 = vrcp.pop %v2333
  %v2335 = vmul.f32 1.0, %v2334
  %v2336 = vxor.u32 %v2285, 2147483648
  %v2337 = vmul.f32 %v2336, 1.442695
  %v2338 = vpow.pop %v2337
  %v2339 = vadd.f32 %v2338, 1.0
  %v2340 = vrcp.pop %v2339
  %v2341 = vmul.f32 1.0, %v2340
  %v2342 = vtanh.pop %v2324
  %v2343 = vxor.u32 %v2326, 2147483648
  %v2344 = vmul.f32 %v2343, 1.442695
  %v2345 = vpow.pop %v2344
  %v2346 = vadd.f32 %v2345, 1.0
  %v2347 = vrcp.pop %v2346
  %v2348 = vmul.f32 1.0, %v2347
  %v2349 = vmul.f32 %v2341, %v2133
  %v2350 = vmul.f32 %v2335, %v2342
  %v2351 = vadd.f32 %v2349, %v2350
  %v2352 = vtanh.pop %v2351
  %v2353 = vmul.f32 %v2348, %v2352
  %v2354 = vpack.c.bf16 %v2246, %v2246
  %2355 = vmatprep.subr.bf16.mxu0 %v990
  %2356 = vmatpush1.bf16.msra.mxu0 %v989
  %2357 = vmatprep.subr.bf16.mxu0 %v994
  %2358 = vmatpush1.bf16.msra.mxu0 %v993
  %2359 = vmatprep.subr.bf16.mxu0 %v998
  %2360 = vmatpush1.bf16.msra.mxu0 %v997
  %2361 = vmatprep.subr.bf16.mxu0 %v1002
  %2362 = vmatpush1.bf16.msra.mxu0 %v1001
  %2363 = vmatprep.subr.bf16.mxu0 %v1006
  %2364 = vmatpush1.bf16.msra.mxu0 %v1005
  %2365 = vmatprep.subr.bf16.mxu0 %v1010
  %2366 = vmatpush1.bf16.msra.mxu0 %v1009
  %2367 = vmatprep.subr.bf16.mxu0 %v1014
  %2368 = vmatpush1.bf16.msra.mxu0 %v1013
  %2369 = vmatprep.subr.bf16.mxu0 %v1018
  %2370 = vmatpush1.bf16.msra.mxu0 %v1017
  %2371 = vmatprep.subr.bf16.mxu0 0
  %2372 = vmatpush1.bf16.msra.mxu0 0
  %2373 = vmatprep.subr.bf16.mxu0 0
  %2374 = vmatpush1.bf16.msra.mxu0 0
  %2375 = vmatprep.subr.bf16.mxu0 0
  %2376 = vmatpush1.bf16.msra.mxu0 0
  %2377 = vmatprep.subr.bf16.mxu0 0
  %2378 = vmatpush1.bf16.msra.mxu0 0
  %2379 = vmatprep.subr.bf16.mxu0 0
  %2380 = vmatpush1.bf16.msra.mxu0 0
  %2381 = vmatprep.subr.bf16.mxu0 0
  %2382 = vmatpush1.bf16.msra.mxu0 0
  %2383 = vmatprep.subr.bf16.mxu0 0
  %2384 = vmatpush1.bf16.msra.mxu0 0
  %2385 = vmatprep.subr.bf16.mxu0 0
  %2386 = vmatpush1.bf16.msra.mxu0 0
  %2387 = vmatprep.mubr.bf16.mxu0 0
  %2388 = vmatmul.mubr.bf16.gmra.mrb[0].mxu0 %v2354
  %v2389 = vpop.f32.mrb[0].mxu0
  %v2390 = vadd.f32 0.0, %v2389
  %v2391 = vpop.f32.mrb[0].mxu0
  %v2392 = vadd.f32 0.0, %v2391
  %v2393 = vpop.f32.mrb[0].mxu0
  %v2394 = vpop.f32.mrb[0].mxu0
  %2395 = vdwg.mxu0
  %2396 = vmatprep.subr.bf16.mxu0 %v992
  %2397 = vmatpush1.bf16.msra.mxu0 %v991
  %2398 = vmatprep.subr.bf16.mxu0 %v996
  %2399 = vmatpush1.bf16.msra.mxu0 %v995
  %2400 = vmatprep.subr.bf16.mxu0 %v1000
  %2401 = vmatpush1.bf16.msra.mxu0 %v999
  %2402 = vmatprep.subr.bf16.mxu0 %v1004
  %2403 = vmatpush1.bf16.msra.mxu0 %v1003
  %2404 = vmatprep.subr.bf16.mxu0 %v1008
  %2405 = vmatpush1.bf16.msra.mxu0 %v1007
  %2406 = vmatprep.subr.bf16.mxu0 %v1012
  %2407 = vmatpush1.bf16.msra.mxu0 %v1011
  %2408 = vmatprep.subr.bf16.mxu0 %v1016
  %2409 = vmatpush1.bf16.msra.mxu0 %v1015
  %2410 = vmatprep.subr.bf16.mxu0 %v1020
  %2411 = vmatpush1.bf16.msra.mxu0 %v1019
  %2412 = vmatprep.subr.bf16.mxu0 0
  %2413 = vmatpush1.bf16.msra.mxu0 0
  %2414 = vmatprep.subr.bf16.mxu0 0
  %2415 = vmatpush1.bf16.msra.mxu0 0
  %2416 = vmatprep.subr.bf16.mxu0 0
  %2417 = vmatpush1.bf16.msra.mxu0 0
  %2418 = vmatprep.subr.bf16.mxu0 0
  %2419 = vmatpush1.bf16.msra.mxu0 0
  %2420 = vmatprep.subr.bf16.mxu0 0
  %2421 = vmatpush1.bf16.msra.mxu0 0
  %2422 = vmatprep.subr.bf16.mxu0 0
  %2423 = vmatpush1.bf16.msra.mxu0 0
  %2424 = vmatprep.subr.bf16.mxu0 0
  %2425 = vmatpush1.bf16.msra.mxu0 0
  %2426 = vmatprep.subr.bf16.mxu0 0
  %2427 = vmatpush1.bf16.msra.mxu0 0
  %2428 = vmatprep.mubr.bf16.mxu0 0
  %2429 = vmatmul.mubr.bf16.gmra.mrb[0].mxu0 %v2354
  %v2430 = vpop.f32.mrb[0].mxu0
  %v2431 = vadd.f32 0.0, %v2430
  %v2432 = vpop.f32.mrb[0].mxu0
  %v2433 = vadd.f32 0.0, %v2432
  %v2434 = vpop.f32.mrb[0].mxu0
  %v2435 = vpop.f32.mrb[0].mxu0
  %2436 = vdwg.mxu0
  %v2437 = vadd.f32 %v676, %v2390
  %v2438 = vadd.f32 %v678, %v2392
  %v2439 = vadd.f32 %v717, %v2431
  %v2440 = vadd.f32 %v719, %v2433
  %v2441 = vxor.u32 %v2437, 2147483648
  %v2442 = vmul.f32 %v2441, 1.442695
  %v2443 = vpow.pop %v2442
  %v2444 = vadd.f32 %v2443, 1.0
  %v2445 = vrcp.pop %v2444
  %v2446 = vmul.f32 1.0, %v2445
  %v2447 = vxor.u32 %v2438, 2147483648
  %v2448 = vmul.f32 %v2447, 1.442695
  %v2449 = vpow.pop %v2448
  %v2450 = vadd.f32 %v2449, 1.0
  %v2451 = vrcp.pop %v2450
  %v2452 = vmul.f32 1.0, %v2451
  %v2453 = vtanh.pop %v2439
  %v2454 = vxor.u32 %v2440, 2147483648
  %v2455 = vmul.f32 %v2454, 1.442695
  %v2456 = vpow.pop %v2455
  %v2457 = vadd.f32 %v2456, 1.0
  %v2458 = vrcp.pop %v2457
  %v2459 = vmul.f32 1.0, %v2458
  %v2460 = vmul.f32 %v2452, %v2244
  %v2461 = vmul.f32 %v2446, %v2453
  %v2462 = vadd.f32 %v2460, %v2461
  %v2463 = vtanh.pop %v2462
  %v2464 = vmul.f32 %v2459, %v2463
  %v2465 = vpack.c.bf16 %v2353, %v2353
  %2466 = vmatprep.subr.bf16.mxu0 %v1467
  %2467 = vmatpush1.bf16.msra.mxu0 %v1466
  %2468 = vmatprep.subr.bf16.mxu0 %v1471
  %2469 = vmatpush1.bf16.msra.mxu0 %v1470
  %2470 = vmatprep.subr.bf16.mxu0 %v1475
  %2471 = vmatpush1.bf16.msra.mxu0 %v1474
  %2472 = vmatprep.subr.bf16.mxu0 %v1479
  %2473 = vmatpush1.bf16.msra.mxu0 %v1478
  %2474 = vmatprep.subr.bf16.mxu0 %v1483
  %2475 = vmatpush1.bf16.msra.mxu0 %v1482
  %2476 = vmatprep.subr.bf16.mxu0 %v1487
  %2477 = vmatpush1.bf16.msra.mxu0 %v1486
  %2478 = vmatprep.subr.bf16.mxu0 %v1491
  %2479 = vmatpush1.bf16.msra.mxu0 %v1490
  %2480 = vmatprep.subr.bf16.mxu0 %v1495
  %2481 = vmatpush1.bf16.msra.mxu0 %v1494
  %2482 = vmatprep.subr.bf16.mxu0 %v1499
  %2483 = vmatpush1.bf16.msra.mxu0 %v1498
  %2484 = vmatprep.subr.bf16.mxu0 %v1503
  %2485 = vmatpush1.bf16.msra.mxu0 %v1502
  %2486 = vmatprep.subr.bf16.mxu0 %v1507
  %2487 = vmatpush1.bf16.msra.mxu0 %v1506
  %2488 = vmatprep.subr.bf16.mxu0 %v1511
  %2489 = vmatpush1.bf16.msra.mxu0 %v1510
  %2490 = vmatprep.subr.bf16.mxu0 %v1515
  %2491 = vmatpush1.bf16.msra.mxu0 %v1514
  %2492 = vmatprep.subr.bf16.mxu0 %v1519
  %2493 = vmatpush1.bf16.msra.mxu0 %v1518
  %2494 = vmatprep.subr.bf16.mxu0 %v1523
  %2495 = vmatpush1.bf16.msra.mxu0 %v1522
  %2496 = vmatprep.subr.bf16.mxu0 %v1527
  %2497 = vmatpush1.bf16.msra.mxu0 %v1526
  %2498 = vmatprep.mubr.bf16.mxu0 %v2465
  %2499 = vmatmul.mubr.bf16.gmra.mrb[0].mxu0 %v2354
  %v2500 = vpop.f32.mrb[0].mxu0
  %v2501 = vadd.f32 %v148, %v2500
  %v2502 = vpop.f32.mrb[0].mxu0
  %v2503 = vadd.f32 %v152, %v2502
  %v2504 = vpop.f32.mrb[0].mxu0
  %v2505 = vpop.f32.mrb[0].mxu0
  %2506 = vdwg.mxu0
  %2507 = vmatprep.subr.bf16.mxu0 %v1469
  %2508 = vmatpush1.bf16.msra.mxu0 %v1468
  %2509 = vmatprep.subr.bf16.mxu0 %v1473
  %2510 = vmatpush1.bf16.msra.mxu0 %v1472
  %2511 = vmatprep.subr.bf16.mxu0 %v1477
  %2512 = vmatpush1.bf16.msra.mxu0 %v1476
  %2513 = vmatprep.subr.bf16.mxu0 %v1481
  %2514 = vmatpush1.bf16.msra.mxu0 %v1480
  %2515 = vmatprep.subr.bf16.mxu0 %v1485
  %2516 = vmatpush1.bf16.msra.mxu0 %v1484
  %2517 = vmatprep.subr.bf16.mxu0 %v1489
  %2518 = vmatpush1.bf16.msra.mxu0 %v1488
  %2519 = vmatprep.subr.bf16.mxu0 %v1493
  %2520 = vmatpush1.bf16.msra.mxu0 %v1492
  %2521 = vmatprep.subr.bf16.mxu0 %v1497
  %2522 = vmatpush1.bf16.msra.mxu0 %v1496
  %2523 = vmatprep.subr.bf16.mxu0 %v1501
  %2524 = vmatpush1.bf16.msra.mxu0 %v1500
  %2525 = vmatprep.subr.bf16.mxu0 %v1505
  %2526 = vmatpush1.bf16.msra.mxu0 %v1504
  %2527 = vmatprep.subr.bf16.mxu0 %v1509
  %2528 = vmatpush1.bf16.msra.mxu0 %v1508
  %2529 = vmatprep.subr.bf16.mxu0 %v1513
  %2530 = vmatpush1.bf16.msra.mxu0 %v1512
  %2531 = vmatprep.subr.bf16.mxu0 %v1517
  %2532 = vmatpush1.bf16.msra.mxu0 %v1516
  %2533 = vmatprep.subr.bf16.mxu0 %v1521
  %2534 = vmatpush1.bf16.msra.mxu0 %v1520
  %2535 = vmatprep.subr.bf16.mxu0 %v1525
  %2536 = vmatpush1.bf16.msra.mxu0 %v1524
  %2537 = vmatprep.subr.bf16.mxu0 %v1529
  %2538 = vmatpush1.bf16.msra.mxu0 %v1528
  %2539 = vmatprep.mubr.bf16.mxu0 %v2465
  %2540 = vmatmul.mubr.bf16.gmra.mrb[0].mxu0 %v2354
  %v2541 = vpop.f32.mrb[0].mxu0
  %v2542 = vadd.f32 %v156, %v2541
  %v2543 = vpop.f32.mrb[0].mxu0
  %v2544 = vadd.f32 %v160, %v2543
  %v2545 = vpop.f32.mrb[0].mxu0
  %v2546 = vpop.f32.mrb[0].mxu0
  %2547 = vdwg.mxu0
  %v2548 = vxor.u32 %v2501, 2147483648
  %v2549 = vmul.f32 %v2548, 1.442695
  %v2550 = vpow.pop %v2549
  %v2551 = vadd.f32 %v2550, 1.0
  %v2552 = vrcp.pop %v2551
  %v2553 = vmul.f32 1.0, %v2552
  %v2554 = vxor.u32 %v2503, 2147483648
  %v2555 = vmul.f32 %v2554, 1.442695
  %v2556 = vpow.pop %v2555
  %v2557 = vadd.f32 %v2556, 1.0
  %v2558 = vrcp.pop %v2557
  %v2559 = vmul.f32 1.0, %v2558
  %v2560 = vtanh.pop %v2542
  %v2561 = vxor.u32 %v2544, 2147483648
  %v2562 = vmul.f32 %v2561, 1.442695
  %v2563 = vpow.pop %v2562
  %v2564 = vadd.f32 %v2563, 1.0
  %v2565 = vrcp.pop %v2564
  %v2566 = vmul.f32 1.0, %v2565
  %v2567 = vmul.f32 %v2559, %v2351
  %v2568 = vmul.f32 %v2553, %v2560
  %v2569 = vadd.f32 %v2567, %v2568
  %v2570 = vtanh.pop %v2569
  %v2571 = vmul.f32 %v2566, %v2570
  %v2572 = vpack.c.bf16 %v2464, %v2464
  %2573 = vmatprep.subr.bf16.mxu0 %v990
  %2574 = vmatpush1.bf16.msra.mxu0 %v989
  %2575 = vmatprep.subr.bf16.mxu0 %v994
  %2576 = vmatpush1.bf16.msra.mxu0 %v993
  %2577 = vmatprep.subr.bf16.mxu0 %v998
  %2578 = vmatpush1.bf16.msra.mxu0 %v997
  %2579 = vmatprep.subr.bf16.mxu0 %v1002
  %2580 = vmatpush1.bf16.msra.mxu0 %v1001
  %2581 = vmatprep.subr.bf16.mxu0 %v1006
  %2582 = vmatpush1.bf16.msra.mxu0 %v1005
  %2583 = vmatprep.subr.bf16.mxu0 %v1010
  %2584 = vmatpush1.bf16.msra.mxu0 %v1009
  %2585 = vmatprep.subr.bf16.mxu0 %v1014
  %2586 = vmatpush1.bf16.msra.mxu0 %v1013
  %2587 = vmatprep.subr.bf16.mxu0 %v1018
  %2588 = vmatpush1.bf16.msra.mxu0 %v1017
  %2589 = vmatprep.subr.bf16.mxu0 0
  %2590 = vmatpush1.bf16.msra.mxu0 0
  %2591 = vmatprep.subr.bf16.mxu0 0
  %2592 = vmatpush1.bf16.msra.mxu0 0
  %2593 = vmatprep.subr.bf16.mxu0 0
  %2594 = vmatpush1.bf16.msra.mxu0 0
  %2595 = vmatprep.subr.bf16.mxu0 0
  %2596 = vmatpush1.bf16.msra.mxu0 0
  %2597 = vmatprep.subr.bf16.mxu0 0
  %2598 = vmatpush1.bf16.msra.mxu0 0
  %2599 = vmatprep.subr.bf16.mxu0 0
  %2600 = vmatpush1.bf16.msra.mxu0 0
  %2601 = vmatprep.subr.bf16.mxu0 0
  %2602 = vmatpush1.bf16.msra.mxu0 0
  %2603 = vmatprep.subr.bf16.mxu0 0
  %2604 = vmatpush1.bf16.msra.mxu0 0
  %2605 = vmatprep.mubr.bf16.mxu0 0
  %2606 = vmatmul.mubr.bf16.gmra.mrb[0].mxu0 %v2572
  %v2607 = vpop.f32.mrb[0].mxu0
  %v2608 = vadd.f32 0.0, %v2607
  %v2609 = vpop.f32.mrb[0].mxu0
  %v2610 = vadd.f32 0.0, %v2609
  %v2611 = vpop.f32.mrb[0].mxu0
  %v2612 = vpop.f32.mrb[0].mxu0
  %2613 = vdwg.mxu0
  %2614 = vmatprep.subr.bf16.mxu0 %v992
  %2615 = vmatpush1.bf16.msra.mxu0 %v991
  %2616 = vmatprep.subr.bf16.mxu0 %v996
  %2617 = vmatpush1.bf16.msra.mxu0 %v995
  %2618 = vmatprep.subr.bf16.mxu0 %v1000
  %2619 = vmatpush1.bf16.msra.mxu0 %v999
  %2620 = vmatprep.subr.bf16.mxu0 %v1004
  %2621 = vmatpush1.bf16.msra.mxu0 %v1003
  %2622 = vmatprep.subr.bf16.mxu0 %v1008
  %2623 = vmatpush1.bf16.msra.mxu0 %v1007
  %2624 = vmatprep.subr.bf16.mxu0 %v1012
  %2625 = vmatpush1.bf16.msra.mxu0 %v1011
  %2626 = vmatprep.subr.bf16.mxu0 %v1016
  %2627 = vmatpush1.bf16.msra.mxu0 %v1015
  %2628 = vmatprep.subr.bf16.mxu0 %v1020
  %2629 = vmatpush1.bf16.msra.mxu0 %v1019
  %2630 = vmatprep.subr.bf16.mxu0 0
  %2631 = vmatpush1.bf16.msra.mxu0 0
  %2632 = vmatprep.subr.bf16.mxu0 0
  %2633 = vmatpush1.bf16.msra.mxu0 0
  %2634 = vmatprep.subr.bf16.mxu0 0
  %2635 = vmatpush1.bf16.msra.mxu0 0
  %2636 = vmatprep.subr.bf16.mxu0 0
  %2637 = vmatpush1.bf16.msra.mxu0 0
  %2638 = vmatprep.subr.bf16.mxu0 0
  %2639 = vmatpush1.bf16.msra.mxu0 0
  %2640 = vmatprep.subr.bf16.mxu0 0
  %2641 = vmatpush1.bf16.msra.mxu0 0
  %2642 = vmatprep.subr.bf16.mxu0 0
  %2643 = vmatpush1.bf16.msra.mxu0 0
  %2644 = vmatprep.subr.bf16.mxu0 0
  %2645 = vmatpush1.bf16.msra.mxu0 0
  %2646 = vmatprep.mubr.bf16.mxu0 0
  %2647 = vmatmul.mubr.bf16.gmra.mrb[0].mxu0 %v2572
  %v2648 = vpop.f32.mrb[0].mxu0
  %v2649 = vadd.f32 0.0, %v2648
  %v2650 = vpop.f32.mrb[0].mxu0
  %v2651 = vadd.f32 0.0, %v2650
  %v2652 = vpop.f32.mrb[0].mxu0
  %v2653 = vpop.f32.mrb[0].mxu0
  %2654 = vdwg.mxu0
  %v2655 = vadd.f32 %v761, %v2608
  %v2656 = vadd.f32 %v763, %v2610
  %v2657 = vadd.f32 %v802, %v2649
  %v2658 = vadd.f32 %v804, %v2651
  %v2659 = vxor.u32 %v2655, 2147483648
  %v2660 = vmul.f32 %v2659, 1.442695
  %v2661 = vpow.pop %v2660
  %v2662 = vadd.f32 %v2661, 1.0
  %v2663 = vrcp.pop %v2662
  %v2664 = vmul.f32 1.0, %v2663
  %v2665 = vxor.u32 %v2656, 2147483648
  %v2666 = vmul.f32 %v2665, 1.442695
  %v2667 = vpow.pop %v2666
  %v2668 = vadd.f32 %v2667, 1.0
  %v2669 = vrcp.pop %v2668
  %v2670 = vmul.f32 1.0, %v2669
  %v2671 = vtanh.pop %v2657
  %v2672 = vxor.u32 %v2658, 2147483648
  %v2673 = vmul.f32 %v2672, 1.442695
  %v2674 = vpow.pop %v2673
  %v2675 = vadd.f32 %v2674, 1.0
  %v2676 = vrcp.pop %v2675
  %v2677 = vmul.f32 1.0, %v2676
  %v2678 = vmul.f32 %v2670, %v2462
  %v2679 = vmul.f32 %v2664, %v2671
  %v2680 = vadd.f32 %v2678, %v2679
  %v2681 = vtanh.pop %v2680
  %v2682 = vmul.f32 %v2677, %v2681
  %v2683 = vpack.c.bf16 %v2571, %v2571
  %2684 = vmatprep.subr.bf16.mxu0 %v1467
  %2685 = vmatpush1.bf16.msra.mxu0 %v1466
  %2686 = vmatprep.subr.bf16.mxu0 %v1471
  %2687 = vmatpush1.bf16.msra.mxu0 %v1470
  %2688 = vmatprep.subr.bf16.mxu0 %v1475
  %2689 = vmatpush1.bf16.msra.mxu0 %v1474
  %2690 = vmatprep.subr.bf16.mxu0 %v1479
  %2691 = vmatpush1.bf16.msra.mxu0 %v1478
  %2692 = vmatprep.subr.bf16.mxu0 %v1483
  %2693 = vmatpush1.bf16.msra.mxu0 %v1482
  %2694 = vmatprep.subr.bf16.mxu0 %v1487
  %2695 = vmatpush1.bf16.msra.mxu0 %v1486
  %2696 = vmatprep.subr.bf16.mxu0 %v1491
  %2697 = vmatpush1.bf16.msra.mxu0 %v1490
  %2698 = vmatprep.subr.bf16.mxu0 %v1495
  %2699 = vmatpush1.bf16.msra.mxu0 %v1494
  %2700 = vmatprep.subr.bf16.mxu0 %v1499
  %2701 = vmatpush1.bf16.msra.mxu0 %v1498
  %2702 = vmatprep.subr.bf16.mxu0 %v1503
  %2703 = vmatpush1.bf16.msra.mxu0 %v1502
  %2704 = vmatprep.subr.bf16.mxu0 %v1507
  %2705 = vmatpush1.bf16.msra.mxu0 %v1506
  %2706 = vmatprep.subr.bf16.mxu0 %v1511
  %2707 = vmatpush1.bf16.msra.mxu0 %v1510
  %2708 = vmatprep.subr.bf16.mxu0 %v1515
  %2709 = vmatpush1.bf16.msra.mxu0 %v1514
  %2710 = vmatprep.subr.bf16.mxu0 %v1519
  %2711 = vmatpush1.bf16.msra.mxu0 %v1518
  %2712 = vmatprep.subr.bf16.mxu0 %v1523
  %2713 = vmatpush1.bf16.msra.mxu0 %v1522
  %2714 = vmatprep.subr.bf16.mxu0 %v1527
  %2715 = vmatpush1.bf16.msra.mxu0 %v1526
  %2716 = vmatprep.mubr.bf16.mxu0 %v2683
  %2717 = vmatmul.mubr.bf16.gmra.mrb[0].mxu0 %v2572
  %v2718 = vpop.f32.mrb[0].mxu0
  %v2719 = vadd.f32 %v148, %v2718
  %v2720 = vpop.f32.mrb[0].mxu0
  %v2721 = vadd.f32 %v152, %v2720
  %v2722 = vpop.f32.mrb[0].mxu0
  %v2723 = vpop.f32.mrb[0].mxu0
  %2724 = vdwg.mxu0
  %2725 = vmatprep.subr.bf16.mxu0 %v1469
  %2726 = vmatpush1.bf16.msra.mxu0 %v1468
  %2727 = vmatprep.subr.bf16.mxu0 %v1473
  %2728 = vmatpush1.bf16.msra.mxu0 %v1472
  %2729 = vmatprep.subr.bf16.mxu0 %v1477
  %2730 = vmatpush1.bf16.msra.mxu0 %v1476
  %2731 = vmatprep.subr.bf16.mxu0 %v1481
  %2732 = vmatpush1.bf16.msra.mxu0 %v1480
  %2733 = vmatprep.subr.bf16.mxu0 %v1485
  %2734 = vmatpush1.bf16.msra.mxu0 %v1484
  %2735 = vmatprep.subr.bf16.mxu0 %v1489
  %2736 = vmatpush1.bf16.msra.mxu0 %v1488
  %2737 = vmatprep.subr.bf16.mxu0 %v1493
  %2738 = vmatpush1.bf16.msra.mxu0 %v1492
  %2739 = vmatprep.subr.bf16.mxu0 %v1497
  %2740 = vmatpush1.bf16.msra.mxu0 %v1496
  %2741 = vmatprep.subr.bf16.mxu0 %v1501
  %2742 = vmatpush1.bf16.msra.mxu0 %v1500
  %2743 = vmatprep.subr.bf16.mxu0 %v1505
  %2744 = vmatpush1.bf16.msra.mxu0 %v1504
  %2745 = vmatprep.subr.bf16.mxu0 %v1509
  %2746 = vmatpush1.bf16.msra.mxu0 %v1508
  %2747 = vmatprep.subr.bf16.mxu0 %v1513
  %2748 = vmatpush1.bf16.msra.mxu0 %v1512
  %2749 = vmatprep.subr.bf16.mxu0 %v1517
  %2750 = vmatpush1.bf16.msra.mxu0 %v1516
  %2751 = vmatprep.subr.bf16.mxu0 %v1521
  %2752 = vmatpush1.bf16.msra.mxu0 %v1520
  %2753 = vmatprep.subr.bf16.mxu0 %v1525
  %2754 = vmatpush1.bf16.msra.mxu0 %v1524
  %2755 = vmatprep.subr.bf16.mxu0 %v1529
  %2756 = vmatpush1.bf16.msra.mxu0 %v1528
  %2757 = vmatprep.mubr.bf16.mxu0 %v2683
  %2758 = vmatmul.mubr.bf16.gmra.mrb[0].mxu0 %v2572
  %v2759 = vpop.f32.mrb[0].mxu0
  %v2760 = vadd.f32 %v156, %v2759
  %v2761 = vpop.f32.mrb[0].mxu0
  %v2762 = vadd.f32 %v160, %v2761
  %v2763 = vpop.f32.mrb[0].mxu0
  %v2764 = vpop.f32.mrb[0].mxu0
  %2765 = vdwg.mxu0
  %v2766 = vxor.u32 %v2719, 2147483648
  %v2767 = vmul.f32 %v2766, 1.442695
  %v2768 = vpow.pop %v2767
  %v2769 = vadd.f32 %v2768, 1.0
  %v2770 = vrcp.pop %v2769
  %v2771 = vmul.f32 1.0, %v2770
  %v2772 = vxor.u32 %v2721, 2147483648
  %v2773 = vmul.f32 %v2772, 1.442695
  %v2774 = vpow.pop %v2773
  %v2775 = vadd.f32 %v2774, 1.0
  %v2776 = vrcp.pop %v2775
  %v2777 = vmul.f32 1.0, %v2776
  %v2778 = vtanh.pop %v2760
  %v2779 = vxor.u32 %v2762, 2147483648
  %v2780 = vmul.f32 %v2779, 1.442695
  %v2781 = vpow.pop %v2780
  %v2782 = vadd.f32 %v2781, 1.0
  %v2783 = vrcp.pop %v2782
  %v2784 = vmul.f32 1.0, %v2783
  %v2785 = vmul.f32 %v2777, %v2569
  %v2786 = vmul.f32 %v2771, %v2778
  %v2787 = vadd.f32 %v2785, %v2786
  %v2788 = vtanh.pop %v2787
  %v2789 = vmul.f32 %v2784, %v2788
  %v2790 = vpack.c.bf16 %v2682, %v2682
  %2791 = vmatprep.subr.bf16.mxu0 %v990
  %2792 = vmatpush1.bf16.msra.mxu0 %v989
  %2793 = vmatprep.subr.bf16.mxu0 %v994
  %2794 = vmatpush1.bf16.msra.mxu0 %v993
  %2795 = vmatprep.subr.bf16.mxu0 %v998
  %2796 = vmatpush1.bf16.msra.mxu0 %v997
  %2797 = vmatprep.subr.bf16.mxu0 %v1002
  %2798 = vmatpush1.bf16.msra.mxu0 %v1001
  %2799 = vmatprep.subr.bf16.mxu0 %v1006
  %2800 = vmatpush1.bf16.msra.mxu0 %v1005
  %2801 = vmatprep.subr.bf16.mxu0 %v1010
  %2802 = vmatpush1.bf16.msra.mxu0 %v1009
  %2803 = vmatprep.subr.bf16.mxu0 %v1014
  %2804 = vmatpush1.bf16.msra.mxu0 %v1013
  %2805 = vmatprep.subr.bf16.mxu0 %v1018
  %2806 = vmatpush1.bf16.msra.mxu0 %v1017
  %2807 = vmatprep.subr.bf16.mxu0 0
  %2808 = vmatpush1.bf16.msra.mxu0 0
  %2809 = vmatprep.subr.bf16.mxu0 0
  %2810 = vmatpush1.bf16.msra.mxu0 0
  %2811 = vmatprep.subr.bf16.mxu0 0
  %2812 = vmatpush1.bf16.msra.mxu0 0
  %2813 = vmatprep.subr.bf16.mxu0 0
  %2814 = vmatpush1.bf16.msra.mxu0 0
  %2815 = vmatprep.subr.bf16.mxu0 0
  %2816 = vmatpush1.bf16.msra.mxu0 0
  %2817 = vmatprep.subr.bf16.mxu0 0
  %2818 = vmatpush1.bf16.msra.mxu0 0
  %2819 = vmatprep.subr.bf16.mxu0 0
  %2820 = vmatpush1.bf16.msra.mxu0 0
  %2821 = vmatprep.subr.bf16.mxu0 0
  %2822 = vmatpush1.bf16.msra.mxu0 0
  %2823 = vmatprep.mubr.bf16.mxu0 0
  %2824 = vmatmul.mubr.bf16.gmra.mrb[0].mxu0 %v2790
  %v2825 = vpop.f32.mrb[0].mxu0
  %v2826 = vadd.f32 0.0, %v2825
  %v2827 = vpop.f32.mrb[0].mxu0
  %v2828 = vadd.f32 0.0, %v2827
  %v2829 = vpop.f32.mrb[0].mxu0
  %v2830 = vpop.f32.mrb[0].mxu0
  %2831 = vdwg.mxu0
  %2832 = vmatprep.subr.bf16.mxu0 %v992
  %2833 = vmatpush1.bf16.msra.mxu0 %v991
  %2834 = vmatprep.subr.bf16.mxu0 %v996
  %2835 = vmatpush1.bf16.msra.mxu0 %v995
  %2836 = vmatprep.subr.bf16.mxu0 %v1000
  %2837 = vmatpush1.bf16.msra.mxu0 %v999
  %2838 = vmatprep.subr.bf16.mxu0 %v1004
  %2839 = vmatpush1.bf16.msra.mxu0 %v1003
  %2840 = vmatprep.subr.bf16.mxu0 %v1008
  %2841 = vmatpush1.bf16.msra.mxu0 %v1007
  %2842 = vmatprep.subr.bf16.mxu0 %v1012
  %2843 = vmatpush1.bf16.msra.mxu0 %v1011
  %2844 = vmatprep.subr.bf16.mxu0 %v1016
  %2845 = vmatpush1.bf16.msra.mxu0 %v1015
  %2846 = vmatprep.subr.bf16.mxu0 %v1020
  %2847 = vmatpush1.bf16.msra.mxu0 %v1019
  %2848 = vmatprep.subr.bf16.mxu0 0
  %2849 = vmatpush1.bf16.msra.mxu0 0
  %2850 = vmatprep.subr.bf16.mxu0 0
  %2851 = vmatpush1.bf16.msra.mxu0 0
  %2852 = vmatprep.subr.bf16.mxu0 0
  %2853 = vmatpush1.bf16.msra.mxu0 0
  %2854 = vmatprep.subr.bf16.mxu0 0
  %2855 = vmatpush1.bf16.msra.mxu0 0
  %2856 = vmatprep.subr.bf16.mxu0 0
  %2857 = vmatpush1.bf16.msra.mxu0 0
  %2858 = vmatprep.subr.bf16.mxu0 0
  %2859 = vmatpush1.bf16.msra.mxu0 0
  %2860 = vmatprep.subr.bf16.mxu0 0
  %2861 = vmatpush1.bf16.msra.mxu0 0
  %2862 = vmatprep.subr.bf16.mxu0 0
  %2863 = vmatpush1.bf16.msra.mxu0 0
  %2864 = vmatprep.mubr.bf16.mxu0 0
  %2865 = vmatmul.mubr.bf16.gmra.mrb[0].mxu0 %v2790
  %v2866 = vpop.f32.mrb[0].mxu0
  %v2867 = vadd.f32 0.0, %v2866
  %v2868 = vpop.f32.mrb[0].mxu0
  %v2869 = vadd.f32 0.0, %v2868
  %v2870 = vpop.f32.mrb[0].mxu0
  %v2871 = vpop.f32.mrb[0].mxu0
  %2872 = vdwg.mxu0
  %v2873 = vadd.f32 %v846, %v2826
  %v2874 = vadd.f32 %v848, %v2828
  %v2875 = vadd.f32 %v887, %v2867
  %v2876 = vadd.f32 %v889, %v2869
  %v2877 = vxor.u32 %v2873, 2147483648
  %v2878 = vmul.f32 %v2877, 1.442695
  %v2879 = vpow.pop %v2878
  %v2880 = vadd.f32 %v2879, 1.0
  %v2881 = vrcp.pop %v2880
  %v2882 = vmul.f32 1.0, %v2881
  %v2883 = vxor.u32 %v2874, 2147483648
  %v2884 = vmul.f32 %v2883, 1.442695
  %v2885 = vpow.pop %v2884
  %v2886 = vadd.f32 %v2885, 1.0
  %v2887 = vrcp.pop %v2886
  %v2888 = vmul.f32 1.0, %v2887
  %v2889 = vtanh.pop %v2875
  %v2890 = vxor.u32 %v2876, 2147483648
  %v2891 = vmul.f32 %v2890, 1.442695
  %v2892 = vpow.pop %v2891
  %v2893 = vadd.f32 %v2892, 1.0
  %v2894 = vrcp.pop %v2893
  %v2895 = vmul.f32 1.0, %v2894
  %v2896 = vmul.f32 %v2888, %v2680
  %v2897 = vmul.f32 %v2882, %v2889
  %v2898 = vadd.f32 %v2896, %v2897
  %v2899 = vtanh.pop %v2898
  %v2900 = vmul.f32 %v2895, %v2899
  %v2901 = vpack.c.bf16 %v2789, %v2789
  %2902 = vmatprep.subr.bf16.mxu0 %v1467
  %2903 = vmatpush1.bf16.msra.mxu0 %v1466
  %2904 = vmatprep.subr.bf16.mxu0 %v1471
  %2905 = vmatpush1.bf16.msra.mxu0 %v1470
  %2906 = vmatprep.subr.bf16.mxu0 %v1475
  %2907 = vmatpush1.bf16.msra.mxu0 %v1474
  %2908 = vmatprep.subr.bf16.mxu0 %v1479
  %2909 = vmatpush1.bf16.msra.mxu0 %v1478
  %2910 = vmatprep.subr.bf16.mxu0 %v1483
  %2911 = vmatpush1.bf16.msra.mxu0 %v1482
  %2912 = vmatprep.subr.bf16.mxu0 %v1487
  %2913 = vmatpush1.bf16.msra.mxu0 %v1486
  %2914 = vmatprep.subr.bf16.mxu0 %v1491
  %2915 = vmatpush1.bf16.msra.mxu0 %v1490
  %2916 = vmatprep.subr.bf16.mxu0 %v1495
  %2917 = vmatpush1.bf16.msra.mxu0 %v1494
  %2918 = vmatprep.subr.bf16.mxu0 %v1499
  %2919 = vmatpush1.bf16.msra.mxu0 %v1498
  %2920 = vmatprep.subr.bf16.mxu0 %v1503
  %2921 = vmatpush1.bf16.msra.mxu0 %v1502
  %2922 = vmatprep.subr.bf16.mxu0 %v1507
  %2923 = vmatpush1.bf16.msra.mxu0 %v1506
  %2924 = vmatprep.subr.bf16.mxu0 %v1511
  %2925 = vmatpush1.bf16.msra.mxu0 %v1510
  %2926 = vmatprep.subr.bf16.mxu0 %v1515
  %2927 = vmatpush1.bf16.msra.mxu0 %v1514
  %2928 = vmatprep.subr.bf16.mxu0 %v1519
  %2929 = vmatpush1.bf16.msra.mxu0 %v1518
  %2930 = vmatprep.subr.bf16.mxu0 %v1523
  %2931 = vmatpush1.bf16.msra.mxu0 %v1522
  %2932 = vmatprep.subr.bf16.mxu0 %v1527
  %2933 = vmatpush1.bf16.msra.mxu0 %v1526
  %2934 = vmatprep.mubr.bf16.mxu0 %v2901
  %2935 = vmatmul.mubr.bf16.gmra.mrb[0].mxu0 %v2790
  %v2936 = vpop.f32.mrb[0].mxu0
  %v2937 = vadd.f32 %v148, %v2936
  %v2938 = vpop.f32.mrb[0].mxu0
  %v2939 = vadd.f32 %v152, %v2938
  %v2940 = vpop.f32.mrb[0].mxu0
  %v2941 = vpop.f32.mrb[0].mxu0
  %2942 = vdwg.mxu0
  %2943 = vmatprep.subr.bf16.mxu0 %v1469
  %2944 = vmatpush1.bf16.msra.mxu0 %v1468
  %2945 = vmatprep.subr.bf16.mxu0 %v1473
  %2946 = vmatpush1.bf16.msra.mxu0 %v1472
  %2947 = vmatprep.subr.bf16.mxu0 %v1477
  %2948 = vmatpush1.bf16.msra.mxu0 %v1476
  %2949 = vmatprep.subr.bf16.mxu0 %v1481
  %2950 = vmatpush1.bf16.msra.mxu0 %v1480
  %2951 = vmatprep.subr.bf16.mxu0 %v1485
  %2952 = vmatpush1.bf16.msra.mxu0 %v1484
  %2953 = vmatprep.subr.bf16.mxu0 %v1489
  %2954 = vmatpush1.bf16.msra.mxu0 %v1488
  %2955 = vmatprep.subr.bf16.mxu0 %v1493
  %2956 = vmatpush1.bf16.msra.mxu0 %v1492
  %2957 = vmatprep.subr.bf16.mxu0 %v1497
  %2958 = vmatpush1.bf16.msra.mxu0 %v1496
  %2959 = vmatprep.subr.bf16.mxu0 %v1501
  %2960 = vmatpush1.bf16.msra.mxu0 %v1500
  %2961 = vmatprep.subr.bf16.mxu0 %v1505
  %2962 = vmatpush1.bf16.msra.mxu0 %v1504
  %2963 = vmatprep.subr.bf16.mxu0 %v1509
  %2964 = vmatpush1.bf16.msra.mxu0 %v1508
  %2965 = vmatprep.subr.bf16.mxu0 %v1513
  %2966 = vmatpush1.bf16.msra.mxu0 %v1512
  %2967 = vmatprep.subr.bf16.mxu0 %v1517
  %2968 = vmatpush1.bf16.msra.mxu0 %v1516
  %2969 = vmatprep.subr.bf16.mxu0 %v1521
  %2970 = vmatpush1.bf16.msra.mxu0 %v1520
  %2971 = vmatprep.subr.bf16.mxu0 %v1525
  %2972 = vmatpush1.bf16.msra.mxu0 %v1524
  %2973 = vmatprep.subr.bf16.mxu0 %v1529
  %2974 = vmatpush1.bf16.msra.mxu0 %v1528
  %2975 = vmatprep.mubr.bf16.mxu0 %v2901
  %2976 = vmatmul.mubr.bf16.gmra.mrb[0].mxu0 %v2790
  %v2977 = vpop.f32.mrb[0].mxu0
  %v2978 = vadd.f32 %v156, %v2977
  %v2979 = vpop.f32.mrb[0].mxu0
  %v2980 = vadd.f32 %v160, %v2979
  %v2981 = vpop.f32.mrb[0].mxu0
  %v2982 = vpop.f32.mrb[0].mxu0
  %2983 = vdwg.mxu0
  %v2984 = vxor.u32 %v2937, 2147483648
  %v2985 = vmul.f32 %v2984, 1.442695
  %v2986 = vpow.pop %v2985
  %v2987 = vadd.f32 %v2986, 1.0
  %v2988 = vrcp.pop %v2987
  %v2989 = vmul.f32 1.0, %v2988
  %v2990 = vxor.u32 %v2939, 2147483648
  %v2991 = vmul.f32 %v2990, 1.442695
  %v2992 = vpow.pop %v2991
  %v2993 = vadd.f32 %v2992, 1.0
  %v2994 = vrcp.pop %v2993
  %v2995 = vmul.f32 1.0, %v2994
  %v2996 = vtanh.pop %v2978
  %v2997 = vxor.u32 %v2980, 2147483648
  %v2998 = vmul.f32 %v2997, 1.442695
  %v2999 = vpow.pop %v2998
  %v3000 = vadd.f32 %v2999, 1.0
  %v3001 = vrcp.pop %v3000
  %v3002 = vmul.f32 1.0, %v3001
  %v3003 = vmul.f32 %v2995, %v2787
  %v3004 = vmul.f32 %v2989, %v2996
  %v3005 = vadd.f32 %v3003, %v3004
  %v3006 = vtanh.pop %v3005
  %v3007 = vmul.f32 %v3002, %v3006
  %v3008 = vpack.c.bf16 %v2900, %v2900
  %v3009 = vpack.c.bf16 %v3007, %v3007
  %3010 = vmatprep.subr.bf16.mxu0 %v1467
  %3011 = vmatpush1.bf16.msra.mxu0 %v1466
  %3012 = vmatprep.subr.bf16.mxu0 %v1471
  %3013 = vmatpush1.bf16.msra.mxu0 %v1470
  %3014 = vmatprep.subr.bf16.mxu0 %v1475
  %3015 = vmatpush1.bf16.msra.mxu0 %v1474
  %3016 = vmatprep.subr.bf16.mxu0 %v1479
  %3017 = vmatpush1.bf16.msra.mxu0 %v1478
  %3018 = vmatprep.subr.bf16.mxu0 %v1483
  %3019 = vmatpush1.bf16.msra.mxu0 %v1482
  %3020 = vmatprep.subr.bf16.mxu0 %v1487
  %3021 = vmatpush1.bf16.msra.mxu0 %v1486
  %3022 = vmatprep.subr.bf16.mxu0 %v1491
  %3023 = vmatpush1.bf16.msra.mxu0 %v1490
  %3024 = vmatprep.subr.bf16.mxu0 %v1495
  %3025 = vmatpush1.bf16.msra.mxu0 %v1494
  %3026 = vmatprep.subr.bf16.mxu0 %v1499
  %3027 = vmatpush1.bf16.msra.mxu0 %v1498
  %3028 = vmatprep.subr.bf16.mxu0 %v1503
  %3029 = vmatpush1.bf16.msra.mxu0 %v1502
  %3030 = vmatprep.subr.bf16.mxu0 %v1507
  %3031 = vmatpush1.bf16.msra.mxu0 %v1506
  %3032 = vmatprep.subr.bf16.mxu0 %v1511
  %3033 = vmatpush1.bf16.msra.mxu0 %v1510
  %3034 = vmatprep.subr.bf16.mxu0 %v1515
  %3035 = vmatpush1.bf16.msra.mxu0 %v1514
  %3036 = vmatprep.subr.bf16.mxu0 %v1519
  %3037 = vmatpush1.bf16.msra.mxu0 %v1518
  %3038 = vmatprep.subr.bf16.mxu0 %v1523
  %3039 = vmatpush1.bf16.msra.mxu0 %v1522
  %3040 = vmatprep.subr.bf16.mxu0 %v1527
  %3041 = vmatpush1.bf16.msra.mxu0 %v1526
  %3042 = vmatprep.mubr.bf16.mxu0 %v3009
  %3043 = vmatmul.mubr.bf16.gmra.mrb[0].mxu0 %v3008
  %v3044 = vpop.f32.mrb[0].mxu0
  %v3045 = vadd.f32 %v148, %v3044
  %v3046 = vpop.f32.mrb[0].mxu0
  %v3047 = vadd.f32 %v152, %v3046
  %v3048 = vpop.f32.mrb[0].mxu0
  %v3049 = vpop.f32.mrb[0].mxu0
  %3050 = vdwg.mxu0
  %3051 = vmatprep.subr.bf16.mxu0 %v1469
  %3052 = vmatpush1.bf16.msra.mxu0 %v1468
  %3053 = vmatprep.subr.bf16.mxu0 %v1473
  %3054 = vmatpush1.bf16.msra.mxu0 %v1472
  %3055 = vmatprep.subr.bf16.mxu0 %v1477
  %3056 = vmatpush1.bf16.msra.mxu0 %v1476
  %3057 = vmatprep.subr.bf16.mxu0 %v1481
  %3058 = vmatpush1.bf16.msra.mxu0 %v1480
  %3059 = vmatprep.subr.bf16.mxu0 %v1485
  %3060 = vmatpush1.bf16.msra.mxu0 %v1484
  %3061 = vmatprep.subr.bf16.mxu0 %v1489
  %3062 = vmatpush1.bf16.msra.mxu0 %v1488
  %3063 = vmatprep.subr.bf16.mxu0 %v1493
  %3064 = vmatpush1.bf16.msra.mxu0 %v1492
  %3065 = vmatprep.subr.bf16.mxu0 %v1497
  %3066 = vmatpush1.bf16.msra.mxu0 %v1496
  %3067 = vmatprep.subr.bf16.mxu0 %v1501
  %3068 = vmatpush1.bf16.msra.mxu0 %v1500
  %3069 = vmatprep.subr.bf16.mxu0 %v1505
  %3070 = vmatpush1.bf16.msra.mxu0 %v1504
  %3071 = vmatprep.subr.bf16.mxu0 %v1509
  %3072 = vmatpush1.bf16.msra.mxu0 %v1508
  %3073 = vmatprep.subr.bf16.mxu0 %v1513
  %3074 = vmatpush1.bf16.msra.mxu0 %v1512
  %3075 = vmatprep.subr.bf16.mxu0 %v1517
  %3076 = vmatpush1.bf16.msra.mxu0 %v1516
  %3077 = vmatprep.subr.bf16.mxu0 %v1521
  %3078 = vmatpush1.bf16.msra.mxu0 %v1520
  %3079 = vmatprep.subr.bf16.mxu0 %v1525
  %3080 = vmatpush1.bf16.msra.mxu0 %v1524
  %3081 = vmatprep.subr.bf16.mxu0 %v1529
  %3082 = vmatpush1.bf16.msra.mxu0 %v1528
  %3083 = vmatprep.mubr.bf16.mxu0 %v3009
  %3084 = vmatmul.mubr.bf16.gmra.mrb[0].mxu0 %v3008
  %v3085 = vpop.f32.mrb[0].mxu0
  %v3086 = vadd.f32 %v156, %v3085
  %v3087 = vpop.f32.mrb[0].mxu0
  %v3088 = vadd.f32 %v160, %v3087
  %v3089 = vpop.f32.mrb[0].mxu0
  %v3090 = vpop.f32.mrb[0].mxu0
  %3091 = vdwg.mxu0
  %v3092 = vxor.u32 %v3045, 2147483648
  %v3093 = vmul.f32 %v3092, 1.442695
  %v3094 = vpow.pop %v3093
  %v3095 = vadd.f32 %v3094, 1.0
  %v3096 = vrcp.pop %v3095
  %v3097 = vmul.f32 1.0, %v3096
  %v3098 = vxor.u32 %v3047, 2147483648
  %v3099 = vmul.f32 %v3098, 1.442695
  %v3100 = vpow.pop %v3099
  %v3101 = vadd.f32 %v3100, 1.0
  %v3102 = vrcp.pop %v3101
  %v3103 = vmul.f32 1.0, %v3102
  %v3104 = vtanh.pop %v3086
  %v3105 = vxor.u32 %v3088, 2147483648
  %v3106 = vmul.f32 %v3105, 1.442695
  %v3107 = vpow.pop %v3106
  %v3108 = vadd.f32 %v3107, 1.0
  %v3109 = vrcp.pop %v3108
  %v3110 = vmul.f32 1.0, %v3109
  %v3111 = vmul.f32 %v3103, %v3005
  %v3112 = vmul.f32 %v3097, %v3104
  %v3113 = vadd.f32 %v3111, %v3112
  %v3114 = vtanh.pop %v3113
  %v3115 = vmul.f32 %v3110, %v3114
  %3116 = vst [vmem:[%s6] sm:$0xff] %v3115
  // Predicated region
  $region26: #{a_call__.1} parent=0 // pred_check
    _
  $region27: #{a_call__.1} parent=0 // pred_check_branch
    %3118 = sbr.rel (0) target = $region29
  $region28: #{a_call__.1} parent=0 // pred_region
    _
  $region29: #{a_call__.1} parent=0 // pred_fallthru
    _
  // Predicated region
  $region30: #{a_call__.1} parent=0 // pred_check
    _
  $region31: #{a_call__.1} parent=0 // pred_check_branch
    %3120 = sbr.rel (0) target = $region33
  $region32: #{a_call__.1} parent=0 // pred_region
    _
  $region33: #{a_call__.1} parent=0 // pred_fallthru
    _

</llo_original>
